<compile_context>
chip_gen: v7x
topology: tpu7x:2x2x1
jax: 0.10.0
libtpu: 0.0.40
codegen_flags: <defaults>
</compile_context>

<pallas_src>
import functools

import numpy as np
import jax
import jax.numpy as jnp
from jax.experimental import pallas as pl
from jax.experimental.pallas import tpu as pltpu


# LeNet3D().features layer kinds, index-aligned with the PyTorch module.
_LAYER_KINDS = ("conv1", "relu", "maxpool", "conv2", "relu", "maxpool")


# ----------------------------------------------------------------------------
# Host-side (static-shape) constants — computed once in the wrapper, passed in
# ----------------------------------------------------------------------------
def _conv_masks_np(ne, d, h, w):
    """(27, M) 0/1 masks, leading index = kd*9 + kh*3 + kw; zero-padding semantics."""
    m = ne * d * h * w
    lane = np.arange(m)
    wi = lane % w
    hi = (lane // w) % h
    di = (lane // (w * h)) % d
    masks = np.zeros((27, m), np.float32)
    for kd in range(3):
        for kh in range(3):
            for kw in range(3):
                dd, dh, dw = kd - 1, kh - 1, kw - 1
                valid = ((di + dd >= 0) & (di + dd < d) &
                         (hi + dh >= 0) & (hi + dh < h) &
                         (wi + dw >= 0) & (wi + dw < w))
                masks[kd * 9 + kh * 3 + kw] = valid.astype(np.float32)
    return masks


def _pool_gather_np(ne, d, h, w):
    """(M, Mo) one-hot decimation matrix for MaxPool3d(2) even anchors."""
    do, ho, wo = d // 2, h // 2, w // 2
    m = ne * d * h * w
    mo = ne * do * ho * wo
    g = np.zeros((m, mo), np.float32)
    o = np.arange(mo)
    xo = o % wo
    yo = (o // wo) % ho
    zo = (o // (wo * ho)) % do
    n = o // (wo * ho * do)
    anchor = ((n * d + 2 * zo) * h + 2 * yo) * w + 2 * xo
    g[anchor, o] = 1.0
    return g


def _half_diff_sel_np(m):
    """(M, M/2) +/-1 selection: x @ sel = first_half(x) - second_half(x)."""
    half = m // 2
    s = np.zeros((m, half), np.float32)
    s[np.arange(half), np.arange(half)] = 1.0
    s[np.arange(half) + half, np.arange(half)] = -1.0
    return s


# ----------------------------------------------------------------------------
# In-kernel helper
# ----------------------------------------------------------------------------
def _shift_flat(x, off):
    """out[:, m] = x[:, (m + off) mod M] (cyclic lane shift; wrap is masked by caller)."""
    m = x.shape[-1]
    if off % m == 0:
        return x
    return pltpu.roll(x, shift=(-off) % m, axis=1)


# ----------------------------------------------------------------------------
# Static plan: constants, scratch shapes, and the per-layer op list
# ----------------------------------------------------------------------------
def _make_plan(layer_indexs, ne_b, c0, d0, h0, w0, params):
    w1, b1, w2, b2 = params
    consts, plan, scratch_shapes = [], [], []

    def add_const(a):
        consts.append(a)
        return len(consts) - 1

    c, d, h, w = c0, d0, h0, w0
    for idx in layer_indexs:
        kind = _LAYER_KINDS[idx]
        m = ne_b * d * h * w
        if kind in ("conv1", "conv2"):
            wt, bs = (w1, b1) if kind == "conv1" else (w2, b2)
            cout, cin = wt.shape[0], wt.shape[1]
            # lane-dense weight (cout, 27*cin): column = k*cin + ci, k = kd*9+kh*3+kw
            wf = jnp.transpose(wt, (0, 2, 3, 4, 1)).reshape(cout, 27 * cin)
            wi = add_const(wf)
            bi = add_const(bs.reshape(cout, 1))
            mi = add_const(jnp.asarray(_conv_masks_np(ne_b, d, h, w)))
            si = len(scratch_shapes)
            scratch_shapes.append(pltpu.VMEM((27 * cin, m), jnp.float32))
            plan.append(("conv", wi, bi, mi, si, cin, cout, d, h, w))
            c = cout
        elif kind == "relu":
            plan.append(("relu",))
        else:  # maxpool
            # TODO(synk): PyTorch MaxPool3d floors odd spatial dims; even dims assumed.
            gi = add_const(jnp.asarray(_pool_gather_np(ne_b, d, h, w)))
            plan.append(("pool", gi, d, h, w))
            d, h, w = d // 2, h // 2, w // 2
        # per-layer perceptual loss on this layer's output
        m_out = ne_b * d * h * w
        if m_out % 128 == 0:
            plan.append(("loss_roll", m_out, c))
        else:
            si2 = add_const(jnp.asarray(_half_diff_sel_np(m_out)))
            plan.append(("loss_sel", si2, m_out, c))
    return consts, plan, scratch_shapes


# ----------------------------------------------------------------------------
# Kernel builder: one grid step = one (y_i, y_i_) pair, fully resident in VMEM
# ----------------------------------------------------------------------------
def _build_kernel(plan, n_const, num_blocks):
    def kernel(*refs):
        x_ref = refs[0]
        const = refs[1:1 + n_const]
        out_ref = refs[1 + n_const]
        scratch = refs[2 + n_const:]

        x = x_ref[...]                                   # (C, M_block), f32
        total = jnp.zeros((1, 1), jnp.float32)

        for op in plan:
            kind = op[0]
            if kind == "conv":
                _, wi, bi, mi, si, cin, cout, d, h, w = op
                scr = scratch[si]                        # (27*cin, m) VMEM scratch
                mref = const[mi]                         # (27, m) precomputed masks
                for kd in range(3):
                    for kh in range(3):
                        for kw in range(3):
                            k = kd * 9 + kh * 3 + kw
                            off = ((kd - 1) * h + (kh - 1)) * w + (kw - 1)
                            scr[k * cin:(k + 1) * cin, :] = (
                                _shift_flat(x, off) * mref[k:k + 1, :])
                # single folded MXU matmul: (cout, 27*cin) @ (27*cin, m) + bias
                x = (jnp.dot(const[wi][...], scr[...],
                             preferred_element_type=jnp.float32)
                     + const[bi][...])
            elif kind == "relu":
                x = jnp.maximum(x, jnp.float32(0.0))
            elif kind == "pool":
                _, gi, d, h, w = op
                y3 = jnp.maximum(x, _shift_flat(x, 1))
                y3 = jnp.maximum(y3, _shift_flat(y3, w))
                y3 = jnp.maximum(y3, _shift_flat(y3, h * w))
                x = jnp.dot(y3, const[gi][...], preferred_element_type=jnp.float32)
            elif kind == "loss_roll":
                _, m_out, c = op
                # first lane-half = y path, second = y_ path; diff is antisymmetric so
                # normalizing by the full size equals the per-half mean.
                diff = x - pltpu.roll(x, shift=m_out // 2, axis=1)
                inv = jnp.float32(1.0 / (c * m_out * num_blocks))
                total = total + inv * (
                    jnp.sum(diff * diff, keepdims=True)
                    + jnp.float32(0.1) * jnp.sum(jnp.abs(diff), keepdims=True))
            else:  # "loss_sel": tiny final layer, precomputed +/-1 selection matmul
                _, si2, m_out, c = op
                diff = jnp.dot(x, const[si2][...], preferred_element_type=jnp.float32)
                inv = jnp.float32(1.0 / (c * (m_out // 2) * num_blocks))
                total = total + inv * (
                    jnp.sum(diff * diff, keepdims=True)
                    + jnp.float32(0.1) * jnp.sum(jnp.abs(diff), keepdims=True))

        out_ref[...] = jnp.broadcast_to(total, out_ref.shape)   # lane-dense (1,128) store
    return kernel


# ----------------------------------------------------------------------------
# Parameters (deterministic synthetic LeNet3D weights; no checkpoint available)
# ----------------------------------------------------------------------------
def make_lenet3d_params(c0=1):
    # TODO(synk): the reference loads `new_parameter` into LeNet3D; not provided here.
    key = jax.random.PRNGKey(42)
    k1, k2, k3, k4 = jax.random.split(key, 4)
    w1 = jax.random.normal(k1, (6, c0, 3, 3, 3), jnp.float32) * 0.10
    b1 = jax.random.normal(k2, (6,), jnp.float32) * 0.10
    w2 = jax.random.normal(k3, (16, 6, 3, 3, 3), jnp.float32) * 0.05
    b2 = jax.random.normal(k4, (16,), jnp.float32) * 0.05
    return w1, b1, w2, b2


# ----------------------------------------------------------------------------
# PerceptualLoss.forward
# ----------------------------------------------------------------------------
@functools.partial(jax.jit, static_argnames=("layer_indexs",))
def perceptual_loss(y, y_, layer_indexs=(0, 1, 2, 3, 4, 5)):
    n, c0, d0, h0, w0 = y.shape
    ne_b = 2                                   # y_i and y_i_ share one grid block
    num_blocks = n
    mb = ne_b * d0 * h0 * w0

    params = make_lenet3d_params(c0)

    # Layout plumbing (input path only): per block, lanes = [y_i flat, y_i_ flat].
    pairs = jnp.stack([y, y_], axis=1)                               # (N, 2, C, D, H, W)
    xf = jnp.transpose(pairs, (0, 2, 1, 3, 4, 5)).reshape(num_blocks, c0, mb)

    consts, plan, scratch_shapes = _make_plan(layer_indexs, ne_b, c0, d0, h0, w0, params)
    kernel = _build_kernel(plan, len(consts), num_blocks)

    in_specs = [pl.BlockSpec((None, c0, mb), lambda b: (b, 0, 0))]
    in_specs += [pl.BlockSpec(a.shape, lambda b: (0, 0)) for a in consts]

    out = pl.pallas_call(
        kernel,
        out_shape=jax.ShapeDtypeStruct((num_blocks, 1, 128), jnp.float32),
        grid=(num_blocks,),
        in_specs=in_specs,
        out_specs=pl.BlockSpec((None, 1, 128), lambda b: (b, 0, 0)),
        scratch_shapes=scratch_shapes,
        compiler_params=pltpu.CompilerParams(
            dimension_semantics=("parallel",),
            vmem_limit_bytes=16 * 1024 * 1024,
        ),
    )(xf, *consts)

    return jnp.sum(out[:, 0, 0])


if __name__ == "__main__":
    key = jax.random.PRNGKey(0)
    ky, ky_ = jax.random.split(key)
    # NCDHW: batch=2, channels=1 (LeNet3D input), spatial 8x8x8
    y = jax.random.normal(ky, (2, 1, 8, 8, 8), jnp.float32)
    y_ = jax.random.normal(ky_, (2, 1, 8, 8, 8), jnp.float32)

    loss = perceptual_loss(y, y_)
    jax.block_until_ready(loss)
    print("KERNEL_OK")
</pallas_src>

<mosaic_0001>
module attributes {stable_mosaic.version = 11 : i64} {
  func.func @kernel(%arg0: i32, %arg1: memref<1x1x1024xf32, #tpu.memory_space<vmem>>, %arg2: memref<6x27xf32, #tpu.memory_space<vmem>>, %arg3: memref<6x1xf32, #tpu.memory_space<vmem>>, %arg4: memref<27x1024xf32, #tpu.memory_space<vmem>>, %arg5: memref<1024x128xf32, #tpu.memory_space<vmem>>, %arg6: memref<16x162xf32, #tpu.memory_space<vmem>>, %arg7: memref<16x1xf32, #tpu.memory_space<vmem>>, %arg8: memref<27x128xf32, #tpu.memory_space<vmem>>, %arg9: memref<128x16xf32, #tpu.memory_space<vmem>>, %arg10: memref<16x8xf32, #tpu.memory_space<vmem>>, %arg11: memref<1x1x128xf32, #tpu.memory_space<vmem>>, %arg12: memref<27x1024xf32, #tpu.memory_space<vmem>>, %arg13: memref<162x128xf32, #tpu.memory_space<vmem>>) attributes {dimension_semantics = [#tpu.dimension_semantics<parallel>], iteration_bounds = array<i64: 2>, scalar_prefetch = 0 : i64, scratch_operands = 2 : i64, tpu.core_type = #tpu.core_type<tc>, window_params = [{transform_indices = @transform_0, window_bounds = array<i64: 1, 1, 1024>}, {pipeline_mode = #tpu.pipeline_mode<synchronous>, transform_indices = @transform_1, window_bounds = array<i64: 6, 27>}, {pipeline_mode = #tpu.pipeline_mode<synchronous>, transform_indices = @transform_2, window_bounds = array<i64: 6, 1>}, {pipeline_mode = #tpu.pipeline_mode<synchronous>, transform_indices = @transform_3, window_bounds = array<i64: 27, 1024>}, {pipeline_mode = #tpu.pipeline_mode<synchronous>, transform_indices = @transform_4, window_bounds = array<i64: 1024, 128>}, {pipeline_mode = #tpu.pipeline_mode<synchronous>, transform_indices = @transform_5, window_bounds = array<i64: 16, 162>}, {pipeline_mode = #tpu.pipeline_mode<synchronous>, transform_indices = @transform_6, window_bounds = array<i64: 16, 1>}, {pipeline_mode = #tpu.pipeline_mode<synchronous>, transform_indices = @transform_7, window_bounds = array<i64: 27, 128>}, {pipeline_mode = #tpu.pipeline_mode<synchronous>, transform_indices = @transform_8, window_bounds = array<i64: 128, 16>}, {pipeline_mode = #tpu.pipeline_mode<synchronous>, transform_indices = @transform_9, window_bounds = array<i64: 16, 8>}, {transform_indices = @transform_10, window_bounds = array<i64: 1, 1, 128>}]} {
    %c0 = arith.constant 0 : index
    %c0_0 = arith.constant 0 : index
    %c0_1 = arith.constant 0 : index
    %0 = vector.load %arg1[%c0, %c0_0, %c0_1] : memref<1x1x1024xf32, #tpu.memory_space<vmem>>, vector<1x1x1024xf32>
    %1 = vector.shape_cast %0 : vector<1x1x1024xf32> to vector<1x1024xf32>
    %cst = arith.constant 0.000000e+00 : f32
    %2 = vector.broadcast %cst : f32 to vector<1x1xf32>
    %c73_i32 = arith.constant 73 : i32
    %3 = tpu.dynamic_rotate %1 by %c73_i32 dim 1 : vector<1x1024xf32>, i32 -> vector<1x1024xf32>
    %c0_2 = arith.constant 0 : index
    %c0_3 = arith.constant 0 : index
    %4 = vector.load %arg4[%c0_2, %c0_3] : memref<27x1024xf32, #tpu.memory_space<vmem>>, vector<1x1024xf32>
    %5 = arith.mulf %3, %4 : vector<1x1024xf32>
    %c0_4 = arith.constant 0 : index
    %c0_5 = arith.constant 0 : index
    %6 = vector.load %arg12[%c0_4, %c0_5] : memref<27x1024xf32, #tpu.memory_space<vmem>>, vector<1x1024xf32>
    tpu.vector_store %arg12[%c0_4, %c0_5], %5 {strides = array<i32>} : memref<27x1024xf32, #tpu.memory_space<vmem>>, vector<1x1024xf32>,
    %c72_i32 = arith.constant 72 : i32
    %7 = tpu.dynamic_rotate %1 by %c72_i32 dim 1 : vector<1x1024xf32>, i32 -> vector<1x1024xf32>
    %c1 = arith.constant 1 : index
    %c0_6 = arith.constant 0 : index
    %8 = vector.load %arg4[%c1, %c0_6] : memref<27x1024xf32, #tpu.memory_space<vmem>>, vector<1x1024xf32>
    %9 = arith.mulf %7, %8 : vector<1x1024xf32>
    %c1_7 = arith.constant 1 : index
    %c0_8 = arith.constant 0 : index
    %10 = vector.load %arg12[%c1_7, %c0_8] : memref<27x1024xf32, #tpu.memory_space<vmem>>, vector<1x1024xf32>
    tpu.vector_store %arg12[%c1_7, %c0_8], %9 {strides = array<i32>} : memref<27x1024xf32, #tpu.memory_space<vmem>>, vector<1x1024xf32>,
    %c71_i32 = arith.constant 71 : i32
    %11 = tpu.dynamic_rotate %1 by %c71_i32 dim 1 : vector<1x1024xf32>, i32 -> vector<1x1024xf32>
    %c2 = arith.constant 2 : index
    %c0_9 = arith.constant 0 : index
    %12 = vector.load %arg4[%c2, %c0_9] : memref<27x1024xf32, #tpu.memory_space<vmem>>, vector<1x1024xf32>
    %13 = arith.mulf %11, %12 : vector<1x1024xf32>
    %c2_10 = arith.constant 2 : index
    %c0_11 = arith.constant 0 : index
    %14 = vector.load %arg12[%c2_10, %c0_11] : memref<27x1024xf32, #tpu.memory_space<vmem>>, vector<1x1024xf32>
    tpu.vector_store %arg12[%c2_10, %c0_11], %13 {strides = array<i32>} : memref<27x1024xf32, #tpu.memory_space<vmem>>, vector<1x1024xf32>,
    %c65_i32 = arith.constant 65 : i32
    %15 = tpu.dynamic_rotate %1 by %c65_i32 dim 1 : vector<1x1024xf32>, i32 -> vector<1x1024xf32>
    %c3 = arith.constant 3 : index
    %c0_12 = arith.constant 0 : index
    %16 = vector.load %arg4[%c3, %c0_12] : memref<27x1024xf32, #tpu.memory_space<vmem>>, vector<1x1024xf32>
    %17 = arith.mulf %15, %16 : vector<1x1024xf32>
    %c3_13 = arith.constant 3 : index
    %c0_14 = arith.constant 0 : index
    %18 = vector.load %arg12[%c3_13, %c0_14] : memref<27x1024xf32, #tpu.memory_space<vmem>>, vector<1x1024xf32>
    tpu.vector_store %arg12[%c3_13, %c0_14], %17 {strides = array<i32>} : memref<27x1024xf32, #tpu.memory_space<vmem>>, vector<1x1024xf32>,
    %c64_i32 = arith.constant 64 : i32
    %19 = tpu.dynamic_rotate %1 by %c64_i32 dim 1 : vector<1x1024xf32>, i32 -> vector<1x1024xf32>
    %c4 = arith.constant 4 : index
    %c0_15 = arith.constant 0 : index
    %20 = vector.load %arg4[%c4, %c0_15] : memref<27x1024xf32, #tpu.memory_space<vmem>>, vector<1x1024xf32>
    %21 = arith.mulf %19, %20 : vector<1x1024xf32>
    %c4_16 = arith.constant 4 : index
    %c0_17 = arith.constant 0 : index
    %22 = vector.load %arg12[%c4_16, %c0_17] : memref<27x1024xf32, #tpu.memory_space<vmem>>, vector<1x1024xf32>
    tpu.vector_store %arg12[%c4_16, %c0_17], %21 {strides = array<i32>} : memref<27x1024xf32, #tpu.memory_space<vmem>>, vector<1x1024xf32>,
    %c63_i32 = arith.constant 63 : i32
    %23 = tpu.dynamic_rotate %1 by %c63_i32 dim 1 : vector<1x1024xf32>, i32 -> vector<1x1024xf32>
    %c5 = arith.constant 5 : index
    %c0_18 = arith.constant 0 : index
    %24 = vector.load %arg4[%c5, %c0_18] : memref<27x1024xf32, #tpu.memory_space<vmem>>, vector<1x1024xf32>
    %25 = arith.mulf %23, %24 : vector<1x1024xf32>
    %c5_19 = arith.constant 5 : index
    %c0_20 = arith.constant 0 : index
    %26 = vector.load %arg12[%c5_19, %c0_20] : memref<27x1024xf32, #tpu.memory_space<vmem>>, vector<1x1024xf32>
    tpu.vector_store %arg12[%c5_19, %c0_20], %25 {strides = array<i32>} : memref<27x1024xf32, #tpu.memory_space<vmem>>, vector<1x1024xf32>,
    %c57_i32 = arith.constant 57 : i32
    %27 = tpu.dynamic_rotate %1 by %c57_i32 dim 1 : vector<1x1024xf32>, i32 -> vector<1x1024xf32>
    %c6 = arith.constant 6 : index
    %c0_21 = arith.constant 0 : index
    %28 = vector.load %arg4[%c6, %c0_21] : memref<27x1024xf32, #tpu.memory_space<vmem>>, vector<1x1024xf32>
    %29 = arith.mulf %27, %28 : vector<1x1024xf32>
    %c6_22 = arith.constant 6 : index
    %c0_23 = arith.constant 0 : index
    %30 = vector.load %arg12[%c6_22, %c0_23] : memref<27x1024xf32, #tpu.memory_space<vmem>>, vector<1x1024xf32>
    tpu.vector_store %arg12[%c6_22, %c0_23], %29 {strides = array<i32>} : memref<27x1024xf32, #tpu.memory_space<vmem>>, vector<1x1024xf32>,
    %c56_i32 = arith.constant 56 : i32
    %31 = tpu.dynamic_rotate %1 by %c56_i32 dim 1 : vector<1x1024xf32>, i32 -> vector<1x1024xf32>
    %c7 = arith.constant 7 : index
    %c0_24 = arith.constant 0 : index
    %32 = vector.load %arg4[%c7, %c0_24] : memref<27x1024xf32, #tpu.memory_space<vmem>>, vector<1x1024xf32>
    %33 = arith.mulf %31, %32 : vector<1x1024xf32>
    %c7_25 = arith.constant 7 : index
    %c0_26 = arith.constant 0 : index
    %34 = vector.load %arg12[%c7_25, %c0_26] : memref<27x1024xf32, #tpu.memory_space<vmem>>, vector<1x1024xf32>
    tpu.vector_store %arg12[%c7_25, %c0_26], %33 {strides = array<i32>} : memref<27x1024xf32, #tpu.memory_space<vmem>>, vector<1x1024xf32>,
    %c55_i32 = arith.constant 55 : i32
    %35 = tpu.dynamic_rotate %1 by %c55_i32 dim 1 : vector<1x1024xf32>, i32 -> vector<1x1024xf32>
    %c8 = arith.constant 8 : index
    %c0_27 = arith.constant 0 : index
    %36 = vector.load %arg4[%c8, %c0_27] : memref<27x1024xf32, #tpu.memory_space<vmem>>, vector<1x1024xf32>
    %37 = arith.mulf %35, %36 : vector<1x1024xf32>
    %c8_28 = arith.constant 8 : index
    %c0_29 = arith.constant 0 : index
    %38 = vector.load %arg12[%c8_28, %c0_29] : memref<27x1024xf32, #tpu.memory_space<vmem>>, vector<1x1024xf32>
    tpu.vector_store %arg12[%c8_28, %c0_29], %37 {strides = array<i32>} : memref<27x1024xf32, #tpu.memory_space<vmem>>, vector<1x1024xf32>,
    %c9_i32 = arith.constant 9 : i32
    %39 = tpu.dynamic_rotate %1 by %c9_i32 dim 1 : vector<1x1024xf32>, i32 -> vector<1x1024xf32>
    %c9 = arith.constant 9 : index
    %c0_30 = arith.constant 0 : index
    %40 = vector.load %arg4[%c9, %c0_30] : memref<27x1024xf32, #tpu.memory_space<vmem>>, vector<1x1024xf32>
    %41 = arith.mulf %39, %40 : vector<1x1024xf32>
    %c9_31 = arith.constant 9 : index
    %c0_32 = arith.constant 0 : index
    %42 = vector.load %arg12[%c9_31, %c0_32] : memref<27x1024xf32, #tpu.memory_space<vmem>>, vector<1x1024xf32>
    tpu.vector_store %arg12[%c9_31, %c0_32], %41 {strides = array<i32>} : memref<27x1024xf32, #tpu.memory_space<vmem>>, vector<1x1024xf32>,
    %c8_i32 = arith.constant 8 : i32
    %43 = tpu.dynamic_rotate %1 by %c8_i32 dim 1 : vector<1x1024xf32>, i32 -> vector<1x1024xf32>
    %c10 = arith.constant 10 : index
    %c0_33 = arith.constant 0 : index
    %44 = vector.load %arg4[%c10, %c0_33] : memref<27x1024xf32, #tpu.memory_space<vmem>>, vector<1x1024xf32>
    %45 = arith.mulf %43, %44 : vector<1x1024xf32>
    %c10_34 = arith.constant 10 : index
    %c0_35 = arith.constant 0 : index
    %46 = vector.load %arg12[%c10_34, %c0_35] : memref<27x1024xf32, #tpu.memory_space<vmem>>, vector<1x1024xf32>
    tpu.vector_store %arg12[%c10_34, %c0_35], %45 {strides = array<i32>} : memref<27x1024xf32, #tpu.memory_space<vmem>>, vector<1x1024xf32>,
    %c7_i32 = arith.constant 7 : i32
    %47 = tpu.dynamic_rotate %1 by %c7_i32 dim 1 : vector<1x1024xf32>, i32 -> vector<1x1024xf32>
    %c11 = arith.constant 11 : index
    %c0_36 = arith.constant 0 : index
    %48 = vector.load %arg4[%c11, %c0_36] : memref<27x1024xf32, #tpu.memory_space<vmem>>, vector<1x1024xf32>
    %49 = arith.mulf %47, %48 : vector<1x1024xf32>
    %c11_37 = arith.constant 11 : index
    %c0_38 = arith.constant 0 : index
    %50 = vector.load %arg12[%c11_37, %c0_38] : memref<27x1024xf32, #tpu.memory_space<vmem>>, vector<1x1024xf32>
    tpu.vector_store %arg12[%c11_37, %c0_38], %49 {strides = array<i32>} : memref<27x1024xf32, #tpu.memory_space<vmem>>, vector<1x1024xf32>,
    %c1_i32 = arith.constant 1 : i32
    %51 = tpu.dynamic_rotate %1 by %c1_i32 dim 1 : vector<1x1024xf32>, i32 -> vector<1x1024xf32>
    %c12 = arith.constant 12 : index
    %c0_39 = arith.constant 0 : index
    %52 = vector.load %arg4[%c12, %c0_39] : memref<27x1024xf32, #tpu.memory_space<vmem>>, vector<1x1024xf32>
    %53 = arith.mulf %51, %52 : vector<1x1024xf32>
    %c12_40 = arith.constant 12 : index
    %c0_41 = arith.constant 0 : index
    %54 = vector.load %arg12[%c12_40, %c0_41] : memref<27x1024xf32, #tpu.memory_space<vmem>>, vector<1x1024xf32>
    tpu.vector_store %arg12[%c12_40, %c0_41], %53 {strides = array<i32>} : memref<27x1024xf32, #tpu.memory_space<vmem>>, vector<1x1024xf32>,
    %c13 = arith.constant 13 : index
    %c0_42 = arith.constant 0 : index
    %55 = vector.load %arg4[%c13, %c0_42] : memref<27x1024xf32, #tpu.memory_space<vmem>>, vector<1x1024xf32>
    %56 = arith.mulf %1, %55 : vector<1x1024xf32>
    %c13_43 = arith.constant 13 : index
    %c0_44 = arith.constant 0 : index
    %57 = vector.load %arg12[%c13_43, %c0_44] : memref<27x1024xf32, #tpu.memory_space<vmem>>, vector<1x1024xf32>
    tpu.vector_store %arg12[%c13_43, %c0_44], %56 {strides = array<i32>} : memref<27x1024xf32, #tpu.memory_space<vmem>>, vector<1x1024xf32>,
    %c1023_i32 = arith.constant 1023 : i32
    %58 = tpu.dynamic_rotate %1 by %c1023_i32 dim 1 : vector<1x1024xf32>, i32 -> vector<1x1024xf32>
    %c14 = arith.constant 14 : index
    %c0_45 = arith.constant 0 : index
    %59 = vector.load %arg4[%c14, %c0_45] : memref<27x1024xf32, #tpu.memory_space<vmem>>, vector<1x1024xf32>
    %60 = arith.mulf %58, %59 : vector<1x1024xf32>
    %c14_46 = arith.constant 14 : index
    %c0_47 = arith.constant 0 : index
    %61 = vector.load %arg12[%c14_46, %c0_47] : memref<27x1024xf32, #tpu.memory_space<vmem>>, vector<1x1024xf32>
    tpu.vector_store %arg12[%c14_46, %c0_47], %60 {strides = array<i32>} : memref<27x1024xf32, #tpu.memory_space<vmem>>, vector<1x1024xf32>,
    %c1017_i32 = arith.constant 1017 : i32
    %62 = tpu.dynamic_rotate %1 by %c1017_i32 dim 1 : vector<1x1024xf32>, i32 -> vector<1x1024xf32>
    %c15 = arith.constant 15 : index
    %c0_48 = arith.constant 0 : index
    %63 = vector.load %arg4[%c15, %c0_48] : memref<27x1024xf32, #tpu.memory_space<vmem>>, vector<1x1024xf32>
    %64 = arith.mulf %62, %63 : vector<1x1024xf32>
    %c15_49 = arith.constant 15 : index
    %c0_50 = arith.constant 0 : index
    %65 = vector.load %arg12[%c15_49, %c0_50] : memref<27x1024xf32, #tpu.memory_space<vmem>>, vector<1x1024xf32>
    tpu.vector_store %arg12[%c15_49, %c0_50], %64 {strides = array<i32>} : memref<27x1024xf32, #tpu.memory_space<vmem>>, vector<1x1024xf32>,
    %c1016_i32 = arith.constant 1016 : i32
    %66 = tpu.dynamic_rotate %1 by %c1016_i32 dim 1 : vector<1x1024xf32>, i32 -> vector<1x1024xf32>
    %c16 = arith.constant 16 : index
    %c0_51 = arith.constant 0 : index
    %67 = vector.load %arg4[%c16, %c0_51] : memref<27x1024xf32, #tpu.memory_space<vmem>>, vector<1x1024xf32>
    %68 = arith.mulf %66, %67 : vector<1x1024xf32>
    %c16_52 = arith.constant 16 : index
    %c0_53 = arith.constant 0 : index
    %69 = vector.load %arg12[%c16_52, %c0_53] : memref<27x1024xf32, #tpu.memory_space<vmem>>, vector<1x1024xf32>
    tpu.vector_store %arg12[%c16_52, %c0_53], %68 {strides = array<i32>} : memref<27x1024xf32, #tpu.memory_space<vmem>>, vector<1x1024xf32>,
    %c1015_i32 = arith.constant 1015 : i32
    %70 = tpu.dynamic_rotate %1 by %c1015_i32 dim 1 : vector<1x1024xf32>, i32 -> vector<1x1024xf32>
    %c17 = arith.constant 17 : index
    %c0_54 = arith.constant 0 : index
    %71 = vector.load %arg4[%c17, %c0_54] : memref<27x1024xf32, #tpu.memory_space<vmem>>, vector<1x1024xf32>
    %72 = arith.mulf %70, %71 : vector<1x1024xf32>
    %c17_55 = arith.constant 17 : index
    %c0_56 = arith.constant 0 : index
    %73 = vector.load %arg12[%c17_55, %c0_56] : memref<27x1024xf32, #tpu.memory_space<vmem>>, vector<1x1024xf32>
    tpu.vector_store %arg12[%c17_55, %c0_56], %72 {strides = array<i32>} : memref<27x1024xf32, #tpu.memory_space<vmem>>, vector<1x1024xf32>,
    %c969_i32 = arith.constant 969 : i32
    %74 = tpu.dynamic_rotate %1 by %c969_i32 dim 1 : vector<1x1024xf32>, i32 -> vector<1x1024xf32>
    %c18 = arith.constant 18 : index
    %c0_57 = arith.constant 0 : index
    %75 = vector.load %arg4[%c18, %c0_57] : memref<27x1024xf32, #tpu.memory_space<vmem>>, vector<1x1024xf32>
    %76 = arith.mulf %74, %75 : vector<1x1024xf32>
    %c18_58 = arith.constant 18 : index
    %c0_59 = arith.constant 0 : index
    %77 = vector.load %arg12[%c18_58, %c0_59] : memref<27x1024xf32, #tpu.memory_space<vmem>>, vector<1x1024xf32>
    tpu.vector_store %arg12[%c18_58, %c0_59], %76 {strides = array<i32>} : memref<27x1024xf32, #tpu.memory_space<vmem>>, vector<1x1024xf32>,
    %c968_i32 = arith.constant 968 : i32
    %78 = tpu.dynamic_rotate %1 by %c968_i32 dim 1 : vector<1x1024xf32>, i32 -> vector<1x1024xf32>
    %c19 = arith.constant 19 : index
    %c0_60 = arith.constant 0 : index
    %79 = vector.load %arg4[%c19, %c0_60] : memref<27x1024xf32, #tpu.memory_space<vmem>>, vector<1x1024xf32>
    %80 = arith.mulf %78, %79 : vector<1x1024xf32>
    %c19_61 = arith.constant 19 : index
    %c0_62 = arith.constant 0 : index
    %81 = vector.load %arg12[%c19_61, %c0_62] : memref<27x1024xf32, #tpu.memory_space<vmem>>, vector<1x1024xf32>
    tpu.vector_store %arg12[%c19_61, %c0_62], %80 {strides = array<i32>} : memref<27x1024xf32, #tpu.memory_space<vmem>>, vector<1x1024xf32>,
    %c967_i32 = arith.constant 967 : i32
    %82 = tpu.dynamic_rotate %1 by %c967_i32 dim 1 : vector<1x1024xf32>, i32 -> vector<1x1024xf32>
    %c20 = arith.constant 20 : index
    %c0_63 = arith.constant 0 : index
    %83 = vector.load %arg4[%c20, %c0_63] : memref<27x1024xf32, #tpu.memory_space<vmem>>, vector<1x1024xf32>
    %84 = arith.mulf %82, %83 : vector<1x1024xf32>
    %c20_64 = arith.constant 20 : index
    %c0_65 = arith.constant 0 : index
    %85 = vector.load %arg12[%c20_64, %c0_65] : memref<27x1024xf32, #tpu.memory_space<vmem>>, vector<1x1024xf32>
    tpu.vector_store %arg12[%c20_64, %c0_65], %84 {strides = array<i32>} : memref<27x1024xf32, #tpu.memory_space<vmem>>, vector<1x1024xf32>,
    %c961_i32 = arith.constant 961 : i32
    %86 = tpu.dynamic_rotate %1 by %c961_i32 dim 1 : vector<1x1024xf32>, i32 -> vector<1x1024xf32>
    %c21 = arith.constant 21 : index
    %c0_66 = arith.constant 0 : index
    %87 = vector.load %arg4[%c21, %c0_66] : memref<27x1024xf32, #tpu.memory_space<vmem>>, vector<1x1024xf32>
    %88 = arith.mulf %86, %87 : vector<1x1024xf32>
    %c21_67 = arith.constant 21 : index
    %c0_68 = arith.constant 0 : index
    %89 = vector.load %arg12[%c21_67, %c0_68] : memref<27x1024xf32, #tpu.memory_space<vmem>>, vector<1x1024xf32>
    tpu.vector_store %arg12[%c21_67, %c0_68], %88 {strides = array<i32>} : memref<27x1024xf32, #tpu.memory_space<vmem>>, vector<1x1024xf32>,
    %c960_i32 = arith.constant 960 : i32
    %90 = tpu.dynamic_rotate %1 by %c960_i32 dim 1 : vector<1x1024xf32>, i32 -> vector<1x1024xf32>
    %c22 = arith.constant 22 : index
    %c0_69 = arith.constant 0 : index
    %91 = vector.load %arg4[%c22, %c0_69] : memref<27x1024xf32, #tpu.memory_space<vmem>>, vector<1x1024xf32>
    %92 = arith.mulf %90, %91 : vector<1x1024xf32>
    %c22_70 = arith.constant 22 : index
    %c0_71 = arith.constant 0 : index
    %93 = vector.load %arg12[%c22_70, %c0_71] : memref<27x1024xf32, #tpu.memory_space<vmem>>, vector<1x1024xf32>
    tpu.vector_store %arg12[%c22_70, %c0_71], %92 {strides = array<i32>} : memref<27x1024xf32, #tpu.memory_space<vmem>>, vector<1x1024xf32>,
    %c959_i32 = arith.constant 959 : i32
    %94 = tpu.dynamic_rotate %1 by %c959_i32 dim 1 : vector<1x1024xf32>, i32 -> vector<1x1024xf32>
    %c23 = arith.constant 23 : index
    %c0_72 = arith.constant 0 : index
    %95 = vector.load %arg4[%c23, %c0_72] : memref<27x1024xf32, #tpu.memory_space<vmem>>, vector<1x1024xf32>
    %96 = arith.mulf %94, %95 : vector<1x1024xf32>
    %c23_73 = arith.constant 23 : index
    %c0_74 = arith.constant 0 : index
    %97 = vector.load %arg12[%c23_73, %c0_74] : memref<27x1024xf32, #tpu.memory_space<vmem>>, vector<1x1024xf32>
    tpu.vector_store %arg12[%c23_73, %c0_74], %96 {strides = array<i32>} : memref<27x1024xf32, #tpu.memory_space<vmem>>, vector<1x1024xf32>,
    %c953_i32 = arith.constant 953 : i32
    %98 = tpu.dynamic_rotate %1 by %c953_i32 dim 1 : vector<1x1024xf32>, i32 -> vector<1x1024xf32>
    %c24 = arith.constant 24 : index
    %c0_75 = arith.constant 0 : index
    %99 = vector.load %arg4[%c24, %c0_75] : memref<27x1024xf32, #tpu.memory_space<vmem>>, vector<1x1024xf32>
    %100 = arith.mulf %98, %99 : vector<1x1024xf32>
    %c24_76 = arith.constant 24 : index
    %c0_77 = arith.constant 0 : index
    %101 = vector.load %arg12[%c24_76, %c0_77] : memref<27x1024xf32, #tpu.memory_space<vmem>>, vector<1x1024xf32>
    tpu.vector_store %arg12[%c24_76, %c0_77], %100 {strides = array<i32>} : memref<27x1024xf32, #tpu.memory_space<vmem>>, vector<1x1024xf32>,
    %c952_i32 = arith.constant 952 : i32
    %102 = tpu.dynamic_rotate %1 by %c952_i32 dim 1 : vector<1x1024xf32>, i32 -> vector<1x1024xf32>
    %c25 = arith.constant 25 : index
    %c0_78 = arith.constant 0 : index
    %103 = vector.load %arg4[%c25, %c0_78] : memref<27x1024xf32, #tpu.memory_space<vmem>>, vector<1x1024xf32>
    %104 = arith.mulf %102, %103 : vector<1x1024xf32>
    %c25_79 = arith.constant 25 : index
    %c0_80 = arith.constant 0 : index
    %105 = vector.load %arg12[%c25_79, %c0_80] : memref<27x1024xf32, #tpu.memory_space<vmem>>, vector<1x1024xf32>
    tpu.vector_store %arg12[%c25_79, %c0_80], %104 {strides = array<i32>} : memref<27x1024xf32, #tpu.memory_space<vmem>>, vector<1x1024xf32>,
    %c951_i32 = arith.constant 951 : i32
    %106 = tpu.dynamic_rotate %1 by %c951_i32 dim 1 : vector<1x1024xf32>, i32 -> vector<1x1024xf32>
    %c26 = arith.constant 26 : index
    %c0_81 = arith.constant 0 : index
    %107 = vector.load %arg4[%c26, %c0_81] : memref<27x1024xf32, #tpu.memory_space<vmem>>, vector<1x1024xf32>
    %108 = arith.mulf %106, %107 : vector<1x1024xf32>
    %c26_82 = arith.constant 26 : index
    %c0_83 = arith.constant 0 : index
    %109 = vector.load %arg12[%c26_82, %c0_83] : memref<27x1024xf32, #tpu.memory_space<vmem>>, vector<1x1024xf32>
    tpu.vector_store %arg12[%c26_82, %c0_83], %108 {strides = array<i32>} : memref<27x1024xf32, #tpu.memory_space<vmem>>, vector<1x1024xf32>,
    %c0_84 = arith.constant 0 : index
    %c0_85 = arith.constant 0 : index
    %110 = vector.load %arg2[%c0_84, %c0_85] : memref<6x27xf32, #tpu.memory_space<vmem>>, vector<6x27xf32>
    %c0_86 = arith.constant 0 : index
    %c0_87 = arith.constant 0 : index
    %111 = vector.load %arg12[%c0_86, %c0_87] : memref<27x1024xf32, #tpu.memory_space<vmem>>, vector<27x1024xf32>
    %cst_88 = arith.constant dense<0.000000e+00> : vector<6x1024xf32>
    %112 = tpu.matmul %110, %111, %cst_88 {dimension_numbers = #tpu.dot_dimension_numbers<[1], [0], [0], [1], [0, 0, 1, 1], [], []>} : vector<6x27xf32>, vector<27x1024xf32>, vector<6x1024xf32> -> vector<6x1024xf32>
    %c0_89 = arith.constant 0 : index
    %c0_90 = arith.constant 0 : index
    %113 = vector.load %arg3[%c0_89, %c0_90] : memref<6x1xf32, #tpu.memory_space<vmem>>, vector<6x1xf32>
    %114 = vector.broadcast %113 : vector<6x1xf32> to vector<6x1024xf32>
    %115 = arith.addf %112, %114 : vector<6x1024xf32>
    %c512_i32 = arith.constant 512 : i32
    %116 = tpu.dynamic_rotate %115 by %c512_i32 dim 1 : vector<6x1024xf32>, i32 -> vector<6x1024xf32>
    %117 = arith.subf %115, %116 : vector<6x1024xf32>
    %118 = arith.mulf %117, %117 : vector<6x1024xf32>
    %119 = vector.shape_cast %118 : vector<6x1024xf32> to vector<1x6x1024xf32>
    %cst_91 = arith.constant dense<0.000000e+00> : vector<1xf32>
    %120 = vector.multi_reduction <add>, %119, %cst_91 [1, 2] : vector<1x6x1024xf32> to vector<1xf32>
    %121 = vector.shape_cast %120 : vector<1xf32> to vector<1x1x1xf32>
    %122 = vector.extract %121[0, 0, 0] : f32 from vector<1x1x1xf32>
    %123 = vector.broadcast %122 : f32 to vector<1x1xf32>
    %124 = math.absf %117 : vector<6x1024xf32>
    %125 = vector.shape_cast %124 : vector<6x1024xf32> to vector<1x6x1024xf32>
    %cst_92 = arith.constant dense<0.000000e+00> : vector<1xf32>
    %126 = vector.multi_reduction <add>, %125, %cst_92 [1, 2] : vector<1x6x1024xf32> to vector<1xf32>
    %127 = vector.shape_cast %126 : vector<1xf32> to vector<1x1x1xf32>
    %128 = vector.extract %127[0, 0, 0] : f32 from vector<1x1x1xf32>
    %129 = vector.broadcast %128 : f32 to vector<1x1xf32>
    %cst_93 = arith.constant 1.000000e-01 : f32
    %130 = vector.broadcast %cst_93 : f32 to vector<1x1xf32>
    %131 = arith.mulf %130, %129 : vector<1x1xf32>
    %132 = arith.addf %123, %131 : vector<1x1xf32>
    %cst_94 = arith.constant 8.13802107E-5 : f32
    %133 = vector.broadcast %cst_94 : f32 to vector<1x1xf32>
    %134 = arith.mulf %133, %132 : vector<1x1xf32>
    %135 = arith.addf %2, %134 : vector<1x1xf32>
    %cst_95 = arith.constant 0.000000e+00 : f32
    %136 = vector.broadcast %cst_95 : f32 to vector<6x1024xf32>
    %137 = arith.maximumf %115, %136 : vector<6x1024xf32>
    %c512_i32_96 = arith.constant 512 : i32
    %138 = tpu.dynamic_rotate %137 by %c512_i32_96 dim 1 : vector<6x1024xf32>, i32 -> vector<6x1024xf32>
    %139 = arith.subf %137, %138 : vector<6x1024xf32>
    %140 = arith.mulf %139, %139 : vector<6x1024xf32>
    %141 = vector.shape_cast %140 : vector<6x1024xf32> to vector<1x6x1024xf32>
    %cst_97 = arith.constant dense<0.000000e+00> : vector<1xf32>
    %142 = vector.multi_reduction <add>, %141, %cst_97 [1, 2] : vector<1x6x1024xf32> to vector<1xf32>
    %143 = vector.shape_cast %142 : vector<1xf32> to vector<1x1x1xf32>
    %144 = vector.extract %143[0, 0, 0] : f32 from vector<1x1x1xf32>
    %145 = vector.broadcast %144 : f32 to vector<1x1xf32>
    %146 = math.absf %139 : vector<6x1024xf32>
    %147 = vector.shape_cast %146 : vector<6x1024xf32> to vector<1x6x1024xf32>
    %cst_98 = arith.constant dense<0.000000e+00> : vector<1xf32>
    %148 = vector.multi_reduction <add>, %147, %cst_98 [1, 2] : vector<1x6x1024xf32> to vector<1xf32>
    %149 = vector.shape_cast %148 : vector<1xf32> to vector<1x1x1xf32>
    %150 = vector.extract %149[0, 0, 0] : f32 from vector<1x1x1xf32>
    %151 = vector.broadcast %150 : f32 to vector<1x1xf32>
    %cst_99 = arith.constant 1.000000e-01 : f32
    %152 = vector.broadcast %cst_99 : f32 to vector<1x1xf32>
    %153 = arith.mulf %152, %151 : vector<1x1xf32>
    %154 = arith.addf %145, %153 : vector<1x1xf32>
    %cst_100 = arith.constant 8.13802107E-5 : f32
    %155 = vector.broadcast %cst_100 : f32 to vector<1x1xf32>
    %156 = arith.mulf %155, %154 : vector<1x1xf32>
    %157 = arith.addf %135, %156 : vector<1x1xf32>
    %c1023_i32_101 = arith.constant 1023 : i32
    %158 = tpu.dynamic_rotate %137 by %c1023_i32_101 dim 1 : vector<6x1024xf32>, i32 -> vector<6x1024xf32>
    %159 = arith.maximumf %137, %158 : vector<6x1024xf32>
    %c1016_i32_102 = arith.constant 1016 : i32
    %160 = tpu.dynamic_rotate %159 by %c1016_i32_102 dim 1 : vector<6x1024xf32>, i32 -> vector<6x1024xf32>
    %161 = arith.maximumf %159, %160 : vector<6x1024xf32>
    %c960_i32_103 = arith.constant 960 : i32
    %162 = tpu.dynamic_rotate %161 by %c960_i32_103 dim 1 : vector<6x1024xf32>, i32 -> vector<6x1024xf32>
    %163 = arith.maximumf %161, %162 : vector<6x1024xf32>
    %c0_104 = arith.constant 0 : index
    %c0_105 = arith.constant 0 : index
    %164 = vector.load %arg5[%c0_104, %c0_105] : memref<1024x128xf32, #tpu.memory_space<vmem>>, vector<1024x128xf32>
    %cst_106 = arith.constant dense<0.000000e+00> : vector<6x128xf32>
    %165 = tpu.matmul %163, %164, %cst_106 {dimension_numbers = #tpu.dot_dimension_numbers<[1], [0], [0], [1], [0, 0, 1, 1], [], []>} : vector<6x1024xf32>, vector<1024x128xf32>, vector<6x128xf32> -> vector<6x128xf32>
    %c64_i32_107 = arith.constant 64 : i32
    %166 = tpu.dynamic_rotate %165 by %c64_i32_107 dim 1 : vector<6x128xf32>, i32 -> vector<6x128xf32>
    %167 = arith.subf %165, %166 : vector<6x128xf32>
    %168 = arith.mulf %167, %167 : vector<6x128xf32>
    %169 = vector.shape_cast %168 : vector<6x128xf32> to vector<1x6x128xf32>
    %cst_108 = arith.constant dense<0.000000e+00> : vector<1xf32>
    %170 = vector.multi_reduction <add>, %169, %cst_108 [1, 2] : vector<1x6x128xf32> to vector<1xf32>
    %171 = vector.shape_cast %170 : vector<1xf32> to vector<1x1x1xf32>
    %172 = vector.extract %171[0, 0, 0] : f32 from vector<1x1x1xf32>
    %173 = vector.broadcast %172 : f32 to vector<1x1xf32>
    %174 = math.absf %167 : vector<6x128xf32>
    %175 = vector.shape_cast %174 : vector<6x128xf32> to vector<1x6x128xf32>
    %cst_109 = arith.constant dense<0.000000e+00> : vector<1xf32>
    %176 = vector.multi_reduction <add>, %175, %cst_109 [1, 2] : vector<1x6x128xf32> to vector<1xf32>
    %177 = vector.shape_cast %176 : vector<1xf32> to vector<1x1x1xf32>
    %178 = vector.extract %177[0, 0, 0] : f32 from vector<1x1x1xf32>
    %179 = vector.broadcast %178 : f32 to vector<1x1xf32>
    %cst_110 = arith.constant 1.000000e-01 : f32
    %180 = vector.broadcast %cst_110 : f32 to vector<1x1xf32>
    %181 = arith.mulf %180, %179 : vector<1x1xf32>
    %182 = arith.addf %173, %181 : vector<1x1xf32>
    %cst_111 = arith.constant 6.51041686E-4 : f32
    %183 = vector.broadcast %cst_111 : f32 to vector<1x1xf32>
    %184 = arith.mulf %183, %182 : vector<1x1xf32>
    %185 = arith.addf %157, %184 : vector<1x1xf32>
    %c21_i32 = arith.constant 21 : i32
    %186 = tpu.dynamic_rotate %165 by %c21_i32 dim 1 : vector<6x128xf32>, i32 -> vector<6x128xf32>
    %c0_112 = arith.constant 0 : index
    %c0_113 = arith.constant 0 : index
    %187 = vector.load %arg8[%c0_112, %c0_113] : memref<27x128xf32, #tpu.memory_space<vmem>>, vector<1x128xf32>
    %188 = vector.broadcast %187 : vector<1x128xf32> to vector<6x128xf32>
    %189 = arith.mulf %186, %188 : vector<6x128xf32>
    %c0_114 = arith.constant 0 : index
    %c0_115 = arith.constant 0 : index
    %190 = vector.load %arg13[%c0_114, %c0_115] : memref<162x128xf32, #tpu.memory_space<vmem>>, vector<6x128xf32>
    tpu.vector_store %arg13[%c0_114, %c0_115], %189 {strides = array<i32>} : memref<162x128xf32, #tpu.memory_space<vmem>>, vector<6x128xf32>,
    %c20_i32 = arith.constant 20 : i32
    %191 = tpu.dynamic_rotate %165 by %c20_i32 dim 1 : vector<6x128xf32>, i32 -> vector<6x128xf32>
    %c1_116 = arith.constant 1 : index
    %c0_117 = arith.constant 0 : index
    %192 = vector.load %arg8[%c1_116, %c0_117] : memref<27x128xf32, #tpu.memory_space<vmem>>, vector<1x128xf32>
    %193 = vector.broadcast %192 : vector<1x128xf32> to vector<6x128xf32>
    %194 = arith.mulf %191, %193 : vector<6x128xf32>
    %c6_118 = arith.constant 6 : index
    %c0_119 = arith.constant 0 : index
    %195 = vector.load %arg13[%c6_118, %c0_119] : memref<162x128xf32, #tpu.memory_space<vmem>>, vector<6x128xf32>
    tpu.vector_store %arg13[%c6_118, %c0_119], %194 {strides = array<i32>} : memref<162x128xf32, #tpu.memory_space<vmem>>, vector<6x128xf32>,
    %c19_i32 = arith.constant 19 : i32
    %196 = tpu.dynamic_rotate %165 by %c19_i32 dim 1 : vector<6x128xf32>, i32 -> vector<6x128xf32>
    %c2_120 = arith.constant 2 : index
    %c0_121 = arith.constant 0 : index
    %197 = vector.load %arg8[%c2_120, %c0_121] : memref<27x128xf32, #tpu.memory_space<vmem>>, vector<1x128xf32>
    %198 = vector.broadcast %197 : vector<1x128xf32> to vector<6x128xf32>
    %199 = arith.mulf %196, %198 : vector<6x128xf32>
    %c12_122 = arith.constant 12 : index
    %c0_123 = arith.constant 0 : index
    %200 = vector.load %arg13[%c12_122, %c0_123] : memref<162x128xf32, #tpu.memory_space<vmem>>, vector<6x128xf32>
    tpu.vector_store %arg13[%c12_122, %c0_123], %199 {strides = array<i32>} : memref<162x128xf32, #tpu.memory_space<vmem>>, vector<6x128xf32>,
    %c17_i32 = arith.constant 17 : i32
    %201 = tpu.dynamic_rotate %165 by %c17_i32 dim 1 : vector<6x128xf32>, i32 -> vector<6x128xf32>
    %c3_124 = arith.constant 3 : index
    %c0_125 = arith.constant 0 : index
    %202 = vector.load %arg8[%c3_124, %c0_125] : memref<27x128xf32, #tpu.memory_space<vmem>>, vector<1x128xf32>
    %203 = vector.broadcast %202 : vector<1x128xf32> to vector<6x128xf32>
    %204 = arith.mulf %201, %203 : vector<6x128xf32>
    %c18_126 = arith.constant 18 : index
    %c0_127 = arith.constant 0 : index
    %205 = vector.load %arg13[%c18_126, %c0_127] : memref<162x128xf32, #tpu.memory_space<vmem>>, vector<6x128xf32>
    tpu.vector_store %arg13[%c18_126, %c0_127], %204 {strides = array<i32>} : memref<162x128xf32, #tpu.memory_space<vmem>>, vector<6x128xf32>,
    %c16_i32 = arith.constant 16 : i32
    %206 = tpu.dynamic_rotate %165 by %c16_i32 dim 1 : vector<6x128xf32>, i32 -> vector<6x128xf32>
    %c4_128 = arith.constant 4 : index
    %c0_129 = arith.constant 0 : index
    %207 = vector.load %arg8[%c4_128, %c0_129] : memref<27x128xf32, #tpu.memory_space<vmem>>, vector<1x128xf32>
    %208 = vector.broadcast %207 : vector<1x128xf32> to vector<6x128xf32>
    %209 = arith.mulf %206, %208 : vector<6x128xf32>
    %c24_130 = arith.constant 24 : index
    %c0_131 = arith.constant 0 : index
    %210 = vector.load %arg13[%c24_130, %c0_131] : memref<162x128xf32, #tpu.memory_space<vmem>>, vector<6x128xf32>
    tpu.vector_store %arg13[%c24_130, %c0_131], %209 {strides = array<i32>} : memref<162x128xf32, #tpu.memory_space<vmem>>, vector<6x128xf32>,
    %c15_i32 = arith.constant 15 : i32
    %211 = tpu.dynamic_rotate %165 by %c15_i32 dim 1 : vector<6x128xf32>, i32 -> vector<6x128xf32>
    %c5_132 = arith.constant 5 : index
    %c0_133 = arith.constant 0 : index
    %212 = vector.load %arg8[%c5_132, %c0_133] : memref<27x128xf32, #tpu.memory_space<vmem>>, vector<1x128xf32>
    %213 = vector.broadcast %212 : vector<1x128xf32> to vector<6x128xf32>
    %214 = arith.mulf %211, %213 : vector<6x128xf32>
    %c30 = arith.constant 30 : index
    %c0_134 = arith.constant 0 : index
    %215 = vector.load %arg13[%c30, %c0_134] : memref<162x128xf32, #tpu.memory_space<vmem>>, vector<6x128xf32>
    tpu.vector_store %arg13[%c30, %c0_134], %214 {strides = array<i32>} : memref<162x128xf32, #tpu.memory_space<vmem>>, vector<6x128xf32>,
    %c13_i32 = arith.constant 13 : i32
    %216 = tpu.dynamic_rotate %165 by %c13_i32 dim 1 : vector<6x128xf32>, i32 -> vector<6x128xf32>
    %c6_135 = arith.constant 6 : index
    %c0_136 = arith.constant 0 : index
    %217 = vector.load %arg8[%c6_135, %c0_136] : memref<27x128xf32, #tpu.memory_space<vmem>>, vector<1x128xf32>
    %218 = vector.broadcast %217 : vector<1x128xf32> to vector<6x128xf32>
    %219 = arith.mulf %216, %218 : vector<6x128xf32>
    %c36 = arith.constant 36 : index
    %c0_137 = arith.constant 0 : index
    %220 = vector.load %arg13[%c36, %c0_137] : memref<162x128xf32, #tpu.memory_space<vmem>>, vector<6x128xf32>
    tpu.vector_store %arg13[%c36, %c0_137], %219 {strides = array<i32>} : memref<162x128xf32, #tpu.memory_space<vmem>>, vector<6x128xf32>,
    %c12_i32 = arith.constant 12 : i32
    %221 = tpu.dynamic_rotate %165 by %c12_i32 dim 1 : vector<6x128xf32>, i32 -> vector<6x128xf32>
    %c7_138 = arith.constant 7 : index
    %c0_139 = arith.constant 0 : index
    %222 = vector.load %arg8[%c7_138, %c0_139] : memref<27x128xf32, #tpu.memory_space<vmem>>, vector<1x128xf32>
    %223 = vector.broadcast %222 : vector<1x128xf32> to vector<6x128xf32>
    %224 = arith.mulf %221, %223 : vector<6x128xf32>
    %c42 = arith.constant 42 : index
    %c0_140 = arith.constant 0 : index
    %225 = vector.load %arg13[%c42, %c0_140] : memref<162x128xf32, #tpu.memory_space<vmem>>, vector<6x128xf32>
    tpu.vector_store %arg13[%c42, %c0_140], %224 {strides = array<i32>} : memref<162x128xf32, #tpu.memory_space<vmem>>, vector<6x128xf32>,
    %c11_i32 = arith.constant 11 : i32
    %226 = tpu.dynamic_rotate %165 by %c11_i32 dim 1 : vector<6x128xf32>, i32 -> vector<6x128xf32>
    %c8_141 = arith.constant 8 : index
    %c0_142 = arith.constant 0 : index
    %227 = vector.load %arg8[%c8_141, %c0_142] : memref<27x128xf32, #tpu.memory_space<vmem>>, vector<1x128xf32>
    %228 = vector.broadcast %227 : vector<1x128xf32> to vector<6x128xf32>
    %229 = arith.mulf %226, %228 : vector<6x128xf32>
    %c48 = arith.constant 48 : index
    %c0_143 = arith.constant 0 : index
    %230 = vector.load %arg13[%c48, %c0_143] : memref<162x128xf32, #tpu.memory_space<vmem>>, vector<6x128xf32>
    tpu.vector_store %arg13[%c48, %c0_143], %229 {strides = array<i32>} : memref<162x128xf32, #tpu.memory_space<vmem>>, vector<6x128xf32>,
    %c5_i32 = arith.constant 5 : i32
    %231 = tpu.dynamic_rotate %165 by %c5_i32 dim 1 : vector<6x128xf32>, i32 -> vector<6x128xf32>
    %c9_144 = arith.constant 9 : index
    %c0_145 = arith.constant 0 : index
    %232 = vector.load %arg8[%c9_144, %c0_145] : memref<27x128xf32, #tpu.memory_space<vmem>>, vector<1x128xf32>
    %233 = vector.broadcast %232 : vector<1x128xf32> to vector<6x128xf32>
    %234 = arith.mulf %231, %233 : vector<6x128xf32>
    %c54 = arith.constant 54 : index
    %c0_146 = arith.constant 0 : index
    %235 = vector.load %arg13[%c54, %c0_146] : memref<162x128xf32, #tpu.memory_space<vmem>>, vector<6x128xf32>
    tpu.vector_store %arg13[%c54, %c0_146], %234 {strides = array<i32>} : memref<162x128xf32, #tpu.memory_space<vmem>>, vector<6x128xf32>,
    %c4_i32 = arith.constant 4 : i32
    %236 = tpu.dynamic_rotate %165 by %c4_i32 dim 1 : vector<6x128xf32>, i32 -> vector<6x128xf32>
    %c10_147 = arith.constant 10 : index
    %c0_148 = arith.constant 0 : index
    %237 = vector.load %arg8[%c10_147, %c0_148] : memref<27x128xf32, #tpu.memory_space<vmem>>, vector<1x128xf32>
    %238 = vector.broadcast %237 : vector<1x128xf32> to vector<6x128xf32>
    %239 = arith.mulf %236, %238 : vector<6x128xf32>
    %c60 = arith.constant 60 : index
    %c0_149 = arith.constant 0 : index
    %240 = vector.load %arg13[%c60, %c0_149] : memref<162x128xf32, #tpu.memory_space<vmem>>, vector<6x128xf32>
    tpu.vector_store %arg13[%c60, %c0_149], %239 {strides = array<i32>} : memref<162x128xf32, #tpu.memory_space<vmem>>, vector<6x128xf32>,
    %c3_i32 = arith.constant 3 : i32
    %241 = tpu.dynamic_rotate %165 by %c3_i32 dim 1 : vector<6x128xf32>, i32 -> vector<6x128xf32>
    %c11_150 = arith.constant 11 : index
    %c0_151 = arith.constant 0 : index
    %242 = vector.load %arg8[%c11_150, %c0_151] : memref<27x128xf32, #tpu.memory_space<vmem>>, vector<1x128xf32>
    %243 = vector.broadcast %242 : vector<1x128xf32> to vector<6x128xf32>
    %244 = arith.mulf %241, %243 : vector<6x128xf32>
    %c66 = arith.constant 66 : index
    %c0_152 = arith.constant 0 : index
    %245 = vector.load %arg13[%c66, %c0_152] : memref<162x128xf32, #tpu.memory_space<vmem>>, vector<6x128xf32>
    tpu.vector_store %arg13[%c66, %c0_152], %244 {strides = array<i32>} : memref<162x128xf32, #tpu.memory_space<vmem>>, vector<6x128xf32>,
    %c1_i32_153 = arith.constant 1 : i32
    %246 = tpu.dynamic_rotate %165 by %c1_i32_153 dim 1 : vector<6x128xf32>, i32 -> vector<6x128xf32>
    %c12_154 = arith.constant 12 : index
    %c0_155 = arith.constant 0 : index
    %247 = vector.load %arg8[%c12_154, %c0_155] : memref<27x128xf32, #tpu.memory_space<vmem>>, vector<1x128xf32>
    %248 = vector.broadcast %247 : vector<1x128xf32> to vector<6x128xf32>
    %249 = arith.mulf %246, %248 : vector<6x128xf32>
    %c72 = arith.constant 72 : index
    %c0_156 = arith.constant 0 : index
    %250 = vector.load %arg13[%c72, %c0_156] : memref<162x128xf32, #tpu.memory_space<vmem>>, vector<6x128xf32>
    tpu.vector_store %arg13[%c72, %c0_156], %249 {strides = array<i32>} : memref<162x128xf32, #tpu.memory_space<vmem>>, vector<6x128xf32>,
    %c13_157 = arith.constant 13 : index
    %c0_158 = arith.constant 0 : index
    %251 = vector.load %arg8[%c13_157, %c0_158] : memref<27x128xf32, #tpu.memory_space<vmem>>, vector<1x128xf32>
    %252 = vector.broadcast %251 : vector<1x128xf32> to vector<6x128xf32>
    %253 = arith.mulf %165, %252 : vector<6x128xf32>
    %c78 = arith.constant 78 : index
    %c0_159 = arith.constant 0 : index
    %254 = vector.load %arg13[%c78, %c0_159] : memref<162x128xf32, #tpu.memory_space<vmem>>, vector<6x128xf32>
    tpu.vector_store %arg13[%c78, %c0_159], %253 {strides = array<i32>} : memref<162x128xf32, #tpu.memory_space<vmem>>, vector<6x128xf32>,
    %c127_i32 = arith.constant 127 : i32
    %255 = tpu.dynamic_rotate %165 by %c127_i32 dim 1 : vector<6x128xf32>, i32 -> vector<6x128xf32>
    %c14_160 = arith.constant 14 : index
    %c0_161 = arith.constant 0 : index
    %256 = vector.load %arg8[%c14_160, %c0_161] : memref<27x128xf32, #tpu.memory_space<vmem>>, vector<1x128xf32>
    %257 = vector.broadcast %256 : vector<1x128xf32> to vector<6x128xf32>
    %258 = arith.mulf %255, %257 : vector<6x128xf32>
    %c84 = arith.constant 84 : index
    %c0_162 = arith.constant 0 : index
    %259 = vector.load %arg13[%c84, %c0_162] : memref<162x128xf32, #tpu.memory_space<vmem>>, vector<6x128xf32>
    tpu.vector_store %arg13[%c84, %c0_162], %258 {strides = array<i32>} : memref<162x128xf32, #tpu.memory_space<vmem>>, vector<6x128xf32>,
    %c125_i32 = arith.constant 125 : i32
    %260 = tpu.dynamic_rotate %165 by %c125_i32 dim 1 : vector<6x128xf32>, i32 -> vector<6x128xf32>
    %c15_163 = arith.constant 15 : index
    %c0_164 = arith.constant 0 : index
    %261 = vector.load %arg8[%c15_163, %c0_164] : memref<27x128xf32, #tpu.memory_space<vmem>>, vector<1x128xf32>
    %262 = vector.broadcast %261 : vector<1x128xf32> to vector<6x128xf32>
    %263 = arith.mulf %260, %262 : vector<6x128xf32>
    %c90 = arith.constant 90 : index
    %c0_165 = arith.constant 0 : index
    %264 = vector.load %arg13[%c90, %c0_165] : memref<162x128xf32, #tpu.memory_space<vmem>>, vector<6x128xf32>
    tpu.vector_store %arg13[%c90, %c0_165], %263 {strides = array<i32>} : memref<162x128xf32, #tpu.memory_space<vmem>>, vector<6x128xf32>,
    %c124_i32 = arith.constant 124 : i32
    %265 = tpu.dynamic_rotate %165 by %c124_i32 dim 1 : vector<6x128xf32>, i32 -> vector<6x128xf32>
    %c16_166 = arith.constant 16 : index
    %c0_167 = arith.constant 0 : index
    %266 = vector.load %arg8[%c16_166, %c0_167] : memref<27x128xf32, #tpu.memory_space<vmem>>, vector<1x128xf32>
    %267 = vector.broadcast %266 : vector<1x128xf32> to vector<6x128xf32>
    %268 = arith.mulf %265, %267 : vector<6x128xf32>
    %c96 = arith.constant 96 : index
    %c0_168 = arith.constant 0 : index
    %269 = vector.load %arg13[%c96, %c0_168] : memref<162x128xf32, #tpu.memory_space<vmem>>, vector<6x128xf32>
    tpu.vector_store %arg13[%c96, %c0_168], %268 {strides = array<i32>} : memref<162x128xf32, #tpu.memory_space<vmem>>, vector<6x128xf32>,
    %c123_i32 = arith.constant 123 : i32
    %270 = tpu.dynamic_rotate %165 by %c123_i32 dim 1 : vector<6x128xf32>, i32 -> vector<6x128xf32>
    %c17_169 = arith.constant 17 : index
    %c0_170 = arith.constant 0 : index
    %271 = vector.load %arg8[%c17_169, %c0_170] : memref<27x128xf32, #tpu.memory_space<vmem>>, vector<1x128xf32>
    %272 = vector.broadcast %271 : vector<1x128xf32> to vector<6x128xf32>
    %273 = arith.mulf %270, %272 : vector<6x128xf32>
    %c102 = arith.constant 102 : index
    %c0_171 = arith.constant 0 : index
    %274 = vector.load %arg13[%c102, %c0_171] : memref<162x128xf32, #tpu.memory_space<vmem>>, vector<6x128xf32>
    tpu.vector_store %arg13[%c102, %c0_171], %273 {strides = array<i32>} : memref<162x128xf32, #tpu.memory_space<vmem>>, vector<6x128xf32>,
    %c117_i32 = arith.constant 117 : i32
    %275 = tpu.dynamic_rotate %165 by %c117_i32 dim 1 : vector<6x128xf32>, i32 -> vector<6x128xf32>
    %c18_172 = arith.constant 18 : index
    %c0_173 = arith.constant 0 : index
    %276 = vector.load %arg8[%c18_172, %c0_173] : memref<27x128xf32, #tpu.memory_space<vmem>>, vector<1x128xf32>
    %277 = vector.broadcast %276 : vector<1x128xf32> to vector<6x128xf32>
    %278 = arith.mulf %275, %277 : vector<6x128xf32>
    %c108 = arith.constant 108 : index
    %c0_174 = arith.constant 0 : index
    %279 = vector.load %arg13[%c108, %c0_174] : memref<162x128xf32, #tpu.memory_space<vmem>>, vector<6x128xf32>
    tpu.vector_store %arg13[%c108, %c0_174], %278 {strides = array<i32>} : memref<162x128xf32, #tpu.memory_space<vmem>>, vector<6x128xf32>,
    %c116_i32 = arith.constant 116 : i32
    %280 = tpu.dynamic_rotate %165 by %c116_i32 dim 1 : vector<6x128xf32>, i32 -> vector<6x128xf32>
    %c19_175 = arith.constant 19 : index
    %c0_176 = arith.constant 0 : index
    %281 = vector.load %arg8[%c19_175, %c0_176] : memref<27x128xf32, #tpu.memory_space<vmem>>, vector<1x128xf32>
    %282 = vector.broadcast %281 : vector<1x128xf32> to vector<6x128xf32>
    %283 = arith.mulf %280, %282 : vector<6x128xf32>
    %c114 = arith.constant 114 : index
    %c0_177 = arith.constant 0 : index
    %284 = vector.load %arg13[%c114, %c0_177] : memref<162x128xf32, #tpu.memory_space<vmem>>, vector<6x128xf32>
    tpu.vector_store %arg13[%c114, %c0_177], %283 {strides = array<i32>} : memref<162x128xf32, #tpu.memory_space<vmem>>, vector<6x128xf32>,
    %c115_i32 = arith.constant 115 : i32
    %285 = tpu.dynamic_rotate %165 by %c115_i32 dim 1 : vector<6x128xf32>, i32 -> vector<6x128xf32>
    %c20_178 = arith.constant 20 : index
    %c0_179 = arith.constant 0 : index
    %286 = vector.load %arg8[%c20_178, %c0_179] : memref<27x128xf32, #tpu.memory_space<vmem>>, vector<1x128xf32>
    %287 = vector.broadcast %286 : vector<1x128xf32> to vector<6x128xf32>
    %288 = arith.mulf %285, %287 : vector<6x128xf32>
    %c120 = arith.constant 120 : index
    %c0_180 = arith.constant 0 : index
    %289 = vector.load %arg13[%c120, %c0_180] : memref<162x128xf32, #tpu.memory_space<vmem>>, vector<6x128xf32>
    tpu.vector_store %arg13[%c120, %c0_180], %288 {strides = array<i32>} : memref<162x128xf32, #tpu.memory_space<vmem>>, vector<6x128xf32>,
    %c113_i32 = arith.constant 113 : i32
    %290 = tpu.dynamic_rotate %165 by %c113_i32 dim 1 : vector<6x128xf32>, i32 -> vector<6x128xf32>
    %c21_181 = arith.constant 21 : index
    %c0_182 = arith.constant 0 : index
    %291 = vector.load %arg8[%c21_181, %c0_182] : memref<27x128xf32, #tpu.memory_space<vmem>>, vector<1x128xf32>
    %292 = vector.broadcast %291 : vector<1x128xf32> to vector<6x128xf32>
    %293 = arith.mulf %290, %292 : vector<6x128xf32>
    %c126 = arith.constant 126 : index
    %c0_183 = arith.constant 0 : index
    %294 = vector.load %arg13[%c126, %c0_183] : memref<162x128xf32, #tpu.memory_space<vmem>>, vector<6x128xf32>
    tpu.vector_store %arg13[%c126, %c0_183], %293 {strides = array<i32>} : memref<162x128xf32, #tpu.memory_space<vmem>>, vector<6x128xf32>,
    %c112_i32 = arith.constant 112 : i32
    %295 = tpu.dynamic_rotate %165 by %c112_i32 dim 1 : vector<6x128xf32>, i32 -> vector<6x128xf32>
    %c22_184 = arith.constant 22 : index
    %c0_185 = arith.constant 0 : index
    %296 = vector.load %arg8[%c22_184, %c0_185] : memref<27x128xf32, #tpu.memory_space<vmem>>, vector<1x128xf32>
    %297 = vector.broadcast %296 : vector<1x128xf32> to vector<6x128xf32>
    %298 = arith.mulf %295, %297 : vector<6x128xf32>
    %c132 = arith.constant 132 : index
    %c0_186 = arith.constant 0 : index
    %299 = vector.load %arg13[%c132, %c0_186] : memref<162x128xf32, #tpu.memory_space<vmem>>, vector<6x128xf32>
    tpu.vector_store %arg13[%c132, %c0_186], %298 {strides = array<i32>} : memref<162x128xf32, #tpu.memory_space<vmem>>, vector<6x128xf32>,
    %c111_i32 = arith.constant 111 : i32
    %300 = tpu.dynamic_rotate %165 by %c111_i32 dim 1 : vector<6x128xf32>, i32 -> vector<6x128xf32>
    %c23_187 = arith.constant 23 : index
    %c0_188 = arith.constant 0 : index
    %301 = vector.load %arg8[%c23_187, %c0_188] : memref<27x128xf32, #tpu.memory_space<vmem>>, vector<1x128xf32>
    %302 = vector.broadcast %301 : vector<1x128xf32> to vector<6x128xf32>
    %303 = arith.mulf %300, %302 : vector<6x128xf32>
    %c138 = arith.constant 138 : index
    %c0_189 = arith.constant 0 : index
    %304 = vector.load %arg13[%c138, %c0_189] : memref<162x128xf32, #tpu.memory_space<vmem>>, vector<6x128xf32>
    tpu.vector_store %arg13[%c138, %c0_189], %303 {strides = array<i32>} : memref<162x128xf32, #tpu.memory_space<vmem>>, vector<6x128xf32>,
    %c109_i32 = arith.constant 109 : i32
    %305 = tpu.dynamic_rotate %165 by %c109_i32 dim 1 : vector<6x128xf32>, i32 -> vector<6x128xf32>
    %c24_190 = arith.constant 24 : index
    %c0_191 = arith.constant 0 : index
    %306 = vector.load %arg8[%c24_190, %c0_191] : memref<27x128xf32, #tpu.memory_space<vmem>>, vector<1x128xf32>
    %307 = vector.broadcast %306 : vector<1x128xf32> to vector<6x128xf32>
    %308 = arith.mulf %305, %307 : vector<6x128xf32>
    %c144 = arith.constant 144 : index
    %c0_192 = arith.constant 0 : index
    %309 = vector.load %arg13[%c144, %c0_192] : memref<162x128xf32, #tpu.memory_space<vmem>>, vector<6x128xf32>
    tpu.vector_store %arg13[%c144, %c0_192], %308 {strides = array<i32>} : memref<162x128xf32, #tpu.memory_space<vmem>>, vector<6x128xf32>,
    %c108_i32 = arith.constant 108 : i32
    %310 = tpu.dynamic_rotate %165 by %c108_i32 dim 1 : vector<6x128xf32>, i32 -> vector<6x128xf32>
    %c25_193 = arith.constant 25 : index
    %c0_194 = arith.constant 0 : index
    %311 = vector.load %arg8[%c25_193, %c0_194] : memref<27x128xf32, #tpu.memory_space<vmem>>, vector<1x128xf32>
    %312 = vector.broadcast %311 : vector<1x128xf32> to vector<6x128xf32>
    %313 = arith.mulf %310, %312 : vector<6x128xf32>
    %c150 = arith.constant 150 : index
    %c0_195 = arith.constant 0 : index
    %314 = vector.load %arg13[%c150, %c0_195] : memref<162x128xf32, #tpu.memory_space<vmem>>, vector<6x128xf32>
    tpu.vector_store %arg13[%c150, %c0_195], %313 {strides = array<i32>} : memref<162x128xf32, #tpu.memory_space<vmem>>, vector<6x128xf32>,
    %c107_i32 = arith.constant 107 : i32
    %315 = tpu.dynamic_rotate %165 by %c107_i32 dim 1 : vector<6x128xf32>, i32 -> vector<6x128xf32>
    %c26_196 = arith.constant 26 : index
    %c0_197 = arith.constant 0 : index
    %316 = vector.load %arg8[%c26_196, %c0_197] : memref<27x128xf32, #tpu.memory_space<vmem>>, vector<1x128xf32>
    %317 = vector.broadcast %316 : vector<1x128xf32> to vector<6x128xf32>
    %318 = arith.mulf %315, %317 : vector<6x128xf32>
    %c156 = arith.constant 156 : index
    %c0_198 = arith.constant 0 : index
    %319 = vector.load %arg13[%c156, %c0_198] : memref<162x128xf32, #tpu.memory_space<vmem>>, vector<6x128xf32>
    tpu.vector_store %arg13[%c156, %c0_198], %318 {strides = array<i32>} : memref<162x128xf32, #tpu.memory_space<vmem>>, vector<6x128xf32>,
    %c0_199 = arith.constant 0 : index
    %c0_200 = arith.constant 0 : index
    %320 = vector.load %arg6[%c0_199, %c0_200] : memref<16x162xf32, #tpu.memory_space<vmem>>, vector<16x162xf32>
    %c0_201 = arith.constant 0 : index
    %c0_202 = arith.constant 0 : index
    %321 = vector.load %arg13[%c0_201, %c0_202] : memref<162x128xf32, #tpu.memory_space<vmem>>, vector<162x128xf32>
    %cst_203 = arith.constant dense<0.000000e+00> : vector<16x128xf32>
    %322 = tpu.matmul %320, %321, %cst_203 {dimension_numbers = #tpu.dot_dimension_numbers<[1], [0], [0], [1], [0, 0, 1, 1], [], []>} : vector<16x162xf32>, vector<162x128xf32>, vector<16x128xf32> -> vector<16x128xf32>
    %c0_204 = arith.constant 0 : index
    %c0_205 = arith.constant 0 : index
    %323 = vector.load %arg7[%c0_204, %c0_205] : memref<16x1xf32, #tpu.memory_space<vmem>>, vector<16x1xf32>
    %324 = vector.broadcast %323 : vector<16x1xf32> to vector<16x128xf32>
    %325 = arith.addf %322, %324 : vector<16x128xf32>
    %c64_i32_206 = arith.constant 64 : i32
    %326 = tpu.dynamic_rotate %325 by %c64_i32_206 dim 1 : vector<16x128xf32>, i32 -> vector<16x128xf32>
    %327 = arith.subf %325, %326 : vector<16x128xf32>
    %328 = arith.mulf %327, %327 : vector<16x128xf32>
    %329 = vector.shape_cast %328 : vector<16x128xf32> to vector<1x16x128xf32>
    %cst_207 = arith.constant dense<0.000000e+00> : vector<1xf32>
    %330 = vector.multi_reduction <add>, %329, %cst_207 [1, 2] : vector<1x16x128xf32> to vector<1xf32>
    %331 = vector.shape_cast %330 : vector<1xf32> to vector<1x1x1xf32>
    %332 = vector.extract %331[0, 0, 0] : f32 from vector<1x1x1xf32>
    %333 = vector.broadcast %332 : f32 to vector<1x1xf32>
    %334 = math.absf %327 : vector<16x128xf32>
    %335 = vector.shape_cast %334 : vector<16x128xf32> to vector<1x16x128xf32>
    %cst_208 = arith.constant dense<0.000000e+00> : vector<1xf32>
    %336 = vector.multi_reduction <add>, %335, %cst_208 [1, 2] : vector<1x16x128xf32> to vector<1xf32>
    %337 = vector.shape_cast %336 : vector<1xf32> to vector<1x1x1xf32>
    %338 = vector.extract %337[0, 0, 0] : f32 from vector<1x1x1xf32>
    %339 = vector.broadcast %338 : f32 to vector<1x1xf32>
    %cst_209 = arith.constant 1.000000e-01 : f32
    %340 = vector.broadcast %cst_209 : f32 to vector<1x1xf32>
    %341 = arith.mulf %340, %339 : vector<1x1xf32>
    %342 = arith.addf %333, %341 : vector<1x1xf32>
    %cst_210 = arith.constant 2.44140625E-4 : f32
    %343 = vector.broadcast %cst_210 : f32 to vector<1x1xf32>
    %344 = arith.mulf %343, %342 : vector<1x1xf32>
    %345 = arith.addf %185, %344 : vector<1x1xf32>
    %cst_211 = arith.constant 0.000000e+00 : f32
    %346 = vector.broadcast %cst_211 : f32 to vector<16x128xf32>
    %347 = arith.maximumf %325, %346 : vector<16x128xf32>
    %c64_i32_212 = arith.constant 64 : i32
    %348 = tpu.dynamic_rotate %347 by %c64_i32_212 dim 1 : vector<16x128xf32>, i32 -> vector<16x128xf32>
    %349 = arith.subf %347, %348 : vector<16x128xf32>
    %350 = arith.mulf %349, %349 : vector<16x128xf32>
    %351 = vector.shape_cast %350 : vector<16x128xf32> to vector<1x16x128xf32>
    %cst_213 = arith.constant dense<0.000000e+00> : vector<1xf32>
    %352 = vector.multi_reduction <add>, %351, %cst_213 [1, 2] : vector<1x16x128xf32> to vector<1xf32>
    %353 = vector.shape_cast %352 : vector<1xf32> to vector<1x1x1xf32>
    %354 = vector.extract %353[0, 0, 0] : f32 from vector<1x1x1xf32>
    %355 = vector.broadcast %354 : f32 to vector<1x1xf32>
    %356 = math.absf %349 : vector<16x128xf32>
    %357 = vector.shape_cast %356 : vector<16x128xf32> to vector<1x16x128xf32>
    %cst_214 = arith.constant dense<0.000000e+00> : vector<1xf32>
    %358 = vector.multi_reduction <add>, %357, %cst_214 [1, 2] : vector<1x16x128xf32> to vector<1xf32>
    %359 = vector.shape_cast %358 : vector<1xf32> to vector<1x1x1xf32>
    %360 = vector.extract %359[0, 0, 0] : f32 from vector<1x1x1xf32>
    %361 = vector.broadcast %360 : f32 to vector<1x1xf32>
    %cst_215 = arith.constant 1.000000e-01 : f32
    %362 = vector.broadcast %cst_215 : f32 to vector<1x1xf32>
    %363 = arith.mulf %362, %361 : vector<1x1xf32>
    %364 = arith.addf %355, %363 : vector<1x1xf32>
    %cst_216 = arith.constant 2.44140625E-4 : f32
    %365 = vector.broadcast %cst_216 : f32 to vector<1x1xf32>
    %366 = arith.mulf %365, %364 : vector<1x1xf32>
    %367 = arith.addf %345, %366 : vector<1x1xf32>
    %c127_i32_217 = arith.constant 127 : i32
    %368 = tpu.dynamic_rotate %347 by %c127_i32_217 dim 1 : vector<16x128xf32>, i32 -> vector<16x128xf32>
    %369 = arith.maximumf %347, %368 : vector<16x128xf32>
    %c124_i32_218 = arith.constant 124 : i32
    %370 = tpu.dynamic_rotate %369 by %c124_i32_218 dim 1 : vector<16x128xf32>, i32 -> vector<16x128xf32>
    %371 = arith.maximumf %369, %370 : vector<16x128xf32>
    %c112_i32_219 = arith.constant 112 : i32
    %372 = tpu.dynamic_rotate %371 by %c112_i32_219 dim 1 : vector<16x128xf32>, i32 -> vector<16x128xf32>
    %373 = arith.maximumf %371, %372 : vector<16x128xf32>
    %c0_220 = arith.constant 0 : index
    %c0_221 = arith.constant 0 : index
    %374 = vector.load %arg9[%c0_220, %c0_221] : memref<128x16xf32, #tpu.memory_space<vmem>>, vector<128x16xf32>
    %cst_222 = arith.constant dense<0.000000e+00> : vector<16x16xf32>
    %375 = tpu.matmul %373, %374, %cst_222 {dimension_numbers = #tpu.dot_dimension_numbers<[1], [0], [0], [1], [0, 0, 1, 1], [], []>} : vector<16x128xf32>, vector<128x16xf32>, vector<16x16xf32> -> vector<16x16xf32>
    %c0_223 = arith.constant 0 : index
    %c0_224 = arith.constant 0 : index
    %376 = vector.load %arg10[%c0_223, %c0_224] : memref<16x8xf32, #tpu.memory_space<vmem>>, vector<16x8xf32>
    %cst_225 = arith.constant dense<0.000000e+00> : vector<16x8xf32>
    %377 = tpu.matmul %375, %376, %cst_225 {dimension_numbers = #tpu.dot_dimension_numbers<[1], [0], [0], [1], [0, 0, 1, 1], [], []>} : vector<16x16xf32>, vector<16x8xf32>, vector<16x8xf32> -> vector<16x8xf32>
    %378 = arith.mulf %377, %377 : vector<16x8xf32>
    %379 = vector.shape_cast %378 : vector<16x8xf32> to vector<1x16x8xf32>
    %cst_226 = arith.constant dense<0.000000e+00> : vector<1xf32>
    %380 = vector.multi_reduction <add>, %379, %cst_226 [1, 2] : vector<1x16x8xf32> to vector<1xf32>
    %381 = vector.shape_cast %380 : vector<1xf32> to vector<1x1x1xf32>
    %382 = vector.extract %381[0, 0, 0] : f32 from vector<1x1x1xf32>
    %383 = vector.broadcast %382 : f32 to vector<1x1xf32>
    %384 = math.absf %377 : vector<16x8xf32>
    %385 = vector.shape_cast %384 : vector<16x8xf32> to vector<1x16x8xf32>
    %cst_227 = arith.constant dense<0.000000e+00> : vector<1xf32>
    %386 = vector.multi_reduction <add>, %385, %cst_227 [1, 2] : vector<1x16x8xf32> to vector<1xf32>
    %387 = vector.shape_cast %386 : vector<1xf32> to vector<1x1x1xf32>
    %388 = vector.extract %387[0, 0, 0] : f32 from vector<1x1x1xf32>
    %389 = vector.broadcast %388 : f32 to vector<1x1xf32>
    %cst_228 = arith.constant 1.000000e-01 : f32
    %390 = vector.broadcast %cst_228 : f32 to vector<1x1xf32>
    %391 = arith.mulf %390, %389 : vector<1x1xf32>
    %392 = arith.addf %383, %391 : vector<1x1xf32>
    %cst_229 = arith.constant 3.906250e-03 : f32
    %393 = vector.broadcast %cst_229 : f32 to vector<1x1xf32>
    %394 = arith.mulf %393, %392 : vector<1x1xf32>
    %395 = arith.addf %367, %394 : vector<1x1xf32>
    %396 = vector.shape_cast %395 : vector<1x1xf32> to vector<1x1xf32>
    %397 = vector.broadcast %396 : vector<1x1xf32> to vector<1x128xf32>
    %c0_230 = arith.constant 0 : index
    %c0_231 = arith.constant 0 : index
    %c0_232 = arith.constant 0 : index
    %398 = vector.load %arg11[%c0_230, %c0_231, %c0_232] : memref<1x1x128xf32, #tpu.memory_space<vmem>>, vector<1x1x128xf32>
    %399 = vector.shape_cast %398 : vector<1x1x128xf32> to vector<1x128xf32>
    %400 = vector.shape_cast %397 : vector<1x128xf32> to vector<1x1x128xf32>
    tpu.vector_store %arg11[%c0_230, %c0_231, %c0_232], %400 {strides = array<i32>} : memref<1x1x128xf32, #tpu.memory_space<vmem>>, vector<1x1x128xf32>,
    return
  }
  func.func @transform_0(%arg0: i32) -> (i32, i32, i32) {
    %c0_i32 = arith.constant 0 : i32
    %c0_i32_0 = arith.constant 0 : i32
    %c0_i32_1 = arith.constant 0 : i32
    return %arg0, %c0_i32, %c0_i32_0 : i32, i32, i32
  }
  func.func @transform_1(%arg0: i32) -> (i32, i32) {
    %c0_i32 = arith.constant 0 : i32
    %c0_i32_0 = arith.constant 0 : i32
    %c0_i32_1 = arith.constant 0 : i32
    return %c0_i32, %c0_i32_0 : i32, i32
  }
  func.func @transform_2(%arg0: i32) -> (i32, i32) {
    %c0_i32 = arith.constant 0 : i32
    %c0_i32_0 = arith.constant 0 : i32
    %c0_i32_1 = arith.constant 0 : i32
    return %c0_i32, %c0_i32_0 : i32, i32
  }
  func.func @transform_3(%arg0: i32) -> (i32, i32) {
    %c0_i32 = arith.constant 0 : i32
    %c0_i32_0 = arith.constant 0 : i32
    %c0_i32_1 = arith.constant 0 : i32
    return %c0_i32, %c0_i32_0 : i32, i32
  }
  func.func @transform_4(%arg0: i32) -> (i32, i32) {
    %c0_i32 = arith.constant 0 : i32
    %c0_i32_0 = arith.constant 0 : i32
    %c0_i32_1 = arith.constant 0 : i32
    return %c0_i32, %c0_i32_0 : i32, i32
  }
  func.func @transform_5(%arg0: i32) -> (i32, i32) {
    %c0_i32 = arith.constant 0 : i32
    %c0_i32_0 = arith.constant 0 : i32
    %c0_i32_1 = arith.constant 0 : i32
    return %c0_i32, %c0_i32_0 : i32, i32
  }
  func.func @transform_6(%arg0: i32) -> (i32, i32) {
    %c0_i32 = arith.constant 0 : i32
    %c0_i32_0 = arith.constant 0 : i32
    %c0_i32_1 = arith.constant 0 : i32
    return %c0_i32, %c0_i32_0 : i32, i32
  }
  func.func @transform_7(%arg0: i32) -> (i32, i32) {
    %c0_i32 = arith.constant 0 : i32
    %c0_i32_0 = arith.constant 0 : i32
    %c0_i32_1 = arith.constant 0 : i32
    return %c0_i32, %c0_i32_0 : i32, i32
  }
  func.func @transform_8(%arg0: i32) -> (i32, i32) {
    %c0_i32 = arith.constant 0 : i32
    %c0_i32_0 = arith.constant 0 : i32
    %c0_i32_1 = arith.constant 0 : i32
    return %c0_i32, %c0_i32_0 : i32, i32
  }
  func.func @transform_9(%arg0: i32) -> (i32, i32) {
    %c0_i32 = arith.constant 0 : i32
    %c0_i32_0 = arith.constant 0 : i32
    %c0_i32_1 = arith.constant 0 : i32
    return %c0_i32, %c0_i32_0 : i32, i32
  }
  func.func @transform_10(%arg0: i32) -> (i32, i32, i32) {
    %c0_i32 = arith.constant 0 : i32
    %c0_i32_0 = arith.constant 0 : i32
    %c0_i32_1 = arith.constant 0 : i32
    return %arg0, %c0_i32, %c0_i32_0 : i32, i32, i32
  }
}

</mosaic_0001>

<llo_original>
// kernel: perceptual_loss.1
$region0: #{perceptual_loss.1}
  #allocation0 [shape = 'u32[]', space=smem, size = 0x4, offset = 0x4, fixed_abs, tag = 'smem constant byte address 0x4 - core index']
  #allocation1 [shape = 'u32[144,128]{1,0:T(1,128)}', space=vmem, size = 0x12000, scoped, tag = 'internal scratch']
  #allocation2 [shape = 'f32[27,1024]{1,0:T(8,128)}', space=vmem, size = 0x20000, scoped, tag = 'scratch operand']
  #allocation3 [shape = 'f32[162,128]{1,0:T(8,128)}', space=vmem, size = 0x15000, scoped, tag = 'scratch operand']
  %s0 = inlined_call_operand.vmem [shape: f32[2,1,1024], index: 0, kind: input, shape index: {}]
  %s1 = inlined_call_operand.vmem [shape: f32[6,27], index: 1, kind: input, shape index: {}]
  %s2 = inlined_call_operand.vmem [shape: f32[6,1], index: 2, kind: input, shape index: {}]
  %s3 = inlined_call_operand.vmem [shape: f32[27,1024], index: 3, kind: input, shape index: {}]
  %s4 = inlined_call_operand.vmem [shape: f32[1024,128], index: 4, kind: input, shape index: {}]
  %s5 = inlined_call_operand.vmem [shape: f32[16,162], index: 5, kind: input, shape index: {}]
  %s6 = inlined_call_operand.vmem [shape: f32[16,1], index: 6, kind: input, shape index: {}]
  %s7 = inlined_call_operand.vmem [shape: f32[27,128], index: 7, kind: input, shape index: {}]
  %s8 = inlined_call_operand.vmem [shape: f32[128,16], index: 8, kind: input, shape index: {}]
  %s9 = inlined_call_operand.vmem [shape: f32[16,8], index: 9, kind: input, shape index: {}]
  %s10 = inlined_call_operand.vmem [shape: f32[2,1,128], index: 10, kind: output, shape index: {}]
  %s11 = sld [smem:[#allocation0]]
  $region73: #{perceptual_loss.1} parent=0
    _
  %s13 = ssub.s32 1, %s11
  %s14 = scalar_select 0, %s13, %s11
  loop: start=0, step=1, limit=4
  $region2: #{perceptual_loss.1} parent=0 // loop_pre_header
    _
  $region3: #{perceptual_loss.1} parent=0 // loop_header
    %s16 = sphi 0, %s20
    %p17 = scmp.ge.s32.totalorder %s16, 4
    %s26 = sphi 0, %s28
    %s29 = sphi 0, %s26
    %s30 = sphi 0, %s29
    %s46 = sphi 0, %s30
    %s50 = sphi 0, %s50
    %s52 = sphi 0, %s50
    %s53 = sphi 0, %s52
    %s67 = sphi 0, %s53
    %s71 = sphi 0, %s71
    %s73 = sphi 0, %s71
    %s74 = sphi 0, %s73
    %s88 = sphi 0, %s74
    %s92 = sphi 0, %s92
    %s94 = sphi 0, %s92
    %s95 = sphi 0, %s94
    %s109 = sphi 0, %s95
    %s113 = sphi 0, %s113
    %s115 = sphi 0, %s113
    %s116 = sphi 0, %s115
    %s130 = sphi 0, %s116
    %s134 = sphi 0, %s134
    %s136 = sphi 0, %s134
    %s137 = sphi 0, %s136
    %s151 = sphi 0, %s137
    %s155 = sphi 0, %s155
    %s157 = sphi 0, %s155
    %s158 = sphi 0, %s157
    %s172 = sphi 0, %s158
    %s176 = sphi 0, %s176
    %s178 = sphi 0, %s176
    %s179 = sphi 0, %s178
    %s193 = sphi 0, %s179
    %s197 = sphi 0, %s197
    %s199 = sphi 0, %s197
    %s200 = sphi 0, %s199
    %s214 = sphi 0, %s200
    %s218 = sphi 0, %s218
    %s220 = sphi 0, %s218
    %s221 = sphi 0, %s220
    %s235 = sphi 0, %s221
    %s241 = sphi 0, %s243
    %s244 = sphi 0, %s241
    %s245 = sphi 0, %s244
    %s261 = sphi 0, %s245
  $region4: #{perceptual_loss.1} parent=0 // loop_header_branch
    %19 = sbr.rel (%p17) target = $region8
  $region5: #{perceptual_loss.1} parent=0 // loop_body
    %s21 = ssub.s32 %s16, 1
    %s22 = ssub.s32 %s16, 2
    %s23 = sadd.s32 %s16, 1
    %s24 = ssub.s32 %s16, %s23
    %p25 = scmp.eq.s32.totalorder %s24, 0
    %s27 = sadd.s32 %s26, 1
    %s28 = scalar_select %p25, %s26, %s27
    %p31 = pneg %p25
    %p32 = scmp.eq.s32.totalorder %s16, 1
    %p33 = por %p31, %p32
    %p34 = scmp.ne.s32.totalorder %s26, %s29
    %p35 = scmp.eq.s32.totalorder %s16, 0
    %p36 = por %p34, %p35
    %p37 = scmp.ne.s32.totalorder %s26, %s29
    %p38 = scmp.eq.s32.totalorder %s21, 1
    %p39 = por %p37, %p38
    %p40 = scmp.ne.s32.totalorder %s29, %s30
    %p41 = scmp.eq.s32.totalorder %s21, 0
    %p42 = por %p40, %p41
    %p43 = scmp.ne.s32.totalorder %s29, %s30
    %p44 = scmp.eq.s32.totalorder %s22, 1
    %p45 = por %p43, %p44
    %p47 = scmp.ne.s32.totalorder %s30, %s46
    %p48 = scmp.eq.s32.totalorder %s22, 0
    %p49 = por %p47, %p48
    %s51 = sadd.s32 %s50, 1
    %p54 = scmp.eq.s32.totalorder %s16, 1
    %p55 = scmp.ne.s32.totalorder %s50, %s52
    %p56 = scmp.eq.s32.totalorder %s16, 0
    %p57 = por %p55, %p56
    %p58 = scmp.ne.s32.totalorder %s50, %s52
    %p59 = scmp.eq.s32.totalorder %s21, 1
    %p60 = por %p58, %p59
    %p61 = scmp.ne.s32.totalorder %s52, %s53
    %p62 = scmp.eq.s32.totalorder %s21, 0
    %p63 = por %p61, %p62
    %p64 = scmp.ne.s32.totalorder %s52, %s53
    %p65 = scmp.eq.s32.totalorder %s22, 1
    %p66 = por %p64, %p65
    %p68 = scmp.ne.s32.totalorder %s53, %s67
    %p69 = scmp.eq.s32.totalorder %s22, 0
    %p70 = por %p68, %p69
    %s72 = sadd.s32 %s71, 1
    %p75 = scmp.eq.s32.totalorder %s16, 1
    %p76 = scmp.ne.s32.totalorder %s71, %s73
    %p77 = scmp.eq.s32.totalorder %s16, 0
    %p78 = por %p76, %p77
    %p79 = scmp.ne.s32.totalorder %s71, %s73
    %p80 = scmp.eq.s32.totalorder %s21, 1
    %p81 = por %p79, %p80
    %p82 = scmp.ne.s32.totalorder %s73, %s74
    %p83 = scmp.eq.s32.totalorder %s21, 0
    %p84 = por %p82, %p83
    %p85 = scmp.ne.s32.totalorder %s73, %s74
    %p86 = scmp.eq.s32.totalorder %s22, 1
    %p87 = por %p85, %p86
    %p89 = scmp.ne.s32.totalorder %s74, %s88
    %p90 = scmp.eq.s32.totalorder %s22, 0
    %p91 = por %p89, %p90
    %s93 = sadd.s32 %s92, 1
    %p96 = scmp.eq.s32.totalorder %s16, 1
    %p97 = scmp.ne.s32.totalorder %s92, %s94
    %p98 = scmp.eq.s32.totalorder %s16, 0
    %p99 = por %p97, %p98
    %p100 = scmp.ne.s32.totalorder %s92, %s94
    %p101 = scmp.eq.s32.totalorder %s21, 1
    %p102 = por %p100, %p101
    %p103 = scmp.ne.s32.totalorder %s94, %s95
    %p104 = scmp.eq.s32.totalorder %s21, 0
    %p105 = por %p103, %p104
    %p106 = scmp.ne.s32.totalorder %s94, %s95
    %p107 = scmp.eq.s32.totalorder %s22, 1
    %p108 = por %p106, %p107
    %p110 = scmp.ne.s32.totalorder %s95, %s109
    %p111 = scmp.eq.s32.totalorder %s22, 0
    %p112 = por %p110, %p111
    %s114 = sadd.s32 %s113, 1
    %p117 = scmp.eq.s32.totalorder %s16, 1
    %p118 = scmp.ne.s32.totalorder %s113, %s115
    %p119 = scmp.eq.s32.totalorder %s16, 0
    %p120 = por %p118, %p119
    %p121 = scmp.ne.s32.totalorder %s113, %s115
    %p122 = scmp.eq.s32.totalorder %s21, 1
    %p123 = por %p121, %p122
    %p124 = scmp.ne.s32.totalorder %s115, %s116
    %p125 = scmp.eq.s32.totalorder %s21, 0
    %p126 = por %p124, %p125
    %p127 = scmp.ne.s32.totalorder %s115, %s116
    %p128 = scmp.eq.s32.totalorder %s22, 1
    %p129 = por %p127, %p128
    %p131 = scmp.ne.s32.totalorder %s116, %s130
    %p132 = scmp.eq.s32.totalorder %s22, 0
    %p133 = por %p131, %p132
    %s135 = sadd.s32 %s134, 1
    %p138 = scmp.eq.s32.totalorder %s16, 1
    %p139 = scmp.ne.s32.totalorder %s134, %s136
    %p140 = scmp.eq.s32.totalorder %s16, 0
    %p141 = por %p139, %p140
    %p142 = scmp.ne.s32.totalorder %s134, %s136
    %p143 = scmp.eq.s32.totalorder %s21, 1
    %p144 = por %p142, %p143
    %p145 = scmp.ne.s32.totalorder %s136, %s137
    %p146 = scmp.eq.s32.totalorder %s21, 0
    %p147 = por %p145, %p146
    %p148 = scmp.ne.s32.totalorder %s136, %s137
    %p149 = scmp.eq.s32.totalorder %s22, 1
    %p150 = por %p148, %p149
    %p152 = scmp.ne.s32.totalorder %s137, %s151
    %p153 = scmp.eq.s32.totalorder %s22, 0
    %p154 = por %p152, %p153
    %s156 = sadd.s32 %s155, 1
    %p159 = scmp.eq.s32.totalorder %s16, 1
    %p160 = scmp.ne.s32.totalorder %s155, %s157
    %p161 = scmp.eq.s32.totalorder %s16, 0
    %p162 = por %p160, %p161
    %p163 = scmp.ne.s32.totalorder %s155, %s157
    %p164 = scmp.eq.s32.totalorder %s21, 1
    %p165 = por %p163, %p164
    %p166 = scmp.ne.s32.totalorder %s157, %s158
    %p167 = scmp.eq.s32.totalorder %s21, 0
    %p168 = por %p166, %p167
    %p169 = scmp.ne.s32.totalorder %s157, %s158
    %p170 = scmp.eq.s32.totalorder %s22, 1
    %p171 = por %p169, %p170
    %p173 = scmp.ne.s32.totalorder %s158, %s172
    %p174 = scmp.eq.s32.totalorder %s22, 0
    %p175 = por %p173, %p174
    %s177 = sadd.s32 %s176, 1
    %p180 = scmp.eq.s32.totalorder %s16, 1
    %p181 = scmp.ne.s32.totalorder %s176, %s178
    %p182 = scmp.eq.s32.totalorder %s16, 0
    %p183 = por %p181, %p182
    %p184 = scmp.ne.s32.totalorder %s176, %s178
    %p185 = scmp.eq.s32.totalorder %s21, 1
    %p186 = por %p184, %p185
    %p187 = scmp.ne.s32.totalorder %s178, %s179
    %p188 = scmp.eq.s32.totalorder %s21, 0
    %p189 = por %p187, %p188
    %p190 = scmp.ne.s32.totalorder %s178, %s179
    %p191 = scmp.eq.s32.totalorder %s22, 1
    %p192 = por %p190, %p191
    %p194 = scmp.ne.s32.totalorder %s179, %s193
    %p195 = scmp.eq.s32.totalorder %s22, 0
    %p196 = por %p194, %p195
    %s198 = sadd.s32 %s197, 1
    %p201 = scmp.eq.s32.totalorder %s16, 1
    %p202 = scmp.ne.s32.totalorder %s197, %s199
    %p203 = scmp.eq.s32.totalorder %s16, 0
    %p204 = por %p202, %p203
    %p205 = scmp.ne.s32.totalorder %s197, %s199
    %p206 = scmp.eq.s32.totalorder %s21, 1
    %p207 = por %p205, %p206
    %p208 = scmp.ne.s32.totalorder %s199, %s200
    %p209 = scmp.eq.s32.totalorder %s21, 0
    %p210 = por %p208, %p209
    %p211 = scmp.ne.s32.totalorder %s199, %s200
    %p212 = scmp.eq.s32.totalorder %s22, 1
    %p213 = por %p211, %p212
    %p215 = scmp.ne.s32.totalorder %s200, %s214
    %p216 = scmp.eq.s32.totalorder %s22, 0
    %p217 = por %p215, %p216
    %s219 = sadd.s32 %s218, 1
    %p222 = scmp.eq.s32.totalorder %s16, 1
    %p223 = scmp.ne.s32.totalorder %s218, %s220
    %p224 = scmp.eq.s32.totalorder %s16, 0
    %p225 = por %p223, %p224
    %p226 = scmp.ne.s32.totalorder %s218, %s220
    %p227 = scmp.eq.s32.totalorder %s21, 1
    %p228 = por %p226, %p227
    %p229 = scmp.ne.s32.totalorder %s220, %s221
    %p230 = scmp.eq.s32.totalorder %s21, 0
    %p231 = por %p229, %p230
    %p232 = scmp.ne.s32.totalorder %s220, %s221
    %p233 = scmp.eq.s32.totalorder %s22, 1
    %p234 = por %p232, %p233
    %p236 = scmp.ne.s32.totalorder %s221, %s235
    %p237 = scmp.eq.s32.totalorder %s22, 0
    %p238 = por %p236, %p237
    %s239 = ssub.s32 %s16, %s23
    %p240 = scmp.eq.s32.totalorder %s239, 0
    %s242 = sadd.s32 %s241, 1
    %s243 = scalar_select %p240, %s241, %s242
    %p246 = pneg %p240
    %p247 = scmp.eq.s32.totalorder %s16, 1
    %p248 = por %p246, %p247
    %p249 = scmp.ne.s32.totalorder %s241, %s244
    %p250 = scmp.eq.s32.totalorder %s16, 0
    %p251 = por %p249, %p250
    %p252 = scmp.ne.s32.totalorder %s241, %s244
    %p253 = scmp.eq.s32.totalorder %s21, 1
    %p254 = por %p252, %p253
    %p255 = scmp.ne.s32.totalorder %s244, %s245
    %p256 = scmp.eq.s32.totalorder %s21, 0
    %p257 = por %p255, %p256
    %p258 = scmp.ne.s32.totalorder %s244, %s245
    %p259 = scmp.eq.s32.totalorder %s22, 1
    %p260 = por %p258, %p259
    %p262 = scmp.ne.s32.totalorder %s245, %s261
    %p263 = scmp.eq.s32.totalorder %s22, 0
    %p264 = por %p262, %p263
    %p265 = scmp.le.s32.totalorder 1, %s16
    %p266 = scmp.lt.s32.totalorder %s16, 3
    %p267 = pnand %p265, %p266
    %p268 = pneg %p267
    // Predicated region
    $region9: #{perceptual_loss.1} parent=5 // pred_check
      _
    $region10: #{perceptual_loss.1} parent=5 // pred_check_branch
      %270 = sbr.rel (%p267) target = $region12
    $region11: #{perceptual_loss.1} parent=5 // pred_region
      %s271 = ssub.s32 %s16, 1
      // Predicated region
      $region13: #{perceptual_loss.1} parent=11 // pred_check
        %p272 = pneg %p63
      $region14: #{perceptual_loss.1} parent=11 // pred_check_branch
        %274 = sbr.rel (%p272) target = $region16
      $region15: #{perceptual_loss.1} parent=11 // pred_region
        _
      $region16: #{perceptual_loss.1} parent=11 // pred_fallthru
        _
      // Predicated region
      $region17: #{perceptual_loss.1} parent=11 // pred_check
        %p275 = pneg %p84
      $region18: #{perceptual_loss.1} parent=11 // pred_check_branch
        %277 = sbr.rel (%p275) target = $region20
      $region19: #{perceptual_loss.1} parent=11 // pred_region
        _
      $region20: #{perceptual_loss.1} parent=11 // pred_fallthru
        _
      // Predicated region
      $region21: #{perceptual_loss.1} parent=11 // pred_check
        %p278 = pneg %p105
      $region22: #{perceptual_loss.1} parent=11 // pred_check_branch
        %280 = sbr.rel (%p278) target = $region24
      $region23: #{perceptual_loss.1} parent=11 // pred_region
        _
      $region24: #{perceptual_loss.1} parent=11 // pred_fallthru
        _
      // Predicated region
      $region25: #{perceptual_loss.1} parent=11 // pred_check
        %p281 = pneg %p126
      $region26: #{perceptual_loss.1} parent=11 // pred_check_branch
        %283 = sbr.rel (%p281) target = $region28
      $region27: #{perceptual_loss.1} parent=11 // pred_region
        _
      $region28: #{perceptual_loss.1} parent=11 // pred_fallthru
        _
      // Predicated region
      $region29: #{perceptual_loss.1} parent=11 // pred_check
        %p284 = pneg %p147
      $region30: #{perceptual_loss.1} parent=11 // pred_check_branch
        %286 = sbr.rel (%p284) target = $region32
      $region31: #{perceptual_loss.1} parent=11 // pred_region
        _
      $region32: #{perceptual_loss.1} parent=11 // pred_fallthru
        _
      // Predicated region
      $region33: #{perceptual_loss.1} parent=11 // pred_check
        %p287 = pneg %p168
      $region34: #{perceptual_loss.1} parent=11 // pred_check_branch
        %289 = sbr.rel (%p287) target = $region36
      $region35: #{perceptual_loss.1} parent=11 // pred_region
        _
      $region36: #{perceptual_loss.1} parent=11 // pred_fallthru
        _
      // Predicated region
      $region37: #{perceptual_loss.1} parent=11 // pred_check
        %p290 = pneg %p189
      $region38: #{perceptual_loss.1} parent=11 // pred_check_branch
        %292 = sbr.rel (%p290) target = $region40
      $region39: #{perceptual_loss.1} parent=11 // pred_region
        _
      $region40: #{perceptual_loss.1} parent=11 // pred_fallthru
        _
      // Predicated region
      $region41: #{perceptual_loss.1} parent=11 // pred_check
        %p293 = pneg %p210
      $region42: #{perceptual_loss.1} parent=11 // pred_check_branch
        %295 = sbr.rel (%p293) target = $region44
      $region43: #{perceptual_loss.1} parent=11 // pred_region
        _
      $region44: #{perceptual_loss.1} parent=11 // pred_fallthru
        _
      // Predicated region
      $region45: #{perceptual_loss.1} parent=11 // pred_check
        %p296 = pneg %p231
      $region46: #{perceptual_loss.1} parent=11 // pred_check_branch
        %298 = sbr.rel (%p296) target = $region48
      $region47: #{perceptual_loss.1} parent=11 // pred_region
        _
      $region48: #{perceptual_loss.1} parent=11 // pred_fallthru
        _
    $region12: #{perceptual_loss.1} parent=5 // pred_fallthru
      _
    %p299 = scmp.lt.s32.totalorder %s16, 2
    // Predicated region
    $region49: #{perceptual_loss.1} parent=5 // pred_check
      %p300 = pneg %p299
    $region50: #{perceptual_loss.1} parent=5 // pred_check_branch
      %302 = sbr.rel (%p300) target = $region52
    $region51: #{perceptual_loss.1} parent=5 // pred_region
      // Predicated region
      $region53: #{perceptual_loss.1} parent=51 // pred_check
        %p303 = pneg %p36
      $region54: #{perceptual_loss.1} parent=51 // pred_check_branch
        %305 = sbr.rel (%p303) target = $region56
      $region55: #{perceptual_loss.1} parent=51 // pred_region
        %p306 = scmp.lt.s32.totalorder %s16, 1
        %s307 = scalar_select %p306, %s16, 1
        %s308 = smul.addr %s307, 8
        %s309 = scalar_lea.vmem %s0, %s308
      $region56: #{perceptual_loss.1} parent=51 // pred_fallthru
        _
    $region52: #{perceptual_loss.1} parent=5 // pred_fallthru
      _
    %p310 = scmp.le.s32.totalorder 1, %s16
    %p311 = scmp.lt.s32.totalorder %s16, 3
    %p312 = pnand %p310, %p311
    %p313 = pneg %p312
    // Predicated region
    $region57: #{perceptual_loss.1} parent=5 // pred_check
      _
    $region58: #{perceptual_loss.1} parent=5 // pred_check_branch
      %315 = sbr.rel (%p312) target = $region60
    $region59: #{perceptual_loss.1} parent=5 // pred_region
      %s316 = ssub.s32 %s16, 1
      %p317 = scmp.lt.s32.totalorder %s21, 1
      %s318 = scalar_select %p317, %s21, 1
      %s319 = smul.addr %s318, 8
      %s320 = scalar_lea.vmem %s0, %s319
      %p321 = pneg %p42
      %p322 = pneg %p39
      %p323 = pneg %p63
      %p324 = pneg %p60
      %p325 = pneg %p84
      %p326 = pneg %p81
      %p327 = pneg %p105
      %p328 = pneg %p102
      %p329 = pneg %p126
      %p330 = pneg %p123
      %p331 = pneg %p147
      %p332 = pneg %p144
      %p333 = pneg %p168
      %p334 = pneg %p165
      %p335 = pneg %p189
      %p336 = pneg %p186
      %p337 = pneg %p210
      %p338 = pneg %p207
      %p339 = pneg %p231
      %p340 = pneg %p228
      %p341 = pneg %p257
      %p342 = pneg %p254
      %p343 = scmp.lt.s32.totalorder %s21, 1
      %s344 = scalar_select %p343, %s21, 1
      %s345 = scalar_lea.vmem %s10, %s344
      %p346 = scmp.lt.s32.totalorder %s21, 1
      %s347 = scalar_select %p346, %s21, 1
      %s348 = smul.addr %s347, 8
      %s349 = scalar_lea.vmem %s0, %s348
      %p350 = scmp.lt.s32.totalorder %s21, 1
      %s351 = scalar_select %p350, %s21, 1
      %s352 = scalar_lea.vmem %s10, %s351
      %v353 = vld [vmem:[%s349] sm:$0xff]
      %v355 = vlaneseq
      %v356 = vshrl.u32 %v355, 7
      %v357 = vsub.s32 0, %v356
      %v358 = vrot.slane %v353, %v357
      %v359 = vlaneseq
      %v360 = vshrl.u32 %v359, 7
      %v361 = vsub.s32 1, %v360
      %v362 = vrot.slane %v353, %v361
      %v363 = vlaneseq
      %v364 = vshrl.u32 %v363, 7
      %v365 = vsub.s32 2, %v364
      %v366 = vrot.slane %v353, %v365
      %v367 = vlaneseq
      %v368 = vshrl.u32 %v367, 7
      %v369 = vsub.s32 3, %v368
      %v370 = vrot.slane %v353, %v369
      %v371 = vlaneseq
      %v372 = vshrl.u32 %v371, 7
      %v373 = vsub.s32 4, %v372
      %v374 = vrot.slane %v353, %v373
      %v375 = vlaneseq
      %v376 = vshrl.u32 %v375, 7
      %v377 = vsub.s32 5, %v376
      %v378 = vrot.slane %v353, %v377
      %v379 = vlaneseq
      %v380 = vshrl.u32 %v379, 7
      %v381 = vsub.s32 6, %v380
      %v382 = vrot.slane %v353, %v381
      %v383 = vlaneseq
      %v384 = vshrl.u32 %v383, 7
      %v385 = vsub.s32 7, %v384
      %v386 = vrot.slane %v353, %v385
      %395 = vrot.lane.b32.xlu0 %v358, 73
      %v396 = vpop.permute.xlu0 %395
      %397 = vrot.lane.b32.xlu0 %v362, 73
      %v398 = vpop.permute.xlu0 %397
      %399 = vrot.lane.b32.xlu0 %v366, 73
      %v400 = vpop.permute.xlu0 %399
      %401 = vrot.lane.b32.xlu0 %v370, 73
      %v402 = vpop.permute.xlu0 %401
      %403 = vrot.lane.b32.xlu0 %v374, 73
      %v404 = vpop.permute.xlu0 %403
      %405 = vrot.lane.b32.xlu0 %v378, 73
      %v406 = vpop.permute.xlu0 %405
      %407 = vrot.lane.b32.xlu0 %v382, 73
      %v408 = vpop.permute.xlu0 %407
      %409 = vrot.lane.b32.xlu0 %v386, 73
      %v410 = vpop.permute.xlu0 %409
      %v411 = vlaneseq
      %v412 = vand.u32 %v411, 127
      %vm413 = vcmp.lt.s32.totalorder %v412, 73
      %v414 = vsel %vm413, %v408, %v410
      %v415 = vsel %vm413, %v406, %v408
      %v416 = vsel %vm413, %v404, %v406
      %v417 = vsel %vm413, %v402, %v404
      %v418 = vsel %vm413, %v400, %v402
      %v419 = vsel %vm413, %v398, %v400
      %v420 = vsel %vm413, %v396, %v398
      %v421 = vsel %vm413, %v410, %v396
      %v422 = vld [vmem:[%s3] ss:$8 sm:$0xf]
      %v423 = vld [vmem:[%s3] ss:$8 sm:$0xf0]
      %v424 = vor.u32 %v422, %v423
      %v426 = vlaneseq
      %v427 = vshrl.u32 %v426, 7
      %v428 = vsub.s32 0, %v427
      %v429 = vrot.slane %v424, %v428
      %v430 = vlaneseq
      %v431 = vshrl.u32 %v430, 7
      %v432 = vsub.s32 1, %v431
      %v433 = vrot.slane %v424, %v432
      %v434 = vlaneseq
      %v435 = vshrl.u32 %v434, 7
      %v436 = vsub.s32 2, %v435
      %v437 = vrot.slane %v424, %v436
      %v438 = vlaneseq
      %v439 = vshrl.u32 %v438, 7
      %v440 = vsub.s32 3, %v439
      %v441 = vrot.slane %v424, %v440
      %v442 = vlaneseq
      %v443 = vshrl.u32 %v442, 7
      %v444 = vsub.s32 4, %v443
      %v445 = vrot.slane %v424, %v444
      %v446 = vlaneseq
      %v447 = vshrl.u32 %v446, 7
      %v448 = vsub.s32 5, %v447
      %v449 = vrot.slane %v424, %v448
      %v450 = vlaneseq
      %v451 = vshrl.u32 %v450, 7
      %v452 = vsub.s32 6, %v451
      %v453 = vrot.slane %v424, %v452
      %v454 = vlaneseq
      %v455 = vshrl.u32 %v454, 7
      %v456 = vsub.s32 7, %v455
      %v457 = vrot.slane %v424, %v456
      %v466 = vmul.f32 %v421, %v429
      %v467 = vmul.f32 %v420, %v433
      %v468 = vmul.f32 %v419, %v437
      %v469 = vmul.f32 %v418, %v441
      %v470 = vmul.f32 %v417, %v445
      %v471 = vmul.f32 %v416, %v449
      %v472 = vmul.f32 %v415, %v453
      %v473 = vmul.f32 %v414, %v457
      %v482 = vcombine.low %v466, %v467
      %v483 = vcombine.low %v468, %v469
      %v484 = vcombine.low %v470, %v471
      %v485 = vcombine.low %v472, %v473
      %v487 = vunpack.c.l.s4 1966171168
      %v488 = vunpack.c.0.s8 %v487
      %v489 = vlaneseq
      %v490 = vshrl.u32 %v489, 7
      %v491 = vsub.s32 %v488, %v490
      %v492 = vrot.slane %v482, %v491
      %v494 = vunpack.c.l.s4 1966171168
      %v495 = vunpack.c.0.s8 %v494
      %v496 = vlaneseq
      %v497 = vshrl.u32 %v496, 7
      %v498 = vsub.s32 %v495, %v497
      %v499 = vrot.slane %v483, %v498
      %v501 = vunpack.c.l.s4 1966171168
      %v502 = vunpack.c.0.s8 %v501
      %v503 = vlaneseq
      %v504 = vshrl.u32 %v503, 7
      %v505 = vsub.s32 %v502, %v504
      %v506 = vrot.slane %v484, %v505
      %v508 = vunpack.c.l.s4 1966171168
      %v509 = vunpack.c.0.s8 %v508
      %v510 = vlaneseq
      %v511 = vshrl.u32 %v510, 7
      %v512 = vsub.s32 %v509, %v511
      %v513 = vrot.slane %v485, %v512
      %v514 = vcombine.low %v492, %v499
      %v515 = vcombine.low %v506, %v513
      %v517 = vunpack.c.l.s4 1966171168
      %v518 = vunpack.c.0.s8 %v517
      %v519 = vlaneseq
      %v520 = vshrl.u32 %v519, 7
      %v521 = vsub.s32 %v518, %v520
      %v522 = vrot.slane %v514, %v521
      %v524 = vunpack.c.l.s4 1966171168
      %v525 = vunpack.c.0.s8 %v524
      %v526 = vlaneseq
      %v527 = vshrl.u32 %v526, 7
      %v528 = vsub.s32 %v525, %v527
      %v529 = vrot.slane %v515, %v528
      %v530 = vcombine.low %v522, %v529
      %532 = vst [vmem:[#allocation2] ss:$8 sm:$0xf] %v530
      %533 = vst [vmem:[#allocation2] ss:$8 sm:$0xf0] %v530
      %534 = vrot.lane.b32.xlu0 %v358, 72
      %v535 = vpop.permute.xlu0 %534
      %536 = vrot.lane.b32.xlu0 %v362, 72
      %v537 = vpop.permute.xlu0 %536
      %538 = vrot.lane.b32.xlu0 %v366, 72
      %v539 = vpop.permute.xlu0 %538
      %540 = vrot.lane.b32.xlu0 %v370, 72
      %v541 = vpop.permute.xlu0 %540
      %542 = vrot.lane.b32.xlu0 %v374, 72
      %v543 = vpop.permute.xlu0 %542
      %544 = vrot.lane.b32.xlu0 %v378, 72
      %v545 = vpop.permute.xlu0 %544
      %546 = vrot.lane.b32.xlu0 %v382, 72
      %v547 = vpop.permute.xlu0 %546
      %548 = vrot.lane.b32.xlu0 %v386, 72
      %v549 = vpop.permute.xlu0 %548
      %vm550 = vcmp.lt.s32.totalorder %v412, 72
      %v551 = vsel %vm550, %v547, %v549
      %v552 = vsel %vm550, %v545, %v547
      %v553 = vsel %vm550, %v543, %v545
      %v554 = vsel %vm550, %v541, %v543
      %v555 = vsel %vm550, %v539, %v541
      %v556 = vsel %vm550, %v537, %v539
      %v557 = vsel %vm550, %v535, %v537
      %v558 = vsel %vm550, %v549, %v535
      %s559 = scalar_lea.vmem %s3, 1
      %v560 = vld [vmem:[%s559] ss:$8 sm:$0xf]
      %v561 = vld [vmem:[%s559] ss:$8 sm:$0xf0]
      %v562 = vor.u32 %v560, %v561
      %v564 = vlaneseq
      %v565 = vshrl.u32 %v564, 7
      %v566 = vsub.s32 0, %v565
      %v567 = vrot.slane %v562, %v566
      %v568 = vlaneseq
      %v569 = vshrl.u32 %v568, 7
      %v570 = vsub.s32 1, %v569
      %v571 = vrot.slane %v562, %v570
      %v572 = vlaneseq
      %v573 = vshrl.u32 %v572, 7
      %v574 = vsub.s32 2, %v573
      %v575 = vrot.slane %v562, %v574
      %v576 = vlaneseq
      %v577 = vshrl.u32 %v576, 7
      %v578 = vsub.s32 3, %v577
      %v579 = vrot.slane %v562, %v578
      %v580 = vlaneseq
      %v581 = vshrl.u32 %v580, 7
      %v582 = vsub.s32 4, %v581
      %v583 = vrot.slane %v562, %v582
      %v584 = vlaneseq
      %v585 = vshrl.u32 %v584, 7
      %v586 = vsub.s32 5, %v585
      %v587 = vrot.slane %v562, %v586
      %v588 = vlaneseq
      %v589 = vshrl.u32 %v588, 7
      %v590 = vsub.s32 6, %v589
      %v591 = vrot.slane %v562, %v590
      %v592 = vlaneseq
      %v593 = vshrl.u32 %v592, 7
      %v594 = vsub.s32 7, %v593
      %v595 = vrot.slane %v562, %v594
      %v604 = vmul.f32 %v558, %v567
      %v605 = vmul.f32 %v557, %v571
      %v606 = vmul.f32 %v556, %v575
      %v607 = vmul.f32 %v555, %v579
      %v608 = vmul.f32 %v554, %v583
      %v609 = vmul.f32 %v553, %v587
      %v610 = vmul.f32 %v552, %v591
      %v611 = vmul.f32 %v551, %v595
      %v620 = vcombine.low %v604, %v605
      %v621 = vcombine.low %v606, %v607
      %v622 = vcombine.low %v608, %v609
      %v623 = vcombine.low %v610, %v611
      %v625 = vunpack.c.l.s4 1966171168
      %v626 = vunpack.c.0.s8 %v625
      %v627 = vlaneseq
      %v628 = vshrl.u32 %v627, 7
      %v629 = vsub.s32 %v626, %v628
      %v630 = vrot.slane %v620, %v629
      %v632 = vunpack.c.l.s4 1966171168
      %v633 = vunpack.c.0.s8 %v632
      %v634 = vlaneseq
      %v635 = vshrl.u32 %v634, 7
      %v636 = vsub.s32 %v633, %v635
      %v637 = vrot.slane %v621, %v636
      %v639 = vunpack.c.l.s4 1966171168
      %v640 = vunpack.c.0.s8 %v639
      %v641 = vlaneseq
      %v642 = vshrl.u32 %v641, 7
      %v643 = vsub.s32 %v640, %v642
      %v644 = vrot.slane %v622, %v643
      %v646 = vunpack.c.l.s4 1966171168
      %v647 = vunpack.c.0.s8 %v646
      %v648 = vlaneseq
      %v649 = vshrl.u32 %v648, 7
      %v650 = vsub.s32 %v647, %v649
      %v651 = vrot.slane %v623, %v650
      %v652 = vcombine.low %v630, %v637
      %v653 = vcombine.low %v644, %v651
      %v655 = vunpack.c.l.s4 1966171168
      %v656 = vunpack.c.0.s8 %v655
      %v657 = vlaneseq
      %v658 = vshrl.u32 %v657, 7
      %v659 = vsub.s32 %v656, %v658
      %v660 = vrot.slane %v652, %v659
      %v662 = vunpack.c.l.s4 1966171168
      %v663 = vunpack.c.0.s8 %v662
      %v664 = vlaneseq
      %v665 = vshrl.u32 %v664, 7
      %v666 = vsub.s32 %v663, %v665
      %v667 = vrot.slane %v653, %v666
      %v668 = vcombine.low %v660, %v667
      %s670 = scalar_lea.vmem [#allocation2], 1
      %671 = vst [vmem:[%s670] ss:$8 sm:$0xf] %v668
      %672 = vst [vmem:[%s670] ss:$8 sm:$0xf0] %v668
      %673 = vrot.lane.b32.xlu0 %v358, 71
      %v674 = vpop.permute.xlu0 %673
      %675 = vrot.lane.b32.xlu0 %v362, 71
      %v676 = vpop.permute.xlu0 %675
      %677 = vrot.lane.b32.xlu0 %v366, 71
      %v678 = vpop.permute.xlu0 %677
      %679 = vrot.lane.b32.xlu0 %v370, 71
      %v680 = vpop.permute.xlu0 %679
      %681 = vrot.lane.b32.xlu0 %v374, 71
      %v682 = vpop.permute.xlu0 %681
      %683 = vrot.lane.b32.xlu0 %v378, 71
      %v684 = vpop.permute.xlu0 %683
      %685 = vrot.lane.b32.xlu0 %v382, 71
      %v686 = vpop.permute.xlu0 %685
      %687 = vrot.lane.b32.xlu0 %v386, 71
      %v688 = vpop.permute.xlu0 %687
      %vm689 = vcmp.lt.s32.totalorder %v412, 71
      %v690 = vsel %vm689, %v686, %v688
      %v691 = vsel %vm689, %v684, %v686
      %v692 = vsel %vm689, %v682, %v684
      %v693 = vsel %vm689, %v680, %v682
      %v694 = vsel %vm689, %v678, %v680
      %v695 = vsel %vm689, %v676, %v678
      %v696 = vsel %vm689, %v674, %v676
      %v697 = vsel %vm689, %v688, %v674
      %s698 = scalar_lea.vmem %s3, 2
      %v699 = vld [vmem:[%s698] ss:$8 sm:$0xf]
      %v700 = vld [vmem:[%s698] ss:$8 sm:$0xf0]
      %v701 = vor.u32 %v699, %v700
      %v703 = vlaneseq
      %v704 = vshrl.u32 %v703, 7
      %v705 = vsub.s32 0, %v704
      %v706 = vrot.slane %v701, %v705
      %v707 = vlaneseq
      %v708 = vshrl.u32 %v707, 7
      %v709 = vsub.s32 1, %v708
      %v710 = vrot.slane %v701, %v709
      %v711 = vlaneseq
      %v712 = vshrl.u32 %v711, 7
      %v713 = vsub.s32 2, %v712
      %v714 = vrot.slane %v701, %v713
      %v715 = vlaneseq
      %v716 = vshrl.u32 %v715, 7
      %v717 = vsub.s32 3, %v716
      %v718 = vrot.slane %v701, %v717
      %v719 = vlaneseq
      %v720 = vshrl.u32 %v719, 7
      %v721 = vsub.s32 4, %v720
      %v722 = vrot.slane %v701, %v721
      %v723 = vlaneseq
      %v724 = vshrl.u32 %v723, 7
      %v725 = vsub.s32 5, %v724
      %v726 = vrot.slane %v701, %v725
      %v727 = vlaneseq
      %v728 = vshrl.u32 %v727, 7
      %v729 = vsub.s32 6, %v728
      %v730 = vrot.slane %v701, %v729
      %v731 = vlaneseq
      %v732 = vshrl.u32 %v731, 7
      %v733 = vsub.s32 7, %v732
      %v734 = vrot.slane %v701, %v733
      %v743 = vmul.f32 %v697, %v706
      %v744 = vmul.f32 %v696, %v710
      %v745 = vmul.f32 %v695, %v714
      %v746 = vmul.f32 %v694, %v718
      %v747 = vmul.f32 %v693, %v722
      %v748 = vmul.f32 %v692, %v726
      %v749 = vmul.f32 %v691, %v730
      %v750 = vmul.f32 %v690, %v734
      %v759 = vcombine.low %v743, %v744
      %v760 = vcombine.low %v745, %v746
      %v761 = vcombine.low %v747, %v748
      %v762 = vcombine.low %v749, %v750
      %v764 = vunpack.c.l.s4 1966171168
      %v765 = vunpack.c.0.s8 %v764
      %v766 = vlaneseq
      %v767 = vshrl.u32 %v766, 7
      %v768 = vsub.s32 %v765, %v767
      %v769 = vrot.slane %v759, %v768
      %v771 = vunpack.c.l.s4 1966171168
      %v772 = vunpack.c.0.s8 %v771
      %v773 = vlaneseq
      %v774 = vshrl.u32 %v773, 7
      %v775 = vsub.s32 %v772, %v774
      %v776 = vrot.slane %v760, %v775
      %v778 = vunpack.c.l.s4 1966171168
      %v779 = vunpack.c.0.s8 %v778
      %v780 = vlaneseq
      %v781 = vshrl.u32 %v780, 7
      %v782 = vsub.s32 %v779, %v781
      %v783 = vrot.slane %v761, %v782
      %v785 = vunpack.c.l.s4 1966171168
      %v786 = vunpack.c.0.s8 %v785
      %v787 = vlaneseq
      %v788 = vshrl.u32 %v787, 7
      %v789 = vsub.s32 %v786, %v788
      %v790 = vrot.slane %v762, %v789
      %v791 = vcombine.low %v769, %v776
      %v792 = vcombine.low %v783, %v790
      %v794 = vunpack.c.l.s4 1966171168
      %v795 = vunpack.c.0.s8 %v794
      %v796 = vlaneseq
      %v797 = vshrl.u32 %v796, 7
      %v798 = vsub.s32 %v795, %v797
      %v799 = vrot.slane %v791, %v798
      %v801 = vunpack.c.l.s4 1966171168
      %v802 = vunpack.c.0.s8 %v801
      %v803 = vlaneseq
      %v804 = vshrl.u32 %v803, 7
      %v805 = vsub.s32 %v802, %v804
      %v806 = vrot.slane %v792, %v805
      %v807 = vcombine.low %v799, %v806
      %s809 = scalar_lea.vmem [#allocation2], 2
      %810 = vst [vmem:[%s809] ss:$8 sm:$0xf] %v807
      %811 = vst [vmem:[%s809] ss:$8 sm:$0xf0] %v807
      %812 = vrot.lane.b32.xlu0 %v358, 65
      %v813 = vpop.permute.xlu0 %812
      %814 = vrot.lane.b32.xlu0 %v362, 65
      %v815 = vpop.permute.xlu0 %814
      %816 = vrot.lane.b32.xlu0 %v366, 65
      %v817 = vpop.permute.xlu0 %816
      %818 = vrot.lane.b32.xlu0 %v370, 65
      %v819 = vpop.permute.xlu0 %818
      %820 = vrot.lane.b32.xlu0 %v374, 65
      %v821 = vpop.permute.xlu0 %820
      %822 = vrot.lane.b32.xlu0 %v378, 65
      %v823 = vpop.permute.xlu0 %822
      %824 = vrot.lane.b32.xlu0 %v382, 65
      %v825 = vpop.permute.xlu0 %824
      %826 = vrot.lane.b32.xlu0 %v386, 65
      %v827 = vpop.permute.xlu0 %826
      %vm828 = vcmp.lt.s32.totalorder %v412, 65
      %v829 = vsel %vm828, %v825, %v827
      %v830 = vsel %vm828, %v823, %v825
      %v831 = vsel %vm828, %v821, %v823
      %v832 = vsel %vm828, %v819, %v821
      %v833 = vsel %vm828, %v817, %v819
      %v834 = vsel %vm828, %v815, %v817
      %v835 = vsel %vm828, %v813, %v815
      %v836 = vsel %vm828, %v827, %v813
      %s837 = scalar_lea.vmem %s3, 3
      %v838 = vld [vmem:[%s837] ss:$8 sm:$0xf]
      %v839 = vld [vmem:[%s837] ss:$8 sm:$0xf0]
      %v840 = vor.u32 %v838, %v839
      %v842 = vlaneseq
      %v843 = vshrl.u32 %v842, 7
      %v844 = vsub.s32 0, %v843
      %v845 = vrot.slane %v840, %v844
      %v846 = vlaneseq
      %v847 = vshrl.u32 %v846, 7
      %v848 = vsub.s32 1, %v847
      %v849 = vrot.slane %v840, %v848
      %v850 = vlaneseq
      %v851 = vshrl.u32 %v850, 7
      %v852 = vsub.s32 2, %v851
      %v853 = vrot.slane %v840, %v852
      %v854 = vlaneseq
      %v855 = vshrl.u32 %v854, 7
      %v856 = vsub.s32 3, %v855
      %v857 = vrot.slane %v840, %v856
      %v858 = vlaneseq
      %v859 = vshrl.u32 %v858, 7
      %v860 = vsub.s32 4, %v859
      %v861 = vrot.slane %v840, %v860
      %v862 = vlaneseq
      %v863 = vshrl.u32 %v862, 7
      %v864 = vsub.s32 5, %v863
      %v865 = vrot.slane %v840, %v864
      %v866 = vlaneseq
      %v867 = vshrl.u32 %v866, 7
      %v868 = vsub.s32 6, %v867
      %v869 = vrot.slane %v840, %v868
      %v870 = vlaneseq
      %v871 = vshrl.u32 %v870, 7
      %v872 = vsub.s32 7, %v871
      %v873 = vrot.slane %v840, %v872
      %v882 = vmul.f32 %v836, %v845
      %v883 = vmul.f32 %v835, %v849
      %v884 = vmul.f32 %v834, %v853
      %v885 = vmul.f32 %v833, %v857
      %v886 = vmul.f32 %v832, %v861
      %v887 = vmul.f32 %v831, %v865
      %v888 = vmul.f32 %v830, %v869
      %v889 = vmul.f32 %v829, %v873
      %v898 = vcombine.low %v882, %v883
      %v899 = vcombine.low %v884, %v885
      %v900 = vcombine.low %v886, %v887
      %v901 = vcombine.low %v888, %v889
      %v903 = vunpack.c.l.s4 1966171168
      %v904 = vunpack.c.0.s8 %v903
      %v905 = vlaneseq
      %v906 = vshrl.u32 %v905, 7
      %v907 = vsub.s32 %v904, %v906
      %v908 = vrot.slane %v898, %v907
      %v910 = vunpack.c.l.s4 1966171168
      %v911 = vunpack.c.0.s8 %v910
      %v912 = vlaneseq
      %v913 = vshrl.u32 %v912, 7
      %v914 = vsub.s32 %v911, %v913
      %v915 = vrot.slane %v899, %v914
      %v917 = vunpack.c.l.s4 1966171168
      %v918 = vunpack.c.0.s8 %v917
      %v919 = vlaneseq
      %v920 = vshrl.u32 %v919, 7
      %v921 = vsub.s32 %v918, %v920
      %v922 = vrot.slane %v900, %v921
      %v924 = vunpack.c.l.s4 1966171168
      %v925 = vunpack.c.0.s8 %v924
      %v926 = vlaneseq
      %v927 = vshrl.u32 %v926, 7
      %v928 = vsub.s32 %v925, %v927
      %v929 = vrot.slane %v901, %v928
      %v930 = vcombine.low %v908, %v915
      %v931 = vcombine.low %v922, %v929
      %v933 = vunpack.c.l.s4 1966171168
      %v934 = vunpack.c.0.s8 %v933
      %v935 = vlaneseq
      %v936 = vshrl.u32 %v935, 7
      %v937 = vsub.s32 %v934, %v936
      %v938 = vrot.slane %v930, %v937
      %v940 = vunpack.c.l.s4 1966171168
      %v941 = vunpack.c.0.s8 %v940
      %v942 = vlaneseq
      %v943 = vshrl.u32 %v942, 7
      %v944 = vsub.s32 %v941, %v943
      %v945 = vrot.slane %v931, %v944
      %v946 = vcombine.low %v938, %v945
      %s948 = scalar_lea.vmem [#allocation2], 3
      %949 = vst [vmem:[%s948] ss:$8 sm:$0xf] %v946
      %950 = vst [vmem:[%s948] ss:$8 sm:$0xf0] %v946
      %951 = vrot.lane.b32.xlu0 %v358, 64
      %v952 = vpop.permute.xlu0 %951
      %953 = vrot.lane.b32.xlu0 %v362, 64
      %v954 = vpop.permute.xlu0 %953
      %955 = vrot.lane.b32.xlu0 %v366, 64
      %v956 = vpop.permute.xlu0 %955
      %957 = vrot.lane.b32.xlu0 %v370, 64
      %v958 = vpop.permute.xlu0 %957
      %959 = vrot.lane.b32.xlu0 %v374, 64
      %v960 = vpop.permute.xlu0 %959
      %961 = vrot.lane.b32.xlu0 %v378, 64
      %v962 = vpop.permute.xlu0 %961
      %963 = vrot.lane.b32.xlu0 %v382, 64
      %v964 = vpop.permute.xlu0 %963
      %965 = vrot.lane.b32.xlu0 %v386, 64
      %v966 = vpop.permute.xlu0 %965
      %vm967 = vcmp.lt.s32.totalorder %v412, 64
      %v968 = vsel %vm967, %v964, %v966
      %v969 = vsel %vm967, %v962, %v964
      %v970 = vsel %vm967, %v960, %v962
      %v971 = vsel %vm967, %v958, %v960
      %v972 = vsel %vm967, %v956, %v958
      %v973 = vsel %vm967, %v954, %v956
      %v974 = vsel %vm967, %v952, %v954
      %v975 = vsel %vm967, %v966, %v952
      %s976 = scalar_lea.vmem %s3, 4
      %v977 = vld [vmem:[%s976] ss:$8 sm:$0xf]
      %v978 = vld [vmem:[%s976] ss:$8 sm:$0xf0]
      %v979 = vor.u32 %v977, %v978
      %v981 = vlaneseq
      %v982 = vshrl.u32 %v981, 7
      %v983 = vsub.s32 0, %v982
      %v984 = vrot.slane %v979, %v983
      %v985 = vlaneseq
      %v986 = vshrl.u32 %v985, 7
      %v987 = vsub.s32 1, %v986
      %v988 = vrot.slane %v979, %v987
      %v989 = vlaneseq
      %v990 = vshrl.u32 %v989, 7
      %v991 = vsub.s32 2, %v990
      %v992 = vrot.slane %v979, %v991
      %v993 = vlaneseq
      %v994 = vshrl.u32 %v993, 7
      %v995 = vsub.s32 3, %v994
      %v996 = vrot.slane %v979, %v995
      %v997 = vlaneseq
      %v998 = vshrl.u32 %v997, 7
      %v999 = vsub.s32 4, %v998
      %v1000 = vrot.slane %v979, %v999
      %v1001 = vlaneseq
      %v1002 = vshrl.u32 %v1001, 7
      %v1003 = vsub.s32 5, %v1002
      %v1004 = vrot.slane %v979, %v1003
      %v1005 = vlaneseq
      %v1006 = vshrl.u32 %v1005, 7
      %v1007 = vsub.s32 6, %v1006
      %v1008 = vrot.slane %v979, %v1007
      %v1009 = vlaneseq
      %v1010 = vshrl.u32 %v1009, 7
      %v1011 = vsub.s32 7, %v1010
      %v1012 = vrot.slane %v979, %v1011
      %v1021 = vmul.f32 %v975, %v984
      %v1022 = vmul.f32 %v974, %v988
      %v1023 = vmul.f32 %v973, %v992
      %v1024 = vmul.f32 %v972, %v996
      %v1025 = vmul.f32 %v971, %v1000
      %v1026 = vmul.f32 %v970, %v1004
      %v1027 = vmul.f32 %v969, %v1008
      %v1028 = vmul.f32 %v968, %v1012
      %v1037 = vcombine.low %v1021, %v1022
      %v1038 = vcombine.low %v1023, %v1024
      %v1039 = vcombine.low %v1025, %v1026
      %v1040 = vcombine.low %v1027, %v1028
      %v1042 = vunpack.c.l.s4 1966171168
      %v1043 = vunpack.c.0.s8 %v1042
      %v1044 = vlaneseq
      %v1045 = vshrl.u32 %v1044, 7
      %v1046 = vsub.s32 %v1043, %v1045
      %v1047 = vrot.slane %v1037, %v1046
      %v1049 = vunpack.c.l.s4 1966171168
      %v1050 = vunpack.c.0.s8 %v1049
      %v1051 = vlaneseq
      %v1052 = vshrl.u32 %v1051, 7
      %v1053 = vsub.s32 %v1050, %v1052
      %v1054 = vrot.slane %v1038, %v1053
      %v1056 = vunpack.c.l.s4 1966171168
      %v1057 = vunpack.c.0.s8 %v1056
      %v1058 = vlaneseq
      %v1059 = vshrl.u32 %v1058, 7
      %v1060 = vsub.s32 %v1057, %v1059
      %v1061 = vrot.slane %v1039, %v1060
      %v1063 = vunpack.c.l.s4 1966171168
      %v1064 = vunpack.c.0.s8 %v1063
      %v1065 = vlaneseq
      %v1066 = vshrl.u32 %v1065, 7
      %v1067 = vsub.s32 %v1064, %v1066
      %v1068 = vrot.slane %v1040, %v1067
      %v1069 = vcombine.low %v1047, %v1054
      %v1070 = vcombine.low %v1061, %v1068
      %v1072 = vunpack.c.l.s4 1966171168
      %v1073 = vunpack.c.0.s8 %v1072
      %v1074 = vlaneseq
      %v1075 = vshrl.u32 %v1074, 7
      %v1076 = vsub.s32 %v1073, %v1075
      %v1077 = vrot.slane %v1069, %v1076
      %v1079 = vunpack.c.l.s4 1966171168
      %v1080 = vunpack.c.0.s8 %v1079
      %v1081 = vlaneseq
      %v1082 = vshrl.u32 %v1081, 7
      %v1083 = vsub.s32 %v1080, %v1082
      %v1084 = vrot.slane %v1070, %v1083
      %v1085 = vcombine.low %v1077, %v1084
      %s1087 = scalar_lea.vmem [#allocation2], 4
      %1088 = vst [vmem:[%s1087] ss:$8 sm:$0xf] %v1085
      %1089 = vst [vmem:[%s1087] ss:$8 sm:$0xf0] %v1085
      %1090 = vrot.lane.b32.xlu0 %v358, 63
      %v1091 = vpop.permute.xlu0 %1090
      %1092 = vrot.lane.b32.xlu0 %v362, 63
      %v1093 = vpop.permute.xlu0 %1092
      %1094 = vrot.lane.b32.xlu0 %v366, 63
      %v1095 = vpop.permute.xlu0 %1094
      %1096 = vrot.lane.b32.xlu0 %v370, 63
      %v1097 = vpop.permute.xlu0 %1096
      %1098 = vrot.lane.b32.xlu0 %v374, 63
      %v1099 = vpop.permute.xlu0 %1098
      %1100 = vrot.lane.b32.xlu0 %v378, 63
      %v1101 = vpop.permute.xlu0 %1100
      %1102 = vrot.lane.b32.xlu0 %v382, 63
      %v1103 = vpop.permute.xlu0 %1102
      %1104 = vrot.lane.b32.xlu0 %v386, 63
      %v1105 = vpop.permute.xlu0 %1104
      %vm1106 = vcmp.lt.s32.totalorder %v412, 63
      %v1107 = vsel %vm1106, %v1103, %v1105
      %v1108 = vsel %vm1106, %v1101, %v1103
      %v1109 = vsel %vm1106, %v1099, %v1101
      %v1110 = vsel %vm1106, %v1097, %v1099
      %v1111 = vsel %vm1106, %v1095, %v1097
      %v1112 = vsel %vm1106, %v1093, %v1095
      %v1113 = vsel %vm1106, %v1091, %v1093
      %v1114 = vsel %vm1106, %v1105, %v1091
      %s1115 = scalar_lea.vmem %s3, 5
      %v1116 = vld [vmem:[%s1115] ss:$8 sm:$0xf]
      %v1117 = vld [vmem:[%s1115] ss:$8 sm:$0xf0]
      %v1118 = vor.u32 %v1116, %v1117
      %v1120 = vlaneseq
      %v1121 = vshrl.u32 %v1120, 7
      %v1122 = vsub.s32 0, %v1121
      %v1123 = vrot.slane %v1118, %v1122
      %v1124 = vlaneseq
      %v1125 = vshrl.u32 %v1124, 7
      %v1126 = vsub.s32 1, %v1125
      %v1127 = vrot.slane %v1118, %v1126
      %v1128 = vlaneseq
      %v1129 = vshrl.u32 %v1128, 7
      %v1130 = vsub.s32 2, %v1129
      %v1131 = vrot.slane %v1118, %v1130
      %v1132 = vlaneseq
      %v1133 = vshrl.u32 %v1132, 7
      %v1134 = vsub.s32 3, %v1133
      %v1135 = vrot.slane %v1118, %v1134
      %v1136 = vlaneseq
      %v1137 = vshrl.u32 %v1136, 7
      %v1138 = vsub.s32 4, %v1137
      %v1139 = vrot.slane %v1118, %v1138
      %v1140 = vlaneseq
      %v1141 = vshrl.u32 %v1140, 7
      %v1142 = vsub.s32 5, %v1141
      %v1143 = vrot.slane %v1118, %v1142
      %v1144 = vlaneseq
      %v1145 = vshrl.u32 %v1144, 7
      %v1146 = vsub.s32 6, %v1145
      %v1147 = vrot.slane %v1118, %v1146
      %v1148 = vlaneseq
      %v1149 = vshrl.u32 %v1148, 7
      %v1150 = vsub.s32 7, %v1149
      %v1151 = vrot.slane %v1118, %v1150
      %v1160 = vmul.f32 %v1114, %v1123
      %v1161 = vmul.f32 %v1113, %v1127
      %v1162 = vmul.f32 %v1112, %v1131
      %v1163 = vmul.f32 %v1111, %v1135
      %v1164 = vmul.f32 %v1110, %v1139
      %v1165 = vmul.f32 %v1109, %v1143
      %v1166 = vmul.f32 %v1108, %v1147
      %v1167 = vmul.f32 %v1107, %v1151
      %v1176 = vcombine.low %v1160, %v1161
      %v1177 = vcombine.low %v1162, %v1163
      %v1178 = vcombine.low %v1164, %v1165
      %v1179 = vcombine.low %v1166, %v1167
      %v1181 = vunpack.c.l.s4 1966171168
      %v1182 = vunpack.c.0.s8 %v1181
      %v1183 = vlaneseq
      %v1184 = vshrl.u32 %v1183, 7
      %v1185 = vsub.s32 %v1182, %v1184
      %v1186 = vrot.slane %v1176, %v1185
      %v1188 = vunpack.c.l.s4 1966171168
      %v1189 = vunpack.c.0.s8 %v1188
      %v1190 = vlaneseq
      %v1191 = vshrl.u32 %v1190, 7
      %v1192 = vsub.s32 %v1189, %v1191
      %v1193 = vrot.slane %v1177, %v1192
      %v1195 = vunpack.c.l.s4 1966171168
      %v1196 = vunpack.c.0.s8 %v1195
      %v1197 = vlaneseq
      %v1198 = vshrl.u32 %v1197, 7
      %v1199 = vsub.s32 %v1196, %v1198
      %v1200 = vrot.slane %v1178, %v1199
      %v1202 = vunpack.c.l.s4 1966171168
      %v1203 = vunpack.c.0.s8 %v1202
      %v1204 = vlaneseq
      %v1205 = vshrl.u32 %v1204, 7
      %v1206 = vsub.s32 %v1203, %v1205
      %v1207 = vrot.slane %v1179, %v1206
      %v1208 = vcombine.low %v1186, %v1193
      %v1209 = vcombine.low %v1200, %v1207
      %v1211 = vunpack.c.l.s4 1966171168
      %v1212 = vunpack.c.0.s8 %v1211
      %v1213 = vlaneseq
      %v1214 = vshrl.u32 %v1213, 7
      %v1215 = vsub.s32 %v1212, %v1214
      %v1216 = vrot.slane %v1208, %v1215
      %v1218 = vunpack.c.l.s4 1966171168
      %v1219 = vunpack.c.0.s8 %v1218
      %v1220 = vlaneseq
      %v1221 = vshrl.u32 %v1220, 7
      %v1222 = vsub.s32 %v1219, %v1221
      %v1223 = vrot.slane %v1209, %v1222
      %v1224 = vcombine.low %v1216, %v1223
      %s1226 = scalar_lea.vmem [#allocation2], 5
      %1227 = vst [vmem:[%s1226] ss:$8 sm:$0xf] %v1224
      %1228 = vst [vmem:[%s1226] ss:$8 sm:$0xf0] %v1224
      %1229 = vrot.lane.b32.xlu0 %v358, 57
      %v1230 = vpop.permute.xlu0 %1229
      %1231 = vrot.lane.b32.xlu0 %v362, 57
      %v1232 = vpop.permute.xlu0 %1231
      %1233 = vrot.lane.b32.xlu0 %v366, 57
      %v1234 = vpop.permute.xlu0 %1233
      %1235 = vrot.lane.b32.xlu0 %v370, 57
      %v1236 = vpop.permute.xlu0 %1235
      %1237 = vrot.lane.b32.xlu0 %v374, 57
      %v1238 = vpop.permute.xlu0 %1237
      %1239 = vrot.lane.b32.xlu0 %v378, 57
      %v1240 = vpop.permute.xlu0 %1239
      %1241 = vrot.lane.b32.xlu0 %v382, 57
      %v1242 = vpop.permute.xlu0 %1241
      %1243 = vrot.lane.b32.xlu0 %v386, 57
      %v1244 = vpop.permute.xlu0 %1243
      %vm1245 = vcmp.lt.s32.totalorder %v412, 57
      %v1246 = vsel %vm1245, %v1242, %v1244
      %v1247 = vsel %vm1245, %v1240, %v1242
      %v1248 = vsel %vm1245, %v1238, %v1240
      %v1249 = vsel %vm1245, %v1236, %v1238
      %v1250 = vsel %vm1245, %v1234, %v1236
      %v1251 = vsel %vm1245, %v1232, %v1234
      %v1252 = vsel %vm1245, %v1230, %v1232
      %v1253 = vsel %vm1245, %v1244, %v1230
      %s1254 = scalar_lea.vmem %s3, 6
      %v1255 = vld [vmem:[%s1254] ss:$8 sm:$0xf]
      %v1256 = vld [vmem:[%s1254] ss:$8 sm:$0xf0]
      %v1257 = vor.u32 %v1255, %v1256
      %v1259 = vlaneseq
      %v1260 = vshrl.u32 %v1259, 7
      %v1261 = vsub.s32 0, %v1260
      %v1262 = vrot.slane %v1257, %v1261
      %v1263 = vlaneseq
      %v1264 = vshrl.u32 %v1263, 7
      %v1265 = vsub.s32 1, %v1264
      %v1266 = vrot.slane %v1257, %v1265
      %v1267 = vlaneseq
      %v1268 = vshrl.u32 %v1267, 7
      %v1269 = vsub.s32 2, %v1268
      %v1270 = vrot.slane %v1257, %v1269
      %v1271 = vlaneseq
      %v1272 = vshrl.u32 %v1271, 7
      %v1273 = vsub.s32 3, %v1272
      %v1274 = vrot.slane %v1257, %v1273
      %v1275 = vlaneseq
      %v1276 = vshrl.u32 %v1275, 7
      %v1277 = vsub.s32 4, %v1276
      %v1278 = vrot.slane %v1257, %v1277
      %v1279 = vlaneseq
      %v1280 = vshrl.u32 %v1279, 7
      %v1281 = vsub.s32 5, %v1280
      %v1282 = vrot.slane %v1257, %v1281
      %v1283 = vlaneseq
      %v1284 = vshrl.u32 %v1283, 7
      %v1285 = vsub.s32 6, %v1284
      %v1286 = vrot.slane %v1257, %v1285
      %v1287 = vlaneseq
      %v1288 = vshrl.u32 %v1287, 7
      %v1289 = vsub.s32 7, %v1288
      %v1290 = vrot.slane %v1257, %v1289
      %v1299 = vmul.f32 %v1253, %v1262
      %v1300 = vmul.f32 %v1252, %v1266
      %v1301 = vmul.f32 %v1251, %v1270
      %v1302 = vmul.f32 %v1250, %v1274
      %v1303 = vmul.f32 %v1249, %v1278
      %v1304 = vmul.f32 %v1248, %v1282
      %v1305 = vmul.f32 %v1247, %v1286
      %v1306 = vmul.f32 %v1246, %v1290
      %v1315 = vcombine.low %v1299, %v1300
      %v1316 = vcombine.low %v1301, %v1302
      %v1317 = vcombine.low %v1303, %v1304
      %v1318 = vcombine.low %v1305, %v1306
      %v1320 = vunpack.c.l.s4 1966171168
      %v1321 = vunpack.c.0.s8 %v1320
      %v1322 = vlaneseq
      %v1323 = vshrl.u32 %v1322, 7
      %v1324 = vsub.s32 %v1321, %v1323
      %v1325 = vrot.slane %v1315, %v1324
      %v1327 = vunpack.c.l.s4 1966171168
      %v1328 = vunpack.c.0.s8 %v1327
      %v1329 = vlaneseq
      %v1330 = vshrl.u32 %v1329, 7
      %v1331 = vsub.s32 %v1328, %v1330
      %v1332 = vrot.slane %v1316, %v1331
      %v1334 = vunpack.c.l.s4 1966171168
      %v1335 = vunpack.c.0.s8 %v1334
      %v1336 = vlaneseq
      %v1337 = vshrl.u32 %v1336, 7
      %v1338 = vsub.s32 %v1335, %v1337
      %v1339 = vrot.slane %v1317, %v1338
      %v1341 = vunpack.c.l.s4 1966171168
      %v1342 = vunpack.c.0.s8 %v1341
      %v1343 = vlaneseq
      %v1344 = vshrl.u32 %v1343, 7
      %v1345 = vsub.s32 %v1342, %v1344
      %v1346 = vrot.slane %v1318, %v1345
      %v1347 = vcombine.low %v1325, %v1332
      %v1348 = vcombine.low %v1339, %v1346
      %v1350 = vunpack.c.l.s4 1966171168
      %v1351 = vunpack.c.0.s8 %v1350
      %v1352 = vlaneseq
      %v1353 = vshrl.u32 %v1352, 7
      %v1354 = vsub.s32 %v1351, %v1353
      %v1355 = vrot.slane %v1347, %v1354
      %v1357 = vunpack.c.l.s4 1966171168
      %v1358 = vunpack.c.0.s8 %v1357
      %v1359 = vlaneseq
      %v1360 = vshrl.u32 %v1359, 7
      %v1361 = vsub.s32 %v1358, %v1360
      %v1362 = vrot.slane %v1348, %v1361
      %v1363 = vcombine.low %v1355, %v1362
      %s1365 = scalar_lea.vmem [#allocation2], 6
      %1366 = vst [vmem:[%s1365] ss:$8 sm:$0xf] %v1363
      %1367 = vst [vmem:[%s1365] ss:$8 sm:$0xf0] %v1363
      %1368 = vrot.lane.b32.xlu0 %v358, 56
      %v1369 = vpop.permute.xlu0 %1368
      %1370 = vrot.lane.b32.xlu0 %v362, 56
      %v1371 = vpop.permute.xlu0 %1370
      %1372 = vrot.lane.b32.xlu0 %v366, 56
      %v1373 = vpop.permute.xlu0 %1372
      %1374 = vrot.lane.b32.xlu0 %v370, 56
      %v1375 = vpop.permute.xlu0 %1374
      %1376 = vrot.lane.b32.xlu0 %v374, 56
      %v1377 = vpop.permute.xlu0 %1376
      %1378 = vrot.lane.b32.xlu0 %v378, 56
      %v1379 = vpop.permute.xlu0 %1378
      %1380 = vrot.lane.b32.xlu0 %v382, 56
      %v1381 = vpop.permute.xlu0 %1380
      %1382 = vrot.lane.b32.xlu0 %v386, 56
      %v1383 = vpop.permute.xlu0 %1382
      %vm1384 = vcmp.lt.s32.totalorder %v412, 56
      %v1385 = vsel %vm1384, %v1381, %v1383
      %v1386 = vsel %vm1384, %v1379, %v1381
      %v1387 = vsel %vm1384, %v1377, %v1379
      %v1388 = vsel %vm1384, %v1375, %v1377
      %v1389 = vsel %vm1384, %v1373, %v1375
      %v1390 = vsel %vm1384, %v1371, %v1373
      %v1391 = vsel %vm1384, %v1369, %v1371
      %v1392 = vsel %vm1384, %v1383, %v1369
      %s1393 = scalar_lea.vmem %s3, 7
      %v1394 = vld [vmem:[%s1393] ss:$8 sm:$0xf]
      %v1395 = vld [vmem:[%s1393] ss:$8 sm:$0xf0]
      %v1396 = vor.u32 %v1394, %v1395
      %v1398 = vlaneseq
      %v1399 = vshrl.u32 %v1398, 7
      %v1400 = vsub.s32 0, %v1399
      %v1401 = vrot.slane %v1396, %v1400
      %v1402 = vlaneseq
      %v1403 = vshrl.u32 %v1402, 7
      %v1404 = vsub.s32 1, %v1403
      %v1405 = vrot.slane %v1396, %v1404
      %v1406 = vlaneseq
      %v1407 = vshrl.u32 %v1406, 7
      %v1408 = vsub.s32 2, %v1407
      %v1409 = vrot.slane %v1396, %v1408
      %v1410 = vlaneseq
      %v1411 = vshrl.u32 %v1410, 7
      %v1412 = vsub.s32 3, %v1411
      %v1413 = vrot.slane %v1396, %v1412
      %v1414 = vlaneseq
      %v1415 = vshrl.u32 %v1414, 7
      %v1416 = vsub.s32 4, %v1415
      %v1417 = vrot.slane %v1396, %v1416
      %v1418 = vlaneseq
      %v1419 = vshrl.u32 %v1418, 7
      %v1420 = vsub.s32 5, %v1419
      %v1421 = vrot.slane %v1396, %v1420
      %v1422 = vlaneseq
      %v1423 = vshrl.u32 %v1422, 7
      %v1424 = vsub.s32 6, %v1423
      %v1425 = vrot.slane %v1396, %v1424
      %v1426 = vlaneseq
      %v1427 = vshrl.u32 %v1426, 7
      %v1428 = vsub.s32 7, %v1427
      %v1429 = vrot.slane %v1396, %v1428
      %v1438 = vmul.f32 %v1392, %v1401
      %v1439 = vmul.f32 %v1391, %v1405
      %v1440 = vmul.f32 %v1390, %v1409
      %v1441 = vmul.f32 %v1389, %v1413
      %v1442 = vmul.f32 %v1388, %v1417
      %v1443 = vmul.f32 %v1387, %v1421
      %v1444 = vmul.f32 %v1386, %v1425
      %v1445 = vmul.f32 %v1385, %v1429
      %v1454 = vcombine.low %v1438, %v1439
      %v1455 = vcombine.low %v1440, %v1441
      %v1456 = vcombine.low %v1442, %v1443
      %v1457 = vcombine.low %v1444, %v1445
      %v1459 = vunpack.c.l.s4 1966171168
      %v1460 = vunpack.c.0.s8 %v1459
      %v1461 = vlaneseq
      %v1462 = vshrl.u32 %v1461, 7
      %v1463 = vsub.s32 %v1460, %v1462
      %v1464 = vrot.slane %v1454, %v1463
      %v1466 = vunpack.c.l.s4 1966171168
      %v1467 = vunpack.c.0.s8 %v1466
      %v1468 = vlaneseq
      %v1469 = vshrl.u32 %v1468, 7
      %v1470 = vsub.s32 %v1467, %v1469
      %v1471 = vrot.slane %v1455, %v1470
      %v1473 = vunpack.c.l.s4 1966171168
      %v1474 = vunpack.c.0.s8 %v1473
      %v1475 = vlaneseq
      %v1476 = vshrl.u32 %v1475, 7
      %v1477 = vsub.s32 %v1474, %v1476
      %v1478 = vrot.slane %v1456, %v1477
      %v1480 = vunpack.c.l.s4 1966171168
      %v1481 = vunpack.c.0.s8 %v1480
      %v1482 = vlaneseq
      %v1483 = vshrl.u32 %v1482, 7
      %v1484 = vsub.s32 %v1481, %v1483
      %v1485 = vrot.slane %v1457, %v1484
      %v1486 = vcombine.low %v1464, %v1471
      %v1487 = vcombine.low %v1478, %v1485
      %v1489 = vunpack.c.l.s4 1966171168
      %v1490 = vunpack.c.0.s8 %v1489
      %v1491 = vlaneseq
      %v1492 = vshrl.u32 %v1491, 7
      %v1493 = vsub.s32 %v1490, %v1492
      %v1494 = vrot.slane %v1486, %v1493
      %v1496 = vunpack.c.l.s4 1966171168
      %v1497 = vunpack.c.0.s8 %v1496
      %v1498 = vlaneseq
      %v1499 = vshrl.u32 %v1498, 7
      %v1500 = vsub.s32 %v1497, %v1499
      %v1501 = vrot.slane %v1487, %v1500
      %v1502 = vcombine.low %v1494, %v1501
      %s1504 = scalar_lea.vmem [#allocation2], 7
      %1505 = vst [vmem:[%s1504] ss:$8 sm:$0xf] %v1502
      %1506 = vst [vmem:[%s1504] ss:$8 sm:$0xf0] %v1502
      %1507 = vrot.lane.b32.xlu0 %v358, 55
      %v1508 = vpop.permute.xlu0 %1507
      %1509 = vrot.lane.b32.xlu0 %v362, 55
      %v1510 = vpop.permute.xlu0 %1509
      %1511 = vrot.lane.b32.xlu0 %v366, 55
      %v1512 = vpop.permute.xlu0 %1511
      %1513 = vrot.lane.b32.xlu0 %v370, 55
      %v1514 = vpop.permute.xlu0 %1513
      %1515 = vrot.lane.b32.xlu0 %v374, 55
      %v1516 = vpop.permute.xlu0 %1515
      %1517 = vrot.lane.b32.xlu0 %v378, 55
      %v1518 = vpop.permute.xlu0 %1517
      %1519 = vrot.lane.b32.xlu0 %v382, 55
      %v1520 = vpop.permute.xlu0 %1519
      %1521 = vrot.lane.b32.xlu0 %v386, 55
      %v1522 = vpop.permute.xlu0 %1521
      %vm1523 = vcmp.lt.s32.totalorder %v412, 55
      %v1524 = vsel %vm1523, %v1520, %v1522
      %v1525 = vsel %vm1523, %v1518, %v1520
      %v1526 = vsel %vm1523, %v1516, %v1518
      %v1527 = vsel %vm1523, %v1514, %v1516
      %v1528 = vsel %vm1523, %v1512, %v1514
      %v1529 = vsel %vm1523, %v1510, %v1512
      %v1530 = vsel %vm1523, %v1508, %v1510
      %v1531 = vsel %vm1523, %v1522, %v1508
      %s1532 = scalar_lea.vmem %s3, 64
      %v1533 = vld [vmem:[%s1532] ss:$8 sm:$0xf]
      %v1534 = vld [vmem:[%s1532] ss:$8 sm:$0xf0]
      %v1535 = vor.u32 %v1533, %v1534
      %v1537 = vlaneseq
      %v1538 = vshrl.u32 %v1537, 7
      %v1539 = vsub.s32 0, %v1538
      %v1540 = vrot.slane %v1535, %v1539
      %v1541 = vlaneseq
      %v1542 = vshrl.u32 %v1541, 7
      %v1543 = vsub.s32 1, %v1542
      %v1544 = vrot.slane %v1535, %v1543
      %v1545 = vlaneseq
      %v1546 = vshrl.u32 %v1545, 7
      %v1547 = vsub.s32 2, %v1546
      %v1548 = vrot.slane %v1535, %v1547
      %v1549 = vlaneseq
      %v1550 = vshrl.u32 %v1549, 7
      %v1551 = vsub.s32 3, %v1550
      %v1552 = vrot.slane %v1535, %v1551
      %v1553 = vlaneseq
      %v1554 = vshrl.u32 %v1553, 7
      %v1555 = vsub.s32 4, %v1554
      %v1556 = vrot.slane %v1535, %v1555
      %v1557 = vlaneseq
      %v1558 = vshrl.u32 %v1557, 7
      %v1559 = vsub.s32 5, %v1558
      %v1560 = vrot.slane %v1535, %v1559
      %v1561 = vlaneseq
      %v1562 = vshrl.u32 %v1561, 7
      %v1563 = vsub.s32 6, %v1562
      %v1564 = vrot.slane %v1535, %v1563
      %v1565 = vlaneseq
      %v1566 = vshrl.u32 %v1565, 7
      %v1567 = vsub.s32 7, %v1566
      %v1568 = vrot.slane %v1535, %v1567
      %v1577 = vmul.f32 %v1531, %v1540
      %v1578 = vmul.f32 %v1530, %v1544
      %v1579 = vmul.f32 %v1529, %v1548
      %v1580 = vmul.f32 %v1528, %v1552
      %v1581 = vmul.f32 %v1527, %v1556
      %v1582 = vmul.f32 %v1526, %v1560
      %v1583 = vmul.f32 %v1525, %v1564
      %v1584 = vmul.f32 %v1524, %v1568
      %v1593 = vcombine.low %v1577, %v1578
      %v1594 = vcombine.low %v1579, %v1580
      %v1595 = vcombine.low %v1581, %v1582
      %v1596 = vcombine.low %v1583, %v1584
      %v1598 = vunpack.c.l.s4 1966171168
      %v1599 = vunpack.c.0.s8 %v1598
      %v1600 = vlaneseq
      %v1601 = vshrl.u32 %v1600, 7
      %v1602 = vsub.s32 %v1599, %v1601
      %v1603 = vrot.slane %v1593, %v1602
      %v1605 = vunpack.c.l.s4 1966171168
      %v1606 = vunpack.c.0.s8 %v1605
      %v1607 = vlaneseq
      %v1608 = vshrl.u32 %v1607, 7
      %v1609 = vsub.s32 %v1606, %v1608
      %v1610 = vrot.slane %v1594, %v1609
      %v1612 = vunpack.c.l.s4 1966171168
      %v1613 = vunpack.c.0.s8 %v1612
      %v1614 = vlaneseq
      %v1615 = vshrl.u32 %v1614, 7
      %v1616 = vsub.s32 %v1613, %v1615
      %v1617 = vrot.slane %v1595, %v1616
      %v1619 = vunpack.c.l.s4 1966171168
      %v1620 = vunpack.c.0.s8 %v1619
      %v1621 = vlaneseq
      %v1622 = vshrl.u32 %v1621, 7
      %v1623 = vsub.s32 %v1620, %v1622
      %v1624 = vrot.slane %v1596, %v1623
      %v1625 = vcombine.low %v1603, %v1610
      %v1626 = vcombine.low %v1617, %v1624
      %v1628 = vunpack.c.l.s4 1966171168
      %v1629 = vunpack.c.0.s8 %v1628
      %v1630 = vlaneseq
      %v1631 = vshrl.u32 %v1630, 7
      %v1632 = vsub.s32 %v1629, %v1631
      %v1633 = vrot.slane %v1625, %v1632
      %v1635 = vunpack.c.l.s4 1966171168
      %v1636 = vunpack.c.0.s8 %v1635
      %v1637 = vlaneseq
      %v1638 = vshrl.u32 %v1637, 7
      %v1639 = vsub.s32 %v1636, %v1638
      %v1640 = vrot.slane %v1626, %v1639
      %v1641 = vcombine.low %v1633, %v1640
      %s1643 = scalar_lea.vmem [#allocation2], 64
      %1644 = vst [vmem:[%s1643] ss:$8 sm:$0xf] %v1641
      %1645 = vst [vmem:[%s1643] ss:$8 sm:$0xf0] %v1641
      %1646 = vrot.lane.b32.xlu0 %v358, 9
      %v1647 = vpop.permute.xlu0 %1646
      %1648 = vrot.lane.b32.xlu0 %v362, 9
      %v1649 = vpop.permute.xlu0 %1648
      %1650 = vrot.lane.b32.xlu0 %v366, 9
      %v1651 = vpop.permute.xlu0 %1650
      %1652 = vrot.lane.b32.xlu0 %v370, 9
      %v1653 = vpop.permute.xlu0 %1652
      %1654 = vrot.lane.b32.xlu0 %v374, 9
      %v1655 = vpop.permute.xlu0 %1654
      %1656 = vrot.lane.b32.xlu0 %v378, 9
      %v1657 = vpop.permute.xlu0 %1656
      %1658 = vrot.lane.b32.xlu0 %v382, 9
      %v1659 = vpop.permute.xlu0 %1658
      %1660 = vrot.lane.b32.xlu0 %v386, 9
      %v1661 = vpop.permute.xlu0 %1660
      %vm1662 = vcmp.lt.s32.totalorder %v412, 9
      %v1663 = vsel %vm1662, %v1659, %v1661
      %v1664 = vsel %vm1662, %v1657, %v1659
      %v1665 = vsel %vm1662, %v1655, %v1657
      %v1666 = vsel %vm1662, %v1653, %v1655
      %v1667 = vsel %vm1662, %v1651, %v1653
      %v1668 = vsel %vm1662, %v1649, %v1651
      %v1669 = vsel %vm1662, %v1647, %v1649
      %v1670 = vsel %vm1662, %v1661, %v1647
      %s1671 = scalar_lea.vmem %s3, 65
      %v1672 = vld [vmem:[%s1671] ss:$8 sm:$0xf]
      %v1673 = vld [vmem:[%s1671] ss:$8 sm:$0xf0]
      %v1674 = vor.u32 %v1672, %v1673
      %v1676 = vlaneseq
      %v1677 = vshrl.u32 %v1676, 7
      %v1678 = vsub.s32 0, %v1677
      %v1679 = vrot.slane %v1674, %v1678
      %v1680 = vlaneseq
      %v1681 = vshrl.u32 %v1680, 7
      %v1682 = vsub.s32 1, %v1681
      %v1683 = vrot.slane %v1674, %v1682
      %v1684 = vlaneseq
      %v1685 = vshrl.u32 %v1684, 7
      %v1686 = vsub.s32 2, %v1685
      %v1687 = vrot.slane %v1674, %v1686
      %v1688 = vlaneseq
      %v1689 = vshrl.u32 %v1688, 7
      %v1690 = vsub.s32 3, %v1689
      %v1691 = vrot.slane %v1674, %v1690
      %v1692 = vlaneseq
      %v1693 = vshrl.u32 %v1692, 7
      %v1694 = vsub.s32 4, %v1693
      %v1695 = vrot.slane %v1674, %v1694
      %v1696 = vlaneseq
      %v1697 = vshrl.u32 %v1696, 7
      %v1698 = vsub.s32 5, %v1697
      %v1699 = vrot.slane %v1674, %v1698
      %v1700 = vlaneseq
      %v1701 = vshrl.u32 %v1700, 7
      %v1702 = vsub.s32 6, %v1701
      %v1703 = vrot.slane %v1674, %v1702
      %v1704 = vlaneseq
      %v1705 = vshrl.u32 %v1704, 7
      %v1706 = vsub.s32 7, %v1705
      %v1707 = vrot.slane %v1674, %v1706
      %v1716 = vmul.f32 %v1670, %v1679
      %v1717 = vmul.f32 %v1669, %v1683
      %v1718 = vmul.f32 %v1668, %v1687
      %v1719 = vmul.f32 %v1667, %v1691
      %v1720 = vmul.f32 %v1666, %v1695
      %v1721 = vmul.f32 %v1665, %v1699
      %v1722 = vmul.f32 %v1664, %v1703
      %v1723 = vmul.f32 %v1663, %v1707
      %v1732 = vcombine.low %v1716, %v1717
      %v1733 = vcombine.low %v1718, %v1719
      %v1734 = vcombine.low %v1720, %v1721
      %v1735 = vcombine.low %v1722, %v1723
      %v1737 = vunpack.c.l.s4 1966171168
      %v1738 = vunpack.c.0.s8 %v1737
      %v1739 = vlaneseq
      %v1740 = vshrl.u32 %v1739, 7
      %v1741 = vsub.s32 %v1738, %v1740
      %v1742 = vrot.slane %v1732, %v1741
      %v1744 = vunpack.c.l.s4 1966171168
      %v1745 = vunpack.c.0.s8 %v1744
      %v1746 = vlaneseq
      %v1747 = vshrl.u32 %v1746, 7
      %v1748 = vsub.s32 %v1745, %v1747
      %v1749 = vrot.slane %v1733, %v1748
      %v1751 = vunpack.c.l.s4 1966171168
      %v1752 = vunpack.c.0.s8 %v1751
      %v1753 = vlaneseq
      %v1754 = vshrl.u32 %v1753, 7
      %v1755 = vsub.s32 %v1752, %v1754
      %v1756 = vrot.slane %v1734, %v1755
      %v1758 = vunpack.c.l.s4 1966171168
      %v1759 = vunpack.c.0.s8 %v1758
      %v1760 = vlaneseq
      %v1761 = vshrl.u32 %v1760, 7
      %v1762 = vsub.s32 %v1759, %v1761
      %v1763 = vrot.slane %v1735, %v1762
      %v1764 = vcombine.low %v1742, %v1749
      %v1765 = vcombine.low %v1756, %v1763
      %v1767 = vunpack.c.l.s4 1966171168
      %v1768 = vunpack.c.0.s8 %v1767
      %v1769 = vlaneseq
      %v1770 = vshrl.u32 %v1769, 7
      %v1771 = vsub.s32 %v1768, %v1770
      %v1772 = vrot.slane %v1764, %v1771
      %v1774 = vunpack.c.l.s4 1966171168
      %v1775 = vunpack.c.0.s8 %v1774
      %v1776 = vlaneseq
      %v1777 = vshrl.u32 %v1776, 7
      %v1778 = vsub.s32 %v1775, %v1777
      %v1779 = vrot.slane %v1765, %v1778
      %v1780 = vcombine.low %v1772, %v1779
      %s1782 = scalar_lea.vmem [#allocation2], 65
      %1783 = vst [vmem:[%s1782] ss:$8 sm:$0xf] %v1780
      %1784 = vst [vmem:[%s1782] ss:$8 sm:$0xf0] %v1780
      %1785 = vrot.lane.b32.xlu0 %v358, 8
      %v1786 = vpop.permute.xlu0 %1785
      %1787 = vrot.lane.b32.xlu0 %v362, 8
      %v1788 = vpop.permute.xlu0 %1787
      %1789 = vrot.lane.b32.xlu0 %v366, 8
      %v1790 = vpop.permute.xlu0 %1789
      %1791 = vrot.lane.b32.xlu0 %v370, 8
      %v1792 = vpop.permute.xlu0 %1791
      %1793 = vrot.lane.b32.xlu0 %v374, 8
      %v1794 = vpop.permute.xlu0 %1793
      %1795 = vrot.lane.b32.xlu0 %v378, 8
      %v1796 = vpop.permute.xlu0 %1795
      %1797 = vrot.lane.b32.xlu0 %v382, 8
      %v1798 = vpop.permute.xlu0 %1797
      %1799 = vrot.lane.b32.xlu0 %v386, 8
      %v1800 = vpop.permute.xlu0 %1799
      %vm1801 = vcmp.lt.s32.totalorder %v412, 8
      %v1802 = vsel %vm1801, %v1798, %v1800
      %v1803 = vsel %vm1801, %v1796, %v1798
      %v1804 = vsel %vm1801, %v1794, %v1796
      %v1805 = vsel %vm1801, %v1792, %v1794
      %v1806 = vsel %vm1801, %v1790, %v1792
      %v1807 = vsel %vm1801, %v1788, %v1790
      %v1808 = vsel %vm1801, %v1786, %v1788
      %v1809 = vsel %vm1801, %v1800, %v1786
      %s1810 = scalar_lea.vmem %s3, 66
      %v1811 = vld [vmem:[%s1810] ss:$8 sm:$0xf]
      %v1812 = vld [vmem:[%s1810] ss:$8 sm:$0xf0]
      %v1813 = vor.u32 %v1811, %v1812
      %v1815 = vlaneseq
      %v1816 = vshrl.u32 %v1815, 7
      %v1817 = vsub.s32 0, %v1816
      %v1818 = vrot.slane %v1813, %v1817
      %v1819 = vlaneseq
      %v1820 = vshrl.u32 %v1819, 7
      %v1821 = vsub.s32 1, %v1820
      %v1822 = vrot.slane %v1813, %v1821
      %v1823 = vlaneseq
      %v1824 = vshrl.u32 %v1823, 7
      %v1825 = vsub.s32 2, %v1824
      %v1826 = vrot.slane %v1813, %v1825
      %v1827 = vlaneseq
      %v1828 = vshrl.u32 %v1827, 7
      %v1829 = vsub.s32 3, %v1828
      %v1830 = vrot.slane %v1813, %v1829
      %v1831 = vlaneseq
      %v1832 = vshrl.u32 %v1831, 7
      %v1833 = vsub.s32 4, %v1832
      %v1834 = vrot.slane %v1813, %v1833
      %v1835 = vlaneseq
      %v1836 = vshrl.u32 %v1835, 7
      %v1837 = vsub.s32 5, %v1836
      %v1838 = vrot.slane %v1813, %v1837
      %v1839 = vlaneseq
      %v1840 = vshrl.u32 %v1839, 7
      %v1841 = vsub.s32 6, %v1840
      %v1842 = vrot.slane %v1813, %v1841
      %v1843 = vlaneseq
      %v1844 = vshrl.u32 %v1843, 7
      %v1845 = vsub.s32 7, %v1844
      %v1846 = vrot.slane %v1813, %v1845
      %v1855 = vmul.f32 %v1809, %v1818
      %v1856 = vmul.f32 %v1808, %v1822
      %v1857 = vmul.f32 %v1807, %v1826
      %v1858 = vmul.f32 %v1806, %v1830
      %v1859 = vmul.f32 %v1805, %v1834
      %v1860 = vmul.f32 %v1804, %v1838
      %v1861 = vmul.f32 %v1803, %v1842
      %v1862 = vmul.f32 %v1802, %v1846
      %v1871 = vcombine.low %v1855, %v1856
      %v1872 = vcombine.low %v1857, %v1858
      %v1873 = vcombine.low %v1859, %v1860
      %v1874 = vcombine.low %v1861, %v1862
      %v1876 = vunpack.c.l.s4 1966171168
      %v1877 = vunpack.c.0.s8 %v1876
      %v1878 = vlaneseq
      %v1879 = vshrl.u32 %v1878, 7
      %v1880 = vsub.s32 %v1877, %v1879
      %v1881 = vrot.slane %v1871, %v1880
      %v1883 = vunpack.c.l.s4 1966171168
      %v1884 = vunpack.c.0.s8 %v1883
      %v1885 = vlaneseq
      %v1886 = vshrl.u32 %v1885, 7
      %v1887 = vsub.s32 %v1884, %v1886
      %v1888 = vrot.slane %v1872, %v1887
      %v1890 = vunpack.c.l.s4 1966171168
      %v1891 = vunpack.c.0.s8 %v1890
      %v1892 = vlaneseq
      %v1893 = vshrl.u32 %v1892, 7
      %v1894 = vsub.s32 %v1891, %v1893
      %v1895 = vrot.slane %v1873, %v1894
      %v1897 = vunpack.c.l.s4 1966171168
      %v1898 = vunpack.c.0.s8 %v1897
      %v1899 = vlaneseq
      %v1900 = vshrl.u32 %v1899, 7
      %v1901 = vsub.s32 %v1898, %v1900
      %v1902 = vrot.slane %v1874, %v1901
      %v1903 = vcombine.low %v1881, %v1888
      %v1904 = vcombine.low %v1895, %v1902
      %v1906 = vunpack.c.l.s4 1966171168
      %v1907 = vunpack.c.0.s8 %v1906
      %v1908 = vlaneseq
      %v1909 = vshrl.u32 %v1908, 7
      %v1910 = vsub.s32 %v1907, %v1909
      %v1911 = vrot.slane %v1903, %v1910
      %v1913 = vunpack.c.l.s4 1966171168
      %v1914 = vunpack.c.0.s8 %v1913
      %v1915 = vlaneseq
      %v1916 = vshrl.u32 %v1915, 7
      %v1917 = vsub.s32 %v1914, %v1916
      %v1918 = vrot.slane %v1904, %v1917
      %v1919 = vcombine.low %v1911, %v1918
      %s1921 = scalar_lea.vmem [#allocation2], 66
      %1922 = vst [vmem:[%s1921] ss:$8 sm:$0xf] %v1919
      %1923 = vst [vmem:[%s1921] ss:$8 sm:$0xf0] %v1919
      %1924 = vrot.lane.b32.xlu0 %v358, 7
      %v1925 = vpop.permute.xlu0 %1924
      %1926 = vrot.lane.b32.xlu0 %v362, 7
      %v1927 = vpop.permute.xlu0 %1926
      %1928 = vrot.lane.b32.xlu0 %v366, 7
      %v1929 = vpop.permute.xlu0 %1928
      %1930 = vrot.lane.b32.xlu0 %v370, 7
      %v1931 = vpop.permute.xlu0 %1930
      %1932 = vrot.lane.b32.xlu0 %v374, 7
      %v1933 = vpop.permute.xlu0 %1932
      %1934 = vrot.lane.b32.xlu0 %v378, 7
      %v1935 = vpop.permute.xlu0 %1934
      %1936 = vrot.lane.b32.xlu0 %v382, 7
      %v1937 = vpop.permute.xlu0 %1936
      %1938 = vrot.lane.b32.xlu0 %v386, 7
      %v1939 = vpop.permute.xlu0 %1938
      %vm1940 = vcmp.lt.s32.totalorder %v412, 7
      %v1941 = vsel %vm1940, %v1937, %v1939
      %v1942 = vsel %vm1940, %v1935, %v1937
      %v1943 = vsel %vm1940, %v1933, %v1935
      %v1944 = vsel %vm1940, %v1931, %v1933
      %v1945 = vsel %vm1940, %v1929, %v1931
      %v1946 = vsel %vm1940, %v1927, %v1929
      %v1947 = vsel %vm1940, %v1925, %v1927
      %v1948 = vsel %vm1940, %v1939, %v1925
      %s1949 = scalar_lea.vmem %s3, 67
      %v1950 = vld [vmem:[%s1949] ss:$8 sm:$0xf]
      %v1951 = vld [vmem:[%s1949] ss:$8 sm:$0xf0]
      %v1952 = vor.u32 %v1950, %v1951
      %v1954 = vlaneseq
      %v1955 = vshrl.u32 %v1954, 7
      %v1956 = vsub.s32 0, %v1955
      %v1957 = vrot.slane %v1952, %v1956
      %v1958 = vlaneseq
      %v1959 = vshrl.u32 %v1958, 7
      %v1960 = vsub.s32 1, %v1959
      %v1961 = vrot.slane %v1952, %v1960
      %v1962 = vlaneseq
      %v1963 = vshrl.u32 %v1962, 7
      %v1964 = vsub.s32 2, %v1963
      %v1965 = vrot.slane %v1952, %v1964
      %v1966 = vlaneseq
      %v1967 = vshrl.u32 %v1966, 7
      %v1968 = vsub.s32 3, %v1967
      %v1969 = vrot.slane %v1952, %v1968
      %v1970 = vlaneseq
      %v1971 = vshrl.u32 %v1970, 7
      %v1972 = vsub.s32 4, %v1971
      %v1973 = vrot.slane %v1952, %v1972
      %v1974 = vlaneseq
      %v1975 = vshrl.u32 %v1974, 7
      %v1976 = vsub.s32 5, %v1975
      %v1977 = vrot.slane %v1952, %v1976
      %v1978 = vlaneseq
      %v1979 = vshrl.u32 %v1978, 7
      %v1980 = vsub.s32 6, %v1979
      %v1981 = vrot.slane %v1952, %v1980
      %v1982 = vlaneseq
      %v1983 = vshrl.u32 %v1982, 7
      %v1984 = vsub.s32 7, %v1983
      %v1985 = vrot.slane %v1952, %v1984
      %v1994 = vmul.f32 %v1948, %v1957
      %v1995 = vmul.f32 %v1947, %v1961
      %v1996 = vmul.f32 %v1946, %v1965
      %v1997 = vmul.f32 %v1945, %v1969
      %v1998 = vmul.f32 %v1944, %v1973
      %v1999 = vmul.f32 %v1943, %v1977
      %v2000 = vmul.f32 %v1942, %v1981
      %v2001 = vmul.f32 %v1941, %v1985
      %v2010 = vcombine.low %v1994, %v1995
      %v2011 = vcombine.low %v1996, %v1997
      %v2012 = vcombine.low %v1998, %v1999
      %v2013 = vcombine.low %v2000, %v2001
      %v2015 = vunpack.c.l.s4 1966171168
      %v2016 = vunpack.c.0.s8 %v2015
      %v2017 = vlaneseq
      %v2018 = vshrl.u32 %v2017, 7
      %v2019 = vsub.s32 %v2016, %v2018
      %v2020 = vrot.slane %v2010, %v2019
      %v2022 = vunpack.c.l.s4 1966171168
      %v2023 = vunpack.c.0.s8 %v2022
      %v2024 = vlaneseq
      %v2025 = vshrl.u32 %v2024, 7
      %v2026 = vsub.s32 %v2023, %v2025
      %v2027 = vrot.slane %v2011, %v2026
      %v2029 = vunpack.c.l.s4 1966171168
      %v2030 = vunpack.c.0.s8 %v2029
      %v2031 = vlaneseq
      %v2032 = vshrl.u32 %v2031, 7
      %v2033 = vsub.s32 %v2030, %v2032
      %v2034 = vrot.slane %v2012, %v2033
      %v2036 = vunpack.c.l.s4 1966171168
      %v2037 = vunpack.c.0.s8 %v2036
      %v2038 = vlaneseq
      %v2039 = vshrl.u32 %v2038, 7
      %v2040 = vsub.s32 %v2037, %v2039
      %v2041 = vrot.slane %v2013, %v2040
      %v2042 = vcombine.low %v2020, %v2027
      %v2043 = vcombine.low %v2034, %v2041
      %v2045 = vunpack.c.l.s4 1966171168
      %v2046 = vunpack.c.0.s8 %v2045
      %v2047 = vlaneseq
      %v2048 = vshrl.u32 %v2047, 7
      %v2049 = vsub.s32 %v2046, %v2048
      %v2050 = vrot.slane %v2042, %v2049
      %v2052 = vunpack.c.l.s4 1966171168
      %v2053 = vunpack.c.0.s8 %v2052
      %v2054 = vlaneseq
      %v2055 = vshrl.u32 %v2054, 7
      %v2056 = vsub.s32 %v2053, %v2055
      %v2057 = vrot.slane %v2043, %v2056
      %v2058 = vcombine.low %v2050, %v2057
      %s2060 = scalar_lea.vmem [#allocation2], 67
      %2061 = vst [vmem:[%s2060] ss:$8 sm:$0xf] %v2058
      %2062 = vst [vmem:[%s2060] ss:$8 sm:$0xf0] %v2058
      %2063 = vrot.lane.b32.xlu0 %v358, 1
      %v2064 = vpop.permute.xlu0 %2063
      %2065 = vrot.lane.b32.xlu0 %v362, 1
      %v2066 = vpop.permute.xlu0 %2065
      %2067 = vrot.lane.b32.xlu0 %v366, 1
      %v2068 = vpop.permute.xlu0 %2067
      %2069 = vrot.lane.b32.xlu0 %v370, 1
      %v2070 = vpop.permute.xlu0 %2069
      %2071 = vrot.lane.b32.xlu0 %v374, 1
      %v2072 = vpop.permute.xlu0 %2071
      %2073 = vrot.lane.b32.xlu0 %v378, 1
      %v2074 = vpop.permute.xlu0 %2073
      %2075 = vrot.lane.b32.xlu0 %v382, 1
      %v2076 = vpop.permute.xlu0 %2075
      %2077 = vrot.lane.b32.xlu0 %v386, 1
      %v2078 = vpop.permute.xlu0 %2077
      %vm2079 = vcmp.lt.s32.totalorder %v412, 1
      %v2080 = vsel %vm2079, %v2076, %v2078
      %v2081 = vsel %vm2079, %v2074, %v2076
      %v2082 = vsel %vm2079, %v2072, %v2074
      %v2083 = vsel %vm2079, %v2070, %v2072
      %v2084 = vsel %vm2079, %v2068, %v2070
      %v2085 = vsel %vm2079, %v2066, %v2068
      %v2086 = vsel %vm2079, %v2064, %v2066
      %v2087 = vsel %vm2079, %v2078, %v2064
      %s2088 = scalar_lea.vmem %s3, 68
      %v2089 = vld [vmem:[%s2088] ss:$8 sm:$0xf]
      %v2090 = vld [vmem:[%s2088] ss:$8 sm:$0xf0]
      %v2091 = vor.u32 %v2089, %v2090
      %v2093 = vlaneseq
      %v2094 = vshrl.u32 %v2093, 7
      %v2095 = vsub.s32 0, %v2094
      %v2096 = vrot.slane %v2091, %v2095
      %v2097 = vlaneseq
      %v2098 = vshrl.u32 %v2097, 7
      %v2099 = vsub.s32 1, %v2098
      %v2100 = vrot.slane %v2091, %v2099
      %v2101 = vlaneseq
      %v2102 = vshrl.u32 %v2101, 7
      %v2103 = vsub.s32 2, %v2102
      %v2104 = vrot.slane %v2091, %v2103
      %v2105 = vlaneseq
      %v2106 = vshrl.u32 %v2105, 7
      %v2107 = vsub.s32 3, %v2106
      %v2108 = vrot.slane %v2091, %v2107
      %v2109 = vlaneseq
      %v2110 = vshrl.u32 %v2109, 7
      %v2111 = vsub.s32 4, %v2110
      %v2112 = vrot.slane %v2091, %v2111
      %v2113 = vlaneseq
      %v2114 = vshrl.u32 %v2113, 7
      %v2115 = vsub.s32 5, %v2114
      %v2116 = vrot.slane %v2091, %v2115
      %v2117 = vlaneseq
      %v2118 = vshrl.u32 %v2117, 7
      %v2119 = vsub.s32 6, %v2118
      %v2120 = vrot.slane %v2091, %v2119
      %v2121 = vlaneseq
      %v2122 = vshrl.u32 %v2121, 7
      %v2123 = vsub.s32 7, %v2122
      %v2124 = vrot.slane %v2091, %v2123
      %v2133 = vmul.f32 %v2087, %v2096
      %v2134 = vmul.f32 %v2086, %v2100
      %v2135 = vmul.f32 %v2085, %v2104
      %v2136 = vmul.f32 %v2084, %v2108
      %v2137 = vmul.f32 %v2083, %v2112
      %v2138 = vmul.f32 %v2082, %v2116
      %v2139 = vmul.f32 %v2081, %v2120
      %v2140 = vmul.f32 %v2080, %v2124
      %v2149 = vcombine.low %v2133, %v2134
      %v2150 = vcombine.low %v2135, %v2136
      %v2151 = vcombine.low %v2137, %v2138
      %v2152 = vcombine.low %v2139, %v2140
      %v2154 = vunpack.c.l.s4 1966171168
      %v2155 = vunpack.c.0.s8 %v2154
      %v2156 = vlaneseq
      %v2157 = vshrl.u32 %v2156, 7
      %v2158 = vsub.s32 %v2155, %v2157
      %v2159 = vrot.slane %v2149, %v2158
      %v2161 = vunpack.c.l.s4 1966171168
      %v2162 = vunpack.c.0.s8 %v2161
      %v2163 = vlaneseq
      %v2164 = vshrl.u32 %v2163, 7
      %v2165 = vsub.s32 %v2162, %v2164
      %v2166 = vrot.slane %v2150, %v2165
      %v2168 = vunpack.c.l.s4 1966171168
      %v2169 = vunpack.c.0.s8 %v2168
      %v2170 = vlaneseq
      %v2171 = vshrl.u32 %v2170, 7
      %v2172 = vsub.s32 %v2169, %v2171
      %v2173 = vrot.slane %v2151, %v2172
      %v2175 = vunpack.c.l.s4 1966171168
      %v2176 = vunpack.c.0.s8 %v2175
      %v2177 = vlaneseq
      %v2178 = vshrl.u32 %v2177, 7
      %v2179 = vsub.s32 %v2176, %v2178
      %v2180 = vrot.slane %v2152, %v2179
      %v2181 = vcombine.low %v2159, %v2166
      %v2182 = vcombine.low %v2173, %v2180
      %v2184 = vunpack.c.l.s4 1966171168
      %v2185 = vunpack.c.0.s8 %v2184
      %v2186 = vlaneseq
      %v2187 = vshrl.u32 %v2186, 7
      %v2188 = vsub.s32 %v2185, %v2187
      %v2189 = vrot.slane %v2181, %v2188
      %v2191 = vunpack.c.l.s4 1966171168
      %v2192 = vunpack.c.0.s8 %v2191
      %v2193 = vlaneseq
      %v2194 = vshrl.u32 %v2193, 7
      %v2195 = vsub.s32 %v2192, %v2194
      %v2196 = vrot.slane %v2182, %v2195
      %v2197 = vcombine.low %v2189, %v2196
      %s2199 = scalar_lea.vmem [#allocation2], 68
      %2200 = vst [vmem:[%s2199] ss:$8 sm:$0xf] %v2197
      %2201 = vst [vmem:[%s2199] ss:$8 sm:$0xf0] %v2197
      %s2202 = scalar_lea.vmem %s3, 69
      %v2203 = vld [vmem:[%s2202] ss:$8 sm:$0xf]
      %v2204 = vld [vmem:[%s2202] ss:$8 sm:$0xf0]
      %v2205 = vor.u32 %v2203, %v2204
      %v2206 = vmul.f32 %v353, %v2205
      %s2207 = scalar_lea.vmem [#allocation2], 69
      %2208 = vst [vmem:[%s2207] ss:$8 sm:$0xf] %v2206
      %2209 = vst [vmem:[%s2207] ss:$8 sm:$0xf0] %v2206
      %2210 = vrot.lane.b32.xlu0 %v358, 127
      %v2211 = vpop.permute.xlu0 %2210
      %2212 = vrot.lane.b32.xlu0 %v362, 127
      %v2213 = vpop.permute.xlu0 %2212
      %2214 = vrot.lane.b32.xlu0 %v366, 127
      %v2215 = vpop.permute.xlu0 %2214
      %2216 = vrot.lane.b32.xlu0 %v370, 127
      %v2217 = vpop.permute.xlu0 %2216
      %2218 = vrot.lane.b32.xlu0 %v374, 127
      %v2219 = vpop.permute.xlu0 %2218
      %2220 = vrot.lane.b32.xlu0 %v378, 127
      %v2221 = vpop.permute.xlu0 %2220
      %2222 = vrot.lane.b32.xlu0 %v382, 127
      %v2223 = vpop.permute.xlu0 %2222
      %2224 = vrot.lane.b32.xlu0 %v386, 127
      %v2225 = vpop.permute.xlu0 %2224
      %vm2226 = vcmp.lt.s32.totalorder %v412, 127
      %v2227 = vsel %vm2226, %v2223, %v2225
      %v2228 = vsel %vm2226, %v2221, %v2223
      %v2229 = vsel %vm2226, %v2219, %v2221
      %v2230 = vsel %vm2226, %v2217, %v2219
      %v2231 = vsel %vm2226, %v2215, %v2217
      %v2232 = vsel %vm2226, %v2213, %v2215
      %v2233 = vsel %vm2226, %v2211, %v2213
      %v2234 = vsel %vm2226, %v2225, %v2211
      %s2235 = scalar_lea.vmem %s3, 70
      %v2236 = vld [vmem:[%s2235] ss:$8 sm:$0xf]
      %v2237 = vld [vmem:[%s2235] ss:$8 sm:$0xf0]
      %v2238 = vor.u32 %v2236, %v2237
      %v2240 = vlaneseq
      %v2241 = vshrl.u32 %v2240, 7
      %v2242 = vsub.s32 0, %v2241
      %v2243 = vrot.slane %v2238, %v2242
      %v2244 = vlaneseq
      %v2245 = vshrl.u32 %v2244, 7
      %v2246 = vsub.s32 1, %v2245
      %v2247 = vrot.slane %v2238, %v2246
      %v2248 = vlaneseq
      %v2249 = vshrl.u32 %v2248, 7
      %v2250 = vsub.s32 2, %v2249
      %v2251 = vrot.slane %v2238, %v2250
      %v2252 = vlaneseq
      %v2253 = vshrl.u32 %v2252, 7
      %v2254 = vsub.s32 3, %v2253
      %v2255 = vrot.slane %v2238, %v2254
      %v2256 = vlaneseq
      %v2257 = vshrl.u32 %v2256, 7
      %v2258 = vsub.s32 4, %v2257
      %v2259 = vrot.slane %v2238, %v2258
      %v2260 = vlaneseq
      %v2261 = vshrl.u32 %v2260, 7
      %v2262 = vsub.s32 5, %v2261
      %v2263 = vrot.slane %v2238, %v2262
      %v2264 = vlaneseq
      %v2265 = vshrl.u32 %v2264, 7
      %v2266 = vsub.s32 6, %v2265
      %v2267 = vrot.slane %v2238, %v2266
      %v2268 = vlaneseq
      %v2269 = vshrl.u32 %v2268, 7
      %v2270 = vsub.s32 7, %v2269
      %v2271 = vrot.slane %v2238, %v2270
      %v2280 = vmul.f32 %v2233, %v2243
      %v2281 = vmul.f32 %v2232, %v2247
      %v2282 = vmul.f32 %v2231, %v2251
      %v2283 = vmul.f32 %v2230, %v2255
      %v2284 = vmul.f32 %v2229, %v2259
      %v2285 = vmul.f32 %v2228, %v2263
      %v2286 = vmul.f32 %v2227, %v2267
      %v2287 = vmul.f32 %v2234, %v2271
      %v2296 = vcombine.low %v2280, %v2281
      %v2297 = vcombine.low %v2282, %v2283
      %v2298 = vcombine.low %v2284, %v2285
      %v2299 = vcombine.low %v2286, %v2287
      %v2301 = vunpack.c.l.s4 1966171168
      %v2302 = vunpack.c.0.s8 %v2301
      %v2303 = vlaneseq
      %v2304 = vshrl.u32 %v2303, 7
      %v2305 = vsub.s32 %v2302, %v2304
      %v2306 = vrot.slane %v2296, %v2305
      %v2308 = vunpack.c.l.s4 1966171168
      %v2309 = vunpack.c.0.s8 %v2308
      %v2310 = vlaneseq
      %v2311 = vshrl.u32 %v2310, 7
      %v2312 = vsub.s32 %v2309, %v2311
      %v2313 = vrot.slane %v2297, %v2312
      %v2315 = vunpack.c.l.s4 1966171168
      %v2316 = vunpack.c.0.s8 %v2315
      %v2317 = vlaneseq
      %v2318 = vshrl.u32 %v2317, 7
      %v2319 = vsub.s32 %v2316, %v2318
      %v2320 = vrot.slane %v2298, %v2319
      %v2322 = vunpack.c.l.s4 1966171168
      %v2323 = vunpack.c.0.s8 %v2322
      %v2324 = vlaneseq
      %v2325 = vshrl.u32 %v2324, 7
      %v2326 = vsub.s32 %v2323, %v2325
      %v2327 = vrot.slane %v2299, %v2326
      %v2328 = vcombine.low %v2306, %v2313
      %v2329 = vcombine.low %v2320, %v2327
      %v2331 = vunpack.c.l.s4 1966171168
      %v2332 = vunpack.c.0.s8 %v2331
      %v2333 = vlaneseq
      %v2334 = vshrl.u32 %v2333, 7
      %v2335 = vsub.s32 %v2332, %v2334
      %v2336 = vrot.slane %v2328, %v2335
      %v2338 = vunpack.c.l.s4 1966171168
      %v2339 = vunpack.c.0.s8 %v2338
      %v2340 = vlaneseq
      %v2341 = vshrl.u32 %v2340, 7
      %v2342 = vsub.s32 %v2339, %v2341
      %v2343 = vrot.slane %v2329, %v2342
      %v2344 = vcombine.low %v2336, %v2343
      %s2346 = scalar_lea.vmem [#allocation2], 70
      %2347 = vst [vmem:[%s2346] ss:$8 sm:$0xf] %v2344
      %2348 = vst [vmem:[%s2346] ss:$8 sm:$0xf0] %v2344
      %2349 = vrot.lane.b32.xlu0 %v358, 121
      %v2350 = vpop.permute.xlu0 %2349
      %2351 = vrot.lane.b32.xlu0 %v362, 121
      %v2352 = vpop.permute.xlu0 %2351
      %2353 = vrot.lane.b32.xlu0 %v366, 121
      %v2354 = vpop.permute.xlu0 %2353
      %2355 = vrot.lane.b32.xlu0 %v370, 121
      %v2356 = vpop.permute.xlu0 %2355
      %2357 = vrot.lane.b32.xlu0 %v374, 121
      %v2358 = vpop.permute.xlu0 %2357
      %2359 = vrot.lane.b32.xlu0 %v378, 121
      %v2360 = vpop.permute.xlu0 %2359
      %2361 = vrot.lane.b32.xlu0 %v382, 121
      %v2362 = vpop.permute.xlu0 %2361
      %2363 = vrot.lane.b32.xlu0 %v386, 121
      %v2364 = vpop.permute.xlu0 %2363
      %vm2365 = vcmp.lt.s32.totalorder %v412, 121
      %v2366 = vsel %vm2365, %v2362, %v2364
      %v2367 = vsel %vm2365, %v2360, %v2362
      %v2368 = vsel %vm2365, %v2358, %v2360
      %v2369 = vsel %vm2365, %v2356, %v2358
      %v2370 = vsel %vm2365, %v2354, %v2356
      %v2371 = vsel %vm2365, %v2352, %v2354
      %v2372 = vsel %vm2365, %v2350, %v2352
      %v2373 = vsel %vm2365, %v2364, %v2350
      %s2374 = scalar_lea.vmem %s3, 71
      %v2375 = vld [vmem:[%s2374] ss:$8 sm:$0xf]
      %v2376 = vld [vmem:[%s2374] ss:$8 sm:$0xf0]
      %v2377 = vor.u32 %v2375, %v2376
      %v2379 = vlaneseq
      %v2380 = vshrl.u32 %v2379, 7
      %v2381 = vsub.s32 0, %v2380
      %v2382 = vrot.slane %v2377, %v2381
      %v2383 = vlaneseq
      %v2384 = vshrl.u32 %v2383, 7
      %v2385 = vsub.s32 1, %v2384
      %v2386 = vrot.slane %v2377, %v2385
      %v2387 = vlaneseq
      %v2388 = vshrl.u32 %v2387, 7
      %v2389 = vsub.s32 2, %v2388
      %v2390 = vrot.slane %v2377, %v2389
      %v2391 = vlaneseq
      %v2392 = vshrl.u32 %v2391, 7
      %v2393 = vsub.s32 3, %v2392
      %v2394 = vrot.slane %v2377, %v2393
      %v2395 = vlaneseq
      %v2396 = vshrl.u32 %v2395, 7
      %v2397 = vsub.s32 4, %v2396
      %v2398 = vrot.slane %v2377, %v2397
      %v2399 = vlaneseq
      %v2400 = vshrl.u32 %v2399, 7
      %v2401 = vsub.s32 5, %v2400
      %v2402 = vrot.slane %v2377, %v2401
      %v2403 = vlaneseq
      %v2404 = vshrl.u32 %v2403, 7
      %v2405 = vsub.s32 6, %v2404
      %v2406 = vrot.slane %v2377, %v2405
      %v2407 = vlaneseq
      %v2408 = vshrl.u32 %v2407, 7
      %v2409 = vsub.s32 7, %v2408
      %v2410 = vrot.slane %v2377, %v2409
      %v2419 = vmul.f32 %v2372, %v2382
      %v2420 = vmul.f32 %v2371, %v2386
      %v2421 = vmul.f32 %v2370, %v2390
      %v2422 = vmul.f32 %v2369, %v2394
      %v2423 = vmul.f32 %v2368, %v2398
      %v2424 = vmul.f32 %v2367, %v2402
      %v2425 = vmul.f32 %v2366, %v2406
      %v2426 = vmul.f32 %v2373, %v2410
      %v2435 = vcombine.low %v2419, %v2420
      %v2436 = vcombine.low %v2421, %v2422
      %v2437 = vcombine.low %v2423, %v2424
      %v2438 = vcombine.low %v2425, %v2426
      %v2440 = vunpack.c.l.s4 1966171168
      %v2441 = vunpack.c.0.s8 %v2440
      %v2442 = vlaneseq
      %v2443 = vshrl.u32 %v2442, 7
      %v2444 = vsub.s32 %v2441, %v2443
      %v2445 = vrot.slane %v2435, %v2444
      %v2447 = vunpack.c.l.s4 1966171168
      %v2448 = vunpack.c.0.s8 %v2447
      %v2449 = vlaneseq
      %v2450 = vshrl.u32 %v2449, 7
      %v2451 = vsub.s32 %v2448, %v2450
      %v2452 = vrot.slane %v2436, %v2451
      %v2454 = vunpack.c.l.s4 1966171168
      %v2455 = vunpack.c.0.s8 %v2454
      %v2456 = vlaneseq
      %v2457 = vshrl.u32 %v2456, 7
      %v2458 = vsub.s32 %v2455, %v2457
      %v2459 = vrot.slane %v2437, %v2458
      %v2461 = vunpack.c.l.s4 1966171168
      %v2462 = vunpack.c.0.s8 %v2461
      %v2463 = vlaneseq
      %v2464 = vshrl.u32 %v2463, 7
      %v2465 = vsub.s32 %v2462, %v2464
      %v2466 = vrot.slane %v2438, %v2465
      %v2467 = vcombine.low %v2445, %v2452
      %v2468 = vcombine.low %v2459, %v2466
      %v2470 = vunpack.c.l.s4 1966171168
      %v2471 = vunpack.c.0.s8 %v2470
      %v2472 = vlaneseq
      %v2473 = vshrl.u32 %v2472, 7
      %v2474 = vsub.s32 %v2471, %v2473
      %v2475 = vrot.slane %v2467, %v2474
      %v2477 = vunpack.c.l.s4 1966171168
      %v2478 = vunpack.c.0.s8 %v2477
      %v2479 = vlaneseq
      %v2480 = vshrl.u32 %v2479, 7
      %v2481 = vsub.s32 %v2478, %v2480
      %v2482 = vrot.slane %v2468, %v2481
      %v2483 = vcombine.low %v2475, %v2482
      %s2485 = scalar_lea.vmem [#allocation2], 71
      %2486 = vst [vmem:[%s2485] ss:$8 sm:$0xf] %v2483
      %2487 = vst [vmem:[%s2485] ss:$8 sm:$0xf0] %v2483
      %2488 = vrot.lane.b32.xlu0 %v358, 120
      %v2489 = vpop.permute.xlu0 %2488
      %2490 = vrot.lane.b32.xlu0 %v362, 120
      %v2491 = vpop.permute.xlu0 %2490
      %2492 = vrot.lane.b32.xlu0 %v366, 120
      %v2493 = vpop.permute.xlu0 %2492
      %2494 = vrot.lane.b32.xlu0 %v370, 120
      %v2495 = vpop.permute.xlu0 %2494
      %2496 = vrot.lane.b32.xlu0 %v374, 120
      %v2497 = vpop.permute.xlu0 %2496
      %2498 = vrot.lane.b32.xlu0 %v378, 120
      %v2499 = vpop.permute.xlu0 %2498
      %2500 = vrot.lane.b32.xlu0 %v382, 120
      %v2501 = vpop.permute.xlu0 %2500
      %2502 = vrot.lane.b32.xlu0 %v386, 120
      %v2503 = vpop.permute.xlu0 %2502
      %vm2504 = vcmp.lt.s32.totalorder %v412, 120
      %v2505 = vsel %vm2504, %v2501, %v2503
      %v2506 = vsel %vm2504, %v2499, %v2501
      %v2507 = vsel %vm2504, %v2497, %v2499
      %v2508 = vsel %vm2504, %v2495, %v2497
      %v2509 = vsel %vm2504, %v2493, %v2495
      %v2510 = vsel %vm2504, %v2491, %v2493
      %v2511 = vsel %vm2504, %v2489, %v2491
      %v2512 = vsel %vm2504, %v2503, %v2489
      %s2513 = scalar_lea.vmem %s3, 128
      %v2514 = vld [vmem:[%s2513] ss:$8 sm:$0xf]
      %v2515 = vld [vmem:[%s2513] ss:$8 sm:$0xf0]
      %v2516 = vor.u32 %v2514, %v2515
      %v2518 = vlaneseq
      %v2519 = vshrl.u32 %v2518, 7
      %v2520 = vsub.s32 0, %v2519
      %v2521 = vrot.slane %v2516, %v2520
      %v2522 = vlaneseq
      %v2523 = vshrl.u32 %v2522, 7
      %v2524 = vsub.s32 1, %v2523
      %v2525 = vrot.slane %v2516, %v2524
      %v2526 = vlaneseq
      %v2527 = vshrl.u32 %v2526, 7
      %v2528 = vsub.s32 2, %v2527
      %v2529 = vrot.slane %v2516, %v2528
      %v2530 = vlaneseq
      %v2531 = vshrl.u32 %v2530, 7
      %v2532 = vsub.s32 3, %v2531
      %v2533 = vrot.slane %v2516, %v2532
      %v2534 = vlaneseq
      %v2535 = vshrl.u32 %v2534, 7
      %v2536 = vsub.s32 4, %v2535
      %v2537 = vrot.slane %v2516, %v2536
      %v2538 = vlaneseq
      %v2539 = vshrl.u32 %v2538, 7
      %v2540 = vsub.s32 5, %v2539
      %v2541 = vrot.slane %v2516, %v2540
      %v2542 = vlaneseq
      %v2543 = vshrl.u32 %v2542, 7
      %v2544 = vsub.s32 6, %v2543
      %v2545 = vrot.slane %v2516, %v2544
      %v2546 = vlaneseq
      %v2547 = vshrl.u32 %v2546, 7
      %v2548 = vsub.s32 7, %v2547
      %v2549 = vrot.slane %v2516, %v2548
      %v2558 = vmul.f32 %v2511, %v2521
      %v2559 = vmul.f32 %v2510, %v2525
      %v2560 = vmul.f32 %v2509, %v2529
      %v2561 = vmul.f32 %v2508, %v2533
      %v2562 = vmul.f32 %v2507, %v2537
      %v2563 = vmul.f32 %v2506, %v2541
      %v2564 = vmul.f32 %v2505, %v2545
      %v2565 = vmul.f32 %v2512, %v2549
      %v2574 = vcombine.low %v2558, %v2559
      %v2575 = vcombine.low %v2560, %v2561
      %v2576 = vcombine.low %v2562, %v2563
      %v2577 = vcombine.low %v2564, %v2565
      %v2579 = vunpack.c.l.s4 1966171168
      %v2580 = vunpack.c.0.s8 %v2579
      %v2581 = vlaneseq
      %v2582 = vshrl.u32 %v2581, 7
      %v2583 = vsub.s32 %v2580, %v2582
      %v2584 = vrot.slane %v2574, %v2583
      %v2586 = vunpack.c.l.s4 1966171168
      %v2587 = vunpack.c.0.s8 %v2586
      %v2588 = vlaneseq
      %v2589 = vshrl.u32 %v2588, 7
      %v2590 = vsub.s32 %v2587, %v2589
      %v2591 = vrot.slane %v2575, %v2590
      %v2593 = vunpack.c.l.s4 1966171168
      %v2594 = vunpack.c.0.s8 %v2593
      %v2595 = vlaneseq
      %v2596 = vshrl.u32 %v2595, 7
      %v2597 = vsub.s32 %v2594, %v2596
      %v2598 = vrot.slane %v2576, %v2597
      %v2600 = vunpack.c.l.s4 1966171168
      %v2601 = vunpack.c.0.s8 %v2600
      %v2602 = vlaneseq
      %v2603 = vshrl.u32 %v2602, 7
      %v2604 = vsub.s32 %v2601, %v2603
      %v2605 = vrot.slane %v2577, %v2604
      %v2606 = vcombine.low %v2584, %v2591
      %v2607 = vcombine.low %v2598, %v2605
      %v2609 = vunpack.c.l.s4 1966171168
      %v2610 = vunpack.c.0.s8 %v2609
      %v2611 = vlaneseq
      %v2612 = vshrl.u32 %v2611, 7
      %v2613 = vsub.s32 %v2610, %v2612
      %v2614 = vrot.slane %v2606, %v2613
      %v2616 = vunpack.c.l.s4 1966171168
      %v2617 = vunpack.c.0.s8 %v2616
      %v2618 = vlaneseq
      %v2619 = vshrl.u32 %v2618, 7
      %v2620 = vsub.s32 %v2617, %v2619
      %v2621 = vrot.slane %v2607, %v2620
      %v2622 = vcombine.low %v2614, %v2621
      %s2624 = scalar_lea.vmem [#allocation2], 128
      %2625 = vst [vmem:[%s2624] ss:$8 sm:$0xf] %v2622
      %2626 = vst [vmem:[%s2624] ss:$8 sm:$0xf0] %v2622
      %2627 = vrot.lane.b32.xlu0 %v358, 119
      %v2628 = vpop.permute.xlu0 %2627
      %2629 = vrot.lane.b32.xlu0 %v362, 119
      %v2630 = vpop.permute.xlu0 %2629
      %2631 = vrot.lane.b32.xlu0 %v366, 119
      %v2632 = vpop.permute.xlu0 %2631
      %2633 = vrot.lane.b32.xlu0 %v370, 119
      %v2634 = vpop.permute.xlu0 %2633
      %2635 = vrot.lane.b32.xlu0 %v374, 119
      %v2636 = vpop.permute.xlu0 %2635
      %2637 = vrot.lane.b32.xlu0 %v378, 119
      %v2638 = vpop.permute.xlu0 %2637
      %2639 = vrot.lane.b32.xlu0 %v382, 119
      %v2640 = vpop.permute.xlu0 %2639
      %2641 = vrot.lane.b32.xlu0 %v386, 119
      %v2642 = vpop.permute.xlu0 %2641
      %vm2643 = vcmp.lt.s32.totalorder %v412, 119
      %v2644 = vsel %vm2643, %v2640, %v2642
      %v2645 = vsel %vm2643, %v2638, %v2640
      %v2646 = vsel %vm2643, %v2636, %v2638
      %v2647 = vsel %vm2643, %v2634, %v2636
      %v2648 = vsel %vm2643, %v2632, %v2634
      %v2649 = vsel %vm2643, %v2630, %v2632
      %v2650 = vsel %vm2643, %v2628, %v2630
      %v2651 = vsel %vm2643, %v2642, %v2628
      %s2652 = scalar_lea.vmem %s3, 129
      %v2653 = vld [vmem:[%s2652] ss:$8 sm:$0xf]
      %v2654 = vld [vmem:[%s2652] ss:$8 sm:$0xf0]
      %v2655 = vor.u32 %v2653, %v2654
      %v2657 = vlaneseq
      %v2658 = vshrl.u32 %v2657, 7
      %v2659 = vsub.s32 0, %v2658
      %v2660 = vrot.slane %v2655, %v2659
      %v2661 = vlaneseq
      %v2662 = vshrl.u32 %v2661, 7
      %v2663 = vsub.s32 1, %v2662
      %v2664 = vrot.slane %v2655, %v2663
      %v2665 = vlaneseq
      %v2666 = vshrl.u32 %v2665, 7
      %v2667 = vsub.s32 2, %v2666
      %v2668 = vrot.slane %v2655, %v2667
      %v2669 = vlaneseq
      %v2670 = vshrl.u32 %v2669, 7
      %v2671 = vsub.s32 3, %v2670
      %v2672 = vrot.slane %v2655, %v2671
      %v2673 = vlaneseq
      %v2674 = vshrl.u32 %v2673, 7
      %v2675 = vsub.s32 4, %v2674
      %v2676 = vrot.slane %v2655, %v2675
      %v2677 = vlaneseq
      %v2678 = vshrl.u32 %v2677, 7
      %v2679 = vsub.s32 5, %v2678
      %v2680 = vrot.slane %v2655, %v2679
      %v2681 = vlaneseq
      %v2682 = vshrl.u32 %v2681, 7
      %v2683 = vsub.s32 6, %v2682
      %v2684 = vrot.slane %v2655, %v2683
      %v2685 = vlaneseq
      %v2686 = vshrl.u32 %v2685, 7
      %v2687 = vsub.s32 7, %v2686
      %v2688 = vrot.slane %v2655, %v2687
      %v2697 = vmul.f32 %v2650, %v2660
      %v2698 = vmul.f32 %v2649, %v2664
      %v2699 = vmul.f32 %v2648, %v2668
      %v2700 = vmul.f32 %v2647, %v2672
      %v2701 = vmul.f32 %v2646, %v2676
      %v2702 = vmul.f32 %v2645, %v2680
      %v2703 = vmul.f32 %v2644, %v2684
      %v2704 = vmul.f32 %v2651, %v2688
      %v2713 = vcombine.low %v2697, %v2698
      %v2714 = vcombine.low %v2699, %v2700
      %v2715 = vcombine.low %v2701, %v2702
      %v2716 = vcombine.low %v2703, %v2704
      %v2718 = vunpack.c.l.s4 1966171168
      %v2719 = vunpack.c.0.s8 %v2718
      %v2720 = vlaneseq
      %v2721 = vshrl.u32 %v2720, 7
      %v2722 = vsub.s32 %v2719, %v2721
      %v2723 = vrot.slane %v2713, %v2722
      %v2725 = vunpack.c.l.s4 1966171168
      %v2726 = vunpack.c.0.s8 %v2725
      %v2727 = vlaneseq
      %v2728 = vshrl.u32 %v2727, 7
      %v2729 = vsub.s32 %v2726, %v2728
      %v2730 = vrot.slane %v2714, %v2729
      %v2732 = vunpack.c.l.s4 1966171168
      %v2733 = vunpack.c.0.s8 %v2732
      %v2734 = vlaneseq
      %v2735 = vshrl.u32 %v2734, 7
      %v2736 = vsub.s32 %v2733, %v2735
      %v2737 = vrot.slane %v2715, %v2736
      %v2739 = vunpack.c.l.s4 1966171168
      %v2740 = vunpack.c.0.s8 %v2739
      %v2741 = vlaneseq
      %v2742 = vshrl.u32 %v2741, 7
      %v2743 = vsub.s32 %v2740, %v2742
      %v2744 = vrot.slane %v2716, %v2743
      %v2745 = vcombine.low %v2723, %v2730
      %v2746 = vcombine.low %v2737, %v2744
      %v2748 = vunpack.c.l.s4 1966171168
      %v2749 = vunpack.c.0.s8 %v2748
      %v2750 = vlaneseq
      %v2751 = vshrl.u32 %v2750, 7
      %v2752 = vsub.s32 %v2749, %v2751
      %v2753 = vrot.slane %v2745, %v2752
      %v2755 = vunpack.c.l.s4 1966171168
      %v2756 = vunpack.c.0.s8 %v2755
      %v2757 = vlaneseq
      %v2758 = vshrl.u32 %v2757, 7
      %v2759 = vsub.s32 %v2756, %v2758
      %v2760 = vrot.slane %v2746, %v2759
      %v2761 = vcombine.low %v2753, %v2760
      %s2763 = scalar_lea.vmem [#allocation2], 129
      %2764 = vst [vmem:[%s2763] ss:$8 sm:$0xf] %v2761
      %2765 = vst [vmem:[%s2763] ss:$8 sm:$0xf0] %v2761
      %s2766 = scalar_lea.vmem %s3, 130
      %v2767 = vld [vmem:[%s2766] ss:$8 sm:$0xf]
      %v2768 = vld [vmem:[%s2766] ss:$8 sm:$0xf0]
      %v2769 = vor.u32 %v2767, %v2768
      %v2771 = vlaneseq
      %v2772 = vshrl.u32 %v2771, 7
      %v2773 = vsub.s32 0, %v2772
      %v2774 = vrot.slane %v2769, %v2773
      %v2775 = vlaneseq
      %v2776 = vshrl.u32 %v2775, 7
      %v2777 = vsub.s32 1, %v2776
      %v2778 = vrot.slane %v2769, %v2777
      %v2779 = vlaneseq
      %v2780 = vshrl.u32 %v2779, 7
      %v2781 = vsub.s32 2, %v2780
      %v2782 = vrot.slane %v2769, %v2781
      %v2783 = vlaneseq
      %v2784 = vshrl.u32 %v2783, 7
      %v2785 = vsub.s32 3, %v2784
      %v2786 = vrot.slane %v2769, %v2785
      %v2787 = vlaneseq
      %v2788 = vshrl.u32 %v2787, 7
      %v2789 = vsub.s32 4, %v2788
      %v2790 = vrot.slane %v2769, %v2789
      %v2791 = vlaneseq
      %v2792 = vshrl.u32 %v2791, 7
      %v2793 = vsub.s32 5, %v2792
      %v2794 = vrot.slane %v2769, %v2793
      %v2795 = vlaneseq
      %v2796 = vshrl.u32 %v2795, 7
      %v2797 = vsub.s32 6, %v2796
      %v2798 = vrot.slane %v2769, %v2797
      %v2799 = vlaneseq
      %v2800 = vshrl.u32 %v2799, 7
      %v2801 = vsub.s32 7, %v2800
      %v2802 = vrot.slane %v2769, %v2801
      %v2811 = vmul.f32 %v420, %v2774
      %v2812 = vmul.f32 %v419, %v2778
      %v2813 = vmul.f32 %v418, %v2782
      %v2814 = vmul.f32 %v417, %v2786
      %v2815 = vmul.f32 %v416, %v2790
      %v2816 = vmul.f32 %v415, %v2794
      %v2817 = vmul.f32 %v414, %v2798
      %v2818 = vmul.f32 %v421, %v2802
      %v2827 = vcombine.low %v2811, %v2812
      %v2828 = vcombine.low %v2813, %v2814
      %v2829 = vcombine.low %v2815, %v2816
      %v2830 = vcombine.low %v2817, %v2818
      %v2832 = vunpack.c.l.s4 1966171168
      %v2833 = vunpack.c.0.s8 %v2832
      %v2834 = vlaneseq
      %v2835 = vshrl.u32 %v2834, 7
      %v2836 = vsub.s32 %v2833, %v2835
      %v2837 = vrot.slane %v2827, %v2836
      %v2839 = vunpack.c.l.s4 1966171168
      %v2840 = vunpack.c.0.s8 %v2839
      %v2841 = vlaneseq
      %v2842 = vshrl.u32 %v2841, 7
      %v2843 = vsub.s32 %v2840, %v2842
      %v2844 = vrot.slane %v2828, %v2843
      %v2846 = vunpack.c.l.s4 1966171168
      %v2847 = vunpack.c.0.s8 %v2846
      %v2848 = vlaneseq
      %v2849 = vshrl.u32 %v2848, 7
      %v2850 = vsub.s32 %v2847, %v2849
      %v2851 = vrot.slane %v2829, %v2850
      %v2853 = vunpack.c.l.s4 1966171168
      %v2854 = vunpack.c.0.s8 %v2853
      %v2855 = vlaneseq
      %v2856 = vshrl.u32 %v2855, 7
      %v2857 = vsub.s32 %v2854, %v2856
      %v2858 = vrot.slane %v2830, %v2857
      %v2859 = vcombine.low %v2837, %v2844
      %v2860 = vcombine.low %v2851, %v2858
      %v2862 = vunpack.c.l.s4 1966171168
      %v2863 = vunpack.c.0.s8 %v2862
      %v2864 = vlaneseq
      %v2865 = vshrl.u32 %v2864, 7
      %v2866 = vsub.s32 %v2863, %v2865
      %v2867 = vrot.slane %v2859, %v2866
      %v2869 = vunpack.c.l.s4 1966171168
      %v2870 = vunpack.c.0.s8 %v2869
      %v2871 = vlaneseq
      %v2872 = vshrl.u32 %v2871, 7
      %v2873 = vsub.s32 %v2870, %v2872
      %v2874 = vrot.slane %v2860, %v2873
      %v2875 = vcombine.low %v2867, %v2874
      %s2877 = scalar_lea.vmem [#allocation2], 130
      %2878 = vst [vmem:[%s2877] ss:$8 sm:$0xf] %v2875
      %2879 = vst [vmem:[%s2877] ss:$8 sm:$0xf0] %v2875
      %s2880 = scalar_lea.vmem %s3, 131
      %v2881 = vld [vmem:[%s2880] ss:$8 sm:$0xf]
      %v2882 = vld [vmem:[%s2880] ss:$8 sm:$0xf0]
      %v2883 = vor.u32 %v2881, %v2882
      %v2885 = vlaneseq
      %v2886 = vshrl.u32 %v2885, 7
      %v2887 = vsub.s32 0, %v2886
      %v2888 = vrot.slane %v2883, %v2887
      %v2889 = vlaneseq
      %v2890 = vshrl.u32 %v2889, 7
      %v2891 = vsub.s32 1, %v2890
      %v2892 = vrot.slane %v2883, %v2891
      %v2893 = vlaneseq
      %v2894 = vshrl.u32 %v2893, 7
      %v2895 = vsub.s32 2, %v2894
      %v2896 = vrot.slane %v2883, %v2895
      %v2897 = vlaneseq
      %v2898 = vshrl.u32 %v2897, 7
      %v2899 = vsub.s32 3, %v2898
      %v2900 = vrot.slane %v2883, %v2899
      %v2901 = vlaneseq
      %v2902 = vshrl.u32 %v2901, 7
      %v2903 = vsub.s32 4, %v2902
      %v2904 = vrot.slane %v2883, %v2903
      %v2905 = vlaneseq
      %v2906 = vshrl.u32 %v2905, 7
      %v2907 = vsub.s32 5, %v2906
      %v2908 = vrot.slane %v2883, %v2907
      %v2909 = vlaneseq
      %v2910 = vshrl.u32 %v2909, 7
      %v2911 = vsub.s32 6, %v2910
      %v2912 = vrot.slane %v2883, %v2911
      %v2913 = vlaneseq
      %v2914 = vshrl.u32 %v2913, 7
      %v2915 = vsub.s32 7, %v2914
      %v2916 = vrot.slane %v2883, %v2915
      %v2925 = vmul.f32 %v557, %v2888
      %v2926 = vmul.f32 %v556, %v2892
      %v2927 = vmul.f32 %v555, %v2896
      %v2928 = vmul.f32 %v554, %v2900
      %v2929 = vmul.f32 %v553, %v2904
      %v2930 = vmul.f32 %v552, %v2908
      %v2931 = vmul.f32 %v551, %v2912
      %v2932 = vmul.f32 %v558, %v2916
      %v2941 = vcombine.low %v2925, %v2926
      %v2942 = vcombine.low %v2927, %v2928
      %v2943 = vcombine.low %v2929, %v2930
      %v2944 = vcombine.low %v2931, %v2932
      %v2946 = vunpack.c.l.s4 1966171168
      %v2947 = vunpack.c.0.s8 %v2946
      %v2948 = vlaneseq
      %v2949 = vshrl.u32 %v2948, 7
      %v2950 = vsub.s32 %v2947, %v2949
      %v2951 = vrot.slane %v2941, %v2950
      %v2953 = vunpack.c.l.s4 1966171168
      %v2954 = vunpack.c.0.s8 %v2953
      %v2955 = vlaneseq
      %v2956 = vshrl.u32 %v2955, 7
      %v2957 = vsub.s32 %v2954, %v2956
      %v2958 = vrot.slane %v2942, %v2957
      %v2960 = vunpack.c.l.s4 1966171168
      %v2961 = vunpack.c.0.s8 %v2960
      %v2962 = vlaneseq
      %v2963 = vshrl.u32 %v2962, 7
      %v2964 = vsub.s32 %v2961, %v2963
      %v2965 = vrot.slane %v2943, %v2964
      %v2967 = vunpack.c.l.s4 1966171168
      %v2968 = vunpack.c.0.s8 %v2967
      %v2969 = vlaneseq
      %v2970 = vshrl.u32 %v2969, 7
      %v2971 = vsub.s32 %v2968, %v2970
      %v2972 = vrot.slane %v2944, %v2971
      %v2973 = vcombine.low %v2951, %v2958
      %v2974 = vcombine.low %v2965, %v2972
      %v2976 = vunpack.c.l.s4 1966171168
      %v2977 = vunpack.c.0.s8 %v2976
      %v2978 = vlaneseq
      %v2979 = vshrl.u32 %v2978, 7
      %v2980 = vsub.s32 %v2977, %v2979
      %v2981 = vrot.slane %v2973, %v2980
      %v2983 = vunpack.c.l.s4 1966171168
      %v2984 = vunpack.c.0.s8 %v2983
      %v2985 = vlaneseq
      %v2986 = vshrl.u32 %v2985, 7
      %v2987 = vsub.s32 %v2984, %v2986
      %v2988 = vrot.slane %v2974, %v2987
      %v2989 = vcombine.low %v2981, %v2988
      %s2991 = scalar_lea.vmem [#allocation2], 131
      %2992 = vst [vmem:[%s2991] ss:$8 sm:$0xf] %v2989
      %2993 = vst [vmem:[%s2991] ss:$8 sm:$0xf0] %v2989
      %s2994 = scalar_lea.vmem %s3, 132
      %v2995 = vld [vmem:[%s2994] ss:$8 sm:$0xf]
      %v2996 = vld [vmem:[%s2994] ss:$8 sm:$0xf0]
      %v2997 = vor.u32 %v2995, %v2996
      %v2999 = vlaneseq
      %v3000 = vshrl.u32 %v2999, 7
      %v3001 = vsub.s32 0, %v3000
      %v3002 = vrot.slane %v2997, %v3001
      %v3003 = vlaneseq
      %v3004 = vshrl.u32 %v3003, 7
      %v3005 = vsub.s32 1, %v3004
      %v3006 = vrot.slane %v2997, %v3005
      %v3007 = vlaneseq
      %v3008 = vshrl.u32 %v3007, 7
      %v3009 = vsub.s32 2, %v3008
      %v3010 = vrot.slane %v2997, %v3009
      %v3011 = vlaneseq
      %v3012 = vshrl.u32 %v3011, 7
      %v3013 = vsub.s32 3, %v3012
      %v3014 = vrot.slane %v2997, %v3013
      %v3015 = vlaneseq
      %v3016 = vshrl.u32 %v3015, 7
      %v3017 = vsub.s32 4, %v3016
      %v3018 = vrot.slane %v2997, %v3017
      %v3019 = vlaneseq
      %v3020 = vshrl.u32 %v3019, 7
      %v3021 = vsub.s32 5, %v3020
      %v3022 = vrot.slane %v2997, %v3021
      %v3023 = vlaneseq
      %v3024 = vshrl.u32 %v3023, 7
      %v3025 = vsub.s32 6, %v3024
      %v3026 = vrot.slane %v2997, %v3025
      %v3027 = vlaneseq
      %v3028 = vshrl.u32 %v3027, 7
      %v3029 = vsub.s32 7, %v3028
      %v3030 = vrot.slane %v2997, %v3029
      %v3039 = vmul.f32 %v696, %v3002
      %v3040 = vmul.f32 %v695, %v3006
      %v3041 = vmul.f32 %v694, %v3010
      %v3042 = vmul.f32 %v693, %v3014
      %v3043 = vmul.f32 %v692, %v3018
      %v3044 = vmul.f32 %v691, %v3022
      %v3045 = vmul.f32 %v690, %v3026
      %v3046 = vmul.f32 %v697, %v3030
      %v3055 = vcombine.low %v3039, %v3040
      %v3056 = vcombine.low %v3041, %v3042
      %v3057 = vcombine.low %v3043, %v3044
      %v3058 = vcombine.low %v3045, %v3046
      %v3060 = vunpack.c.l.s4 1966171168
      %v3061 = vunpack.c.0.s8 %v3060
      %v3062 = vlaneseq
      %v3063 = vshrl.u32 %v3062, 7
      %v3064 = vsub.s32 %v3061, %v3063
      %v3065 = vrot.slane %v3055, %v3064
      %v3067 = vunpack.c.l.s4 1966171168
      %v3068 = vunpack.c.0.s8 %v3067
      %v3069 = vlaneseq
      %v3070 = vshrl.u32 %v3069, 7
      %v3071 = vsub.s32 %v3068, %v3070
      %v3072 = vrot.slane %v3056, %v3071
      %v3074 = vunpack.c.l.s4 1966171168
      %v3075 = vunpack.c.0.s8 %v3074
      %v3076 = vlaneseq
      %v3077 = vshrl.u32 %v3076, 7
      %v3078 = vsub.s32 %v3075, %v3077
      %v3079 = vrot.slane %v3057, %v3078
      %v3081 = vunpack.c.l.s4 1966171168
      %v3082 = vunpack.c.0.s8 %v3081
      %v3083 = vlaneseq
      %v3084 = vshrl.u32 %v3083, 7
      %v3085 = vsub.s32 %v3082, %v3084
      %v3086 = vrot.slane %v3058, %v3085
      %v3087 = vcombine.low %v3065, %v3072
      %v3088 = vcombine.low %v3079, %v3086
      %v3090 = vunpack.c.l.s4 1966171168
      %v3091 = vunpack.c.0.s8 %v3090
      %v3092 = vlaneseq
      %v3093 = vshrl.u32 %v3092, 7
      %v3094 = vsub.s32 %v3091, %v3093
      %v3095 = vrot.slane %v3087, %v3094
      %v3097 = vunpack.c.l.s4 1966171168
      %v3098 = vunpack.c.0.s8 %v3097
      %v3099 = vlaneseq
      %v3100 = vshrl.u32 %v3099, 7
      %v3101 = vsub.s32 %v3098, %v3100
      %v3102 = vrot.slane %v3088, %v3101
      %v3103 = vcombine.low %v3095, %v3102
      %s3105 = scalar_lea.vmem [#allocation2], 132
      %3106 = vst [vmem:[%s3105] ss:$8 sm:$0xf] %v3103
      %3107 = vst [vmem:[%s3105] ss:$8 sm:$0xf0] %v3103
      %s3108 = scalar_lea.vmem %s3, 133
      %v3109 = vld [vmem:[%s3108] ss:$8 sm:$0xf]
      %v3110 = vld [vmem:[%s3108] ss:$8 sm:$0xf0]
      %v3111 = vor.u32 %v3109, %v3110
      %v3113 = vlaneseq
      %v3114 = vshrl.u32 %v3113, 7
      %v3115 = vsub.s32 0, %v3114
      %v3116 = vrot.slane %v3111, %v3115
      %v3117 = vlaneseq
      %v3118 = vshrl.u32 %v3117, 7
      %v3119 = vsub.s32 1, %v3118
      %v3120 = vrot.slane %v3111, %v3119
      %v3121 = vlaneseq
      %v3122 = vshrl.u32 %v3121, 7
      %v3123 = vsub.s32 2, %v3122
      %v3124 = vrot.slane %v3111, %v3123
      %v3125 = vlaneseq
      %v3126 = vshrl.u32 %v3125, 7
      %v3127 = vsub.s32 3, %v3126
      %v3128 = vrot.slane %v3111, %v3127
      %v3129 = vlaneseq
      %v3130 = vshrl.u32 %v3129, 7
      %v3131 = vsub.s32 4, %v3130
      %v3132 = vrot.slane %v3111, %v3131
      %v3133 = vlaneseq
      %v3134 = vshrl.u32 %v3133, 7
      %v3135 = vsub.s32 5, %v3134
      %v3136 = vrot.slane %v3111, %v3135
      %v3137 = vlaneseq
      %v3138 = vshrl.u32 %v3137, 7
      %v3139 = vsub.s32 6, %v3138
      %v3140 = vrot.slane %v3111, %v3139
      %v3141 = vlaneseq
      %v3142 = vshrl.u32 %v3141, 7
      %v3143 = vsub.s32 7, %v3142
      %v3144 = vrot.slane %v3111, %v3143
      %v3153 = vmul.f32 %v835, %v3116
      %v3154 = vmul.f32 %v834, %v3120
      %v3155 = vmul.f32 %v833, %v3124
      %v3156 = vmul.f32 %v832, %v3128
      %v3157 = vmul.f32 %v831, %v3132
      %v3158 = vmul.f32 %v830, %v3136
      %v3159 = vmul.f32 %v829, %v3140
      %v3160 = vmul.f32 %v836, %v3144
      %v3169 = vcombine.low %v3153, %v3154
      %v3170 = vcombine.low %v3155, %v3156
      %v3171 = vcombine.low %v3157, %v3158
      %v3172 = vcombine.low %v3159, %v3160
      %v3174 = vunpack.c.l.s4 1966171168
      %v3175 = vunpack.c.0.s8 %v3174
      %v3176 = vlaneseq
      %v3177 = vshrl.u32 %v3176, 7
      %v3178 = vsub.s32 %v3175, %v3177
      %v3179 = vrot.slane %v3169, %v3178
      %v3181 = vunpack.c.l.s4 1966171168
      %v3182 = vunpack.c.0.s8 %v3181
      %v3183 = vlaneseq
      %v3184 = vshrl.u32 %v3183, 7
      %v3185 = vsub.s32 %v3182, %v3184
      %v3186 = vrot.slane %v3170, %v3185
      %v3188 = vunpack.c.l.s4 1966171168
      %v3189 = vunpack.c.0.s8 %v3188
      %v3190 = vlaneseq
      %v3191 = vshrl.u32 %v3190, 7
      %v3192 = vsub.s32 %v3189, %v3191
      %v3193 = vrot.slane %v3171, %v3192
      %v3195 = vunpack.c.l.s4 1966171168
      %v3196 = vunpack.c.0.s8 %v3195
      %v3197 = vlaneseq
      %v3198 = vshrl.u32 %v3197, 7
      %v3199 = vsub.s32 %v3196, %v3198
      %v3200 = vrot.slane %v3172, %v3199
      %v3201 = vcombine.low %v3179, %v3186
      %v3202 = vcombine.low %v3193, %v3200
      %v3204 = vunpack.c.l.s4 1966171168
      %v3205 = vunpack.c.0.s8 %v3204
      %v3206 = vlaneseq
      %v3207 = vshrl.u32 %v3206, 7
      %v3208 = vsub.s32 %v3205, %v3207
      %v3209 = vrot.slane %v3201, %v3208
      %v3211 = vunpack.c.l.s4 1966171168
      %v3212 = vunpack.c.0.s8 %v3211
      %v3213 = vlaneseq
      %v3214 = vshrl.u32 %v3213, 7
      %v3215 = vsub.s32 %v3212, %v3214
      %v3216 = vrot.slane %v3202, %v3215
      %v3217 = vcombine.low %v3209, %v3216
      %s3219 = scalar_lea.vmem [#allocation2], 133
      %3220 = vst [vmem:[%s3219] ss:$8 sm:$0xf] %v3217
      %3221 = vst [vmem:[%s3219] ss:$8 sm:$0xf0] %v3217
      %s3222 = scalar_lea.vmem %s3, 134
      %v3223 = vld [vmem:[%s3222] ss:$8 sm:$0xf]
      %v3224 = vld [vmem:[%s3222] ss:$8 sm:$0xf0]
      %v3225 = vor.u32 %v3223, %v3224
      %v3227 = vlaneseq
      %v3228 = vshrl.u32 %v3227, 7
      %v3229 = vsub.s32 0, %v3228
      %v3230 = vrot.slane %v3225, %v3229
      %v3231 = vlaneseq
      %v3232 = vshrl.u32 %v3231, 7
      %v3233 = vsub.s32 1, %v3232
      %v3234 = vrot.slane %v3225, %v3233
      %v3235 = vlaneseq
      %v3236 = vshrl.u32 %v3235, 7
      %v3237 = vsub.s32 2, %v3236
      %v3238 = vrot.slane %v3225, %v3237
      %v3239 = vlaneseq
      %v3240 = vshrl.u32 %v3239, 7
      %v3241 = vsub.s32 3, %v3240
      %v3242 = vrot.slane %v3225, %v3241
      %v3243 = vlaneseq
      %v3244 = vshrl.u32 %v3243, 7
      %v3245 = vsub.s32 4, %v3244
      %v3246 = vrot.slane %v3225, %v3245
      %v3247 = vlaneseq
      %v3248 = vshrl.u32 %v3247, 7
      %v3249 = vsub.s32 5, %v3248
      %v3250 = vrot.slane %v3225, %v3249
      %v3251 = vlaneseq
      %v3252 = vshrl.u32 %v3251, 7
      %v3253 = vsub.s32 6, %v3252
      %v3254 = vrot.slane %v3225, %v3253
      %v3255 = vlaneseq
      %v3256 = vshrl.u32 %v3255, 7
      %v3257 = vsub.s32 7, %v3256
      %v3258 = vrot.slane %v3225, %v3257
      %v3267 = vmul.f32 %v974, %v3230
      %v3268 = vmul.f32 %v973, %v3234
      %v3269 = vmul.f32 %v972, %v3238
      %v3270 = vmul.f32 %v971, %v3242
      %v3271 = vmul.f32 %v970, %v3246
      %v3272 = vmul.f32 %v969, %v3250
      %v3273 = vmul.f32 %v968, %v3254
      %v3274 = vmul.f32 %v975, %v3258
      %v3283 = vcombine.low %v3267, %v3268
      %v3284 = vcombine.low %v3269, %v3270
      %v3285 = vcombine.low %v3271, %v3272
      %v3286 = vcombine.low %v3273, %v3274
      %v3288 = vunpack.c.l.s4 1966171168
      %v3289 = vunpack.c.0.s8 %v3288
      %v3290 = vlaneseq
      %v3291 = vshrl.u32 %v3290, 7
      %v3292 = vsub.s32 %v3289, %v3291
      %v3293 = vrot.slane %v3283, %v3292
      %v3295 = vunpack.c.l.s4 1966171168
      %v3296 = vunpack.c.0.s8 %v3295
      %v3297 = vlaneseq
      %v3298 = vshrl.u32 %v3297, 7
      %v3299 = vsub.s32 %v3296, %v3298
      %v3300 = vrot.slane %v3284, %v3299
      %v3302 = vunpack.c.l.s4 1966171168
      %v3303 = vunpack.c.0.s8 %v3302
      %v3304 = vlaneseq
      %v3305 = vshrl.u32 %v3304, 7
      %v3306 = vsub.s32 %v3303, %v3305
      %v3307 = vrot.slane %v3285, %v3306
      %v3309 = vunpack.c.l.s4 1966171168
      %v3310 = vunpack.c.0.s8 %v3309
      %v3311 = vlaneseq
      %v3312 = vshrl.u32 %v3311, 7
      %v3313 = vsub.s32 %v3310, %v3312
      %v3314 = vrot.slane %v3286, %v3313
      %v3315 = vcombine.low %v3293, %v3300
      %v3316 = vcombine.low %v3307, %v3314
      %v3318 = vunpack.c.l.s4 1966171168
      %v3319 = vunpack.c.0.s8 %v3318
      %v3320 = vlaneseq
      %v3321 = vshrl.u32 %v3320, 7
      %v3322 = vsub.s32 %v3319, %v3321
      %v3323 = vrot.slane %v3315, %v3322
      %v3325 = vunpack.c.l.s4 1966171168
      %v3326 = vunpack.c.0.s8 %v3325
      %v3327 = vlaneseq
      %v3328 = vshrl.u32 %v3327, 7
      %v3329 = vsub.s32 %v3326, %v3328
      %v3330 = vrot.slane %v3316, %v3329
      %v3331 = vcombine.low %v3323, %v3330
      %s3333 = scalar_lea.vmem [#allocation2], 134
      %3334 = vst [vmem:[%s3333] ss:$8 sm:$0xf] %v3331
      %3335 = vst [vmem:[%s3333] ss:$8 sm:$0xf0] %v3331
      %s3336 = scalar_lea.vmem %s3, 135
      %v3337 = vld [vmem:[%s3336] ss:$8 sm:$0xf]
      %v3338 = vld [vmem:[%s3336] ss:$8 sm:$0xf0]
      %v3339 = vor.u32 %v3337, %v3338
      %v3341 = vlaneseq
      %v3342 = vshrl.u32 %v3341, 7
      %v3343 = vsub.s32 0, %v3342
      %v3344 = vrot.slane %v3339, %v3343
      %v3345 = vlaneseq
      %v3346 = vshrl.u32 %v3345, 7
      %v3347 = vsub.s32 1, %v3346
      %v3348 = vrot.slane %v3339, %v3347
      %v3349 = vlaneseq
      %v3350 = vshrl.u32 %v3349, 7
      %v3351 = vsub.s32 2, %v3350
      %v3352 = vrot.slane %v3339, %v3351
      %v3353 = vlaneseq
      %v3354 = vshrl.u32 %v3353, 7
      %v3355 = vsub.s32 3, %v3354
      %v3356 = vrot.slane %v3339, %v3355
      %v3357 = vlaneseq
      %v3358 = vshrl.u32 %v3357, 7
      %v3359 = vsub.s32 4, %v3358
      %v3360 = vrot.slane %v3339, %v3359
      %v3361 = vlaneseq
      %v3362 = vshrl.u32 %v3361, 7
      %v3363 = vsub.s32 5, %v3362
      %v3364 = vrot.slane %v3339, %v3363
      %v3365 = vlaneseq
      %v3366 = vshrl.u32 %v3365, 7
      %v3367 = vsub.s32 6, %v3366
      %v3368 = vrot.slane %v3339, %v3367
      %v3369 = vlaneseq
      %v3370 = vshrl.u32 %v3369, 7
      %v3371 = vsub.s32 7, %v3370
      %v3372 = vrot.slane %v3339, %v3371
      %v3381 = vmul.f32 %v1113, %v3344
      %v3382 = vmul.f32 %v1112, %v3348
      %v3383 = vmul.f32 %v1111, %v3352
      %v3384 = vmul.f32 %v1110, %v3356
      %v3385 = vmul.f32 %v1109, %v3360
      %v3386 = vmul.f32 %v1108, %v3364
      %v3387 = vmul.f32 %v1107, %v3368
      %v3388 = vmul.f32 %v1114, %v3372
      %v3397 = vcombine.low %v3381, %v3382
      %v3398 = vcombine.low %v3383, %v3384
      %v3399 = vcombine.low %v3385, %v3386
      %v3400 = vcombine.low %v3387, %v3388
      %v3402 = vunpack.c.l.s4 1966171168
      %v3403 = vunpack.c.0.s8 %v3402
      %v3404 = vlaneseq
      %v3405 = vshrl.u32 %v3404, 7
      %v3406 = vsub.s32 %v3403, %v3405
      %v3407 = vrot.slane %v3397, %v3406
      %v3409 = vunpack.c.l.s4 1966171168
      %v3410 = vunpack.c.0.s8 %v3409
      %v3411 = vlaneseq
      %v3412 = vshrl.u32 %v3411, 7
      %v3413 = vsub.s32 %v3410, %v3412
      %v3414 = vrot.slane %v3398, %v3413
      %v3416 = vunpack.c.l.s4 1966171168
      %v3417 = vunpack.c.0.s8 %v3416
      %v3418 = vlaneseq
      %v3419 = vshrl.u32 %v3418, 7
      %v3420 = vsub.s32 %v3417, %v3419
      %v3421 = vrot.slane %v3399, %v3420
      %v3423 = vunpack.c.l.s4 1966171168
      %v3424 = vunpack.c.0.s8 %v3423
      %v3425 = vlaneseq
      %v3426 = vshrl.u32 %v3425, 7
      %v3427 = vsub.s32 %v3424, %v3426
      %v3428 = vrot.slane %v3400, %v3427
      %v3429 = vcombine.low %v3407, %v3414
      %v3430 = vcombine.low %v3421, %v3428
      %v3432 = vunpack.c.l.s4 1966171168
      %v3433 = vunpack.c.0.s8 %v3432
      %v3434 = vlaneseq
      %v3435 = vshrl.u32 %v3434, 7
      %v3436 = vsub.s32 %v3433, %v3435
      %v3437 = vrot.slane %v3429, %v3436
      %v3439 = vunpack.c.l.s4 1966171168
      %v3440 = vunpack.c.0.s8 %v3439
      %v3441 = vlaneseq
      %v3442 = vshrl.u32 %v3441, 7
      %v3443 = vsub.s32 %v3440, %v3442
      %v3444 = vrot.slane %v3430, %v3443
      %v3445 = vcombine.low %v3437, %v3444
      %s3447 = scalar_lea.vmem [#allocation2], 135
      %3448 = vst [vmem:[%s3447] ss:$8 sm:$0xf] %v3445
      %3449 = vst [vmem:[%s3447] ss:$8 sm:$0xf0] %v3445
      %s3450 = scalar_lea.vmem %s3, 192
      %v3451 = vld [vmem:[%s3450] ss:$8 sm:$0xf]
      %v3452 = vld [vmem:[%s3450] ss:$8 sm:$0xf0]
      %v3453 = vor.u32 %v3451, %v3452
      %v3455 = vlaneseq
      %v3456 = vshrl.u32 %v3455, 7
      %v3457 = vsub.s32 0, %v3456
      %v3458 = vrot.slane %v3453, %v3457
      %v3459 = vlaneseq
      %v3460 = vshrl.u32 %v3459, 7
      %v3461 = vsub.s32 1, %v3460
      %v3462 = vrot.slane %v3453, %v3461
      %v3463 = vlaneseq
      %v3464 = vshrl.u32 %v3463, 7
      %v3465 = vsub.s32 2, %v3464
      %v3466 = vrot.slane %v3453, %v3465
      %v3467 = vlaneseq
      %v3468 = vshrl.u32 %v3467, 7
      %v3469 = vsub.s32 3, %v3468
      %v3470 = vrot.slane %v3453, %v3469
      %v3471 = vlaneseq
      %v3472 = vshrl.u32 %v3471, 7
      %v3473 = vsub.s32 4, %v3472
      %v3474 = vrot.slane %v3453, %v3473
      %v3475 = vlaneseq
      %v3476 = vshrl.u32 %v3475, 7
      %v3477 = vsub.s32 5, %v3476
      %v3478 = vrot.slane %v3453, %v3477
      %v3479 = vlaneseq
      %v3480 = vshrl.u32 %v3479, 7
      %v3481 = vsub.s32 6, %v3480
      %v3482 = vrot.slane %v3453, %v3481
      %v3483 = vlaneseq
      %v3484 = vshrl.u32 %v3483, 7
      %v3485 = vsub.s32 7, %v3484
      %v3486 = vrot.slane %v3453, %v3485
      %v3495 = vmul.f32 %v1252, %v3458
      %v3496 = vmul.f32 %v1251, %v3462
      %v3497 = vmul.f32 %v1250, %v3466
      %v3498 = vmul.f32 %v1249, %v3470
      %v3499 = vmul.f32 %v1248, %v3474
      %v3500 = vmul.f32 %v1247, %v3478
      %v3501 = vmul.f32 %v1246, %v3482
      %v3502 = vmul.f32 %v1253, %v3486
      %v3511 = vcombine.low %v3495, %v3496
      %v3512 = vcombine.low %v3497, %v3498
      %v3513 = vcombine.low %v3499, %v3500
      %v3514 = vcombine.low %v3501, %v3502
      %v3516 = vunpack.c.l.s4 1966171168
      %v3517 = vunpack.c.0.s8 %v3516
      %v3518 = vlaneseq
      %v3519 = vshrl.u32 %v3518, 7
      %v3520 = vsub.s32 %v3517, %v3519
      %v3521 = vrot.slane %v3511, %v3520
      %v3523 = vunpack.c.l.s4 1966171168
      %v3524 = vunpack.c.0.s8 %v3523
      %v3525 = vlaneseq
      %v3526 = vshrl.u32 %v3525, 7
      %v3527 = vsub.s32 %v3524, %v3526
      %v3528 = vrot.slane %v3512, %v3527
      %v3530 = vunpack.c.l.s4 1966171168
      %v3531 = vunpack.c.0.s8 %v3530
      %v3532 = vlaneseq
      %v3533 = vshrl.u32 %v3532, 7
      %v3534 = vsub.s32 %v3531, %v3533
      %v3535 = vrot.slane %v3513, %v3534
      %v3537 = vunpack.c.l.s4 1966171168
      %v3538 = vunpack.c.0.s8 %v3537
      %v3539 = vlaneseq
      %v3540 = vshrl.u32 %v3539, 7
      %v3541 = vsub.s32 %v3538, %v3540
      %v3542 = vrot.slane %v3514, %v3541
      %v3543 = vcombine.low %v3521, %v3528
      %v3544 = vcombine.low %v3535, %v3542
      %v3546 = vunpack.c.l.s4 1966171168
      %v3547 = vunpack.c.0.s8 %v3546
      %v3548 = vlaneseq
      %v3549 = vshrl.u32 %v3548, 7
      %v3550 = vsub.s32 %v3547, %v3549
      %v3551 = vrot.slane %v3543, %v3550
      %v3553 = vunpack.c.l.s4 1966171168
      %v3554 = vunpack.c.0.s8 %v3553
      %v3555 = vlaneseq
      %v3556 = vshrl.u32 %v3555, 7
      %v3557 = vsub.s32 %v3554, %v3556
      %v3558 = vrot.slane %v3544, %v3557
      %v3559 = vcombine.low %v3551, %v3558
      %s3561 = scalar_lea.vmem [#allocation2], 192
      %3562 = vst [vmem:[%s3561] ss:$8 sm:$0xf] %v3559
      %3563 = vst [vmem:[%s3561] ss:$8 sm:$0xf0] %v3559
      %s3564 = scalar_lea.vmem %s3, 193
      %v3565 = vld [vmem:[%s3564] ss:$8 sm:$0xf]
      %v3566 = vld [vmem:[%s3564] ss:$8 sm:$0xf0]
      %v3567 = vor.u32 %v3565, %v3566
      %v3569 = vlaneseq
      %v3570 = vshrl.u32 %v3569, 7
      %v3571 = vsub.s32 0, %v3570
      %v3572 = vrot.slane %v3567, %v3571
      %v3573 = vlaneseq
      %v3574 = vshrl.u32 %v3573, 7
      %v3575 = vsub.s32 1, %v3574
      %v3576 = vrot.slane %v3567, %v3575
      %v3577 = vlaneseq
      %v3578 = vshrl.u32 %v3577, 7
      %v3579 = vsub.s32 2, %v3578
      %v3580 = vrot.slane %v3567, %v3579
      %v3581 = vlaneseq
      %v3582 = vshrl.u32 %v3581, 7
      %v3583 = vsub.s32 3, %v3582
      %v3584 = vrot.slane %v3567, %v3583
      %v3585 = vlaneseq
      %v3586 = vshrl.u32 %v3585, 7
      %v3587 = vsub.s32 4, %v3586
      %v3588 = vrot.slane %v3567, %v3587
      %v3589 = vlaneseq
      %v3590 = vshrl.u32 %v3589, 7
      %v3591 = vsub.s32 5, %v3590
      %v3592 = vrot.slane %v3567, %v3591
      %v3593 = vlaneseq
      %v3594 = vshrl.u32 %v3593, 7
      %v3595 = vsub.s32 6, %v3594
      %v3596 = vrot.slane %v3567, %v3595
      %v3597 = vlaneseq
      %v3598 = vshrl.u32 %v3597, 7
      %v3599 = vsub.s32 7, %v3598
      %v3600 = vrot.slane %v3567, %v3599
      %v3609 = vmul.f32 %v1391, %v3572
      %v3610 = vmul.f32 %v1390, %v3576
      %v3611 = vmul.f32 %v1389, %v3580
      %v3612 = vmul.f32 %v1388, %v3584
      %v3613 = vmul.f32 %v1387, %v3588
      %v3614 = vmul.f32 %v1386, %v3592
      %v3615 = vmul.f32 %v1385, %v3596
      %v3616 = vmul.f32 %v1392, %v3600
      %v3625 = vcombine.low %v3609, %v3610
      %v3626 = vcombine.low %v3611, %v3612
      %v3627 = vcombine.low %v3613, %v3614
      %v3628 = vcombine.low %v3615, %v3616
      %v3630 = vunpack.c.l.s4 1966171168
      %v3631 = vunpack.c.0.s8 %v3630
      %v3632 = vlaneseq
      %v3633 = vshrl.u32 %v3632, 7
      %v3634 = vsub.s32 %v3631, %v3633
      %v3635 = vrot.slane %v3625, %v3634
      %v3637 = vunpack.c.l.s4 1966171168
      %v3638 = vunpack.c.0.s8 %v3637
      %v3639 = vlaneseq
      %v3640 = vshrl.u32 %v3639, 7
      %v3641 = vsub.s32 %v3638, %v3640
      %v3642 = vrot.slane %v3626, %v3641
      %v3644 = vunpack.c.l.s4 1966171168
      %v3645 = vunpack.c.0.s8 %v3644
      %v3646 = vlaneseq
      %v3647 = vshrl.u32 %v3646, 7
      %v3648 = vsub.s32 %v3645, %v3647
      %v3649 = vrot.slane %v3627, %v3648
      %v3651 = vunpack.c.l.s4 1966171168
      %v3652 = vunpack.c.0.s8 %v3651
      %v3653 = vlaneseq
      %v3654 = vshrl.u32 %v3653, 7
      %v3655 = vsub.s32 %v3652, %v3654
      %v3656 = vrot.slane %v3628, %v3655
      %v3657 = vcombine.low %v3635, %v3642
      %v3658 = vcombine.low %v3649, %v3656
      %v3660 = vunpack.c.l.s4 1966171168
      %v3661 = vunpack.c.0.s8 %v3660
      %v3662 = vlaneseq
      %v3663 = vshrl.u32 %v3662, 7
      %v3664 = vsub.s32 %v3661, %v3663
      %v3665 = vrot.slane %v3657, %v3664
      %v3667 = vunpack.c.l.s4 1966171168
      %v3668 = vunpack.c.0.s8 %v3667
      %v3669 = vlaneseq
      %v3670 = vshrl.u32 %v3669, 7
      %v3671 = vsub.s32 %v3668, %v3670
      %v3672 = vrot.slane %v3658, %v3671
      %v3673 = vcombine.low %v3665, %v3672
      %s3675 = scalar_lea.vmem [#allocation2], 193
      %3676 = vst [vmem:[%s3675] ss:$8 sm:$0xf] %v3673
      %3677 = vst [vmem:[%s3675] ss:$8 sm:$0xf0] %v3673
      %s3678 = scalar_lea.vmem %s3, 194
      %v3679 = vld [vmem:[%s3678] ss:$8 sm:$0xf]
      %v3680 = vld [vmem:[%s3678] ss:$8 sm:$0xf0]
      %v3681 = vor.u32 %v3679, %v3680
      %v3683 = vlaneseq
      %v3684 = vshrl.u32 %v3683, 7
      %v3685 = vsub.s32 0, %v3684
      %v3686 = vrot.slane %v3681, %v3685
      %v3687 = vlaneseq
      %v3688 = vshrl.u32 %v3687, 7
      %v3689 = vsub.s32 1, %v3688
      %v3690 = vrot.slane %v3681, %v3689
      %v3691 = vlaneseq
      %v3692 = vshrl.u32 %v3691, 7
      %v3693 = vsub.s32 2, %v3692
      %v3694 = vrot.slane %v3681, %v3693
      %v3695 = vlaneseq
      %v3696 = vshrl.u32 %v3695, 7
      %v3697 = vsub.s32 3, %v3696
      %v3698 = vrot.slane %v3681, %v3697
      %v3699 = vlaneseq
      %v3700 = vshrl.u32 %v3699, 7
      %v3701 = vsub.s32 4, %v3700
      %v3702 = vrot.slane %v3681, %v3701
      %v3703 = vlaneseq
      %v3704 = vshrl.u32 %v3703, 7
      %v3705 = vsub.s32 5, %v3704
      %v3706 = vrot.slane %v3681, %v3705
      %v3707 = vlaneseq
      %v3708 = vshrl.u32 %v3707, 7
      %v3709 = vsub.s32 6, %v3708
      %v3710 = vrot.slane %v3681, %v3709
      %v3711 = vlaneseq
      %v3712 = vshrl.u32 %v3711, 7
      %v3713 = vsub.s32 7, %v3712
      %v3714 = vrot.slane %v3681, %v3713
      %v3723 = vmul.f32 %v1530, %v3686
      %v3724 = vmul.f32 %v1529, %v3690
      %v3725 = vmul.f32 %v1528, %v3694
      %v3726 = vmul.f32 %v1527, %v3698
      %v3727 = vmul.f32 %v1526, %v3702
      %v3728 = vmul.f32 %v1525, %v3706
      %v3729 = vmul.f32 %v1524, %v3710
      %v3730 = vmul.f32 %v1531, %v3714
      %v3739 = vcombine.low %v3723, %v3724
      %v3740 = vcombine.low %v3725, %v3726
      %v3741 = vcombine.low %v3727, %v3728
      %v3742 = vcombine.low %v3729, %v3730
      %v3744 = vunpack.c.l.s4 1966171168
      %v3745 = vunpack.c.0.s8 %v3744
      %v3746 = vlaneseq
      %v3747 = vshrl.u32 %v3746, 7
      %v3748 = vsub.s32 %v3745, %v3747
      %v3749 = vrot.slane %v3739, %v3748
      %v3751 = vunpack.c.l.s4 1966171168
      %v3752 = vunpack.c.0.s8 %v3751
      %v3753 = vlaneseq
      %v3754 = vshrl.u32 %v3753, 7
      %v3755 = vsub.s32 %v3752, %v3754
      %v3756 = vrot.slane %v3740, %v3755
      %v3758 = vunpack.c.l.s4 1966171168
      %v3759 = vunpack.c.0.s8 %v3758
      %v3760 = vlaneseq
      %v3761 = vshrl.u32 %v3760, 7
      %v3762 = vsub.s32 %v3759, %v3761
      %v3763 = vrot.slane %v3741, %v3762
      %v3765 = vunpack.c.l.s4 1966171168
      %v3766 = vunpack.c.0.s8 %v3765
      %v3767 = vlaneseq
      %v3768 = vshrl.u32 %v3767, 7
      %v3769 = vsub.s32 %v3766, %v3768
      %v3770 = vrot.slane %v3742, %v3769
      %v3771 = vcombine.low %v3749, %v3756
      %v3772 = vcombine.low %v3763, %v3770
      %v3774 = vunpack.c.l.s4 1966171168
      %v3775 = vunpack.c.0.s8 %v3774
      %v3776 = vlaneseq
      %v3777 = vshrl.u32 %v3776, 7
      %v3778 = vsub.s32 %v3775, %v3777
      %v3779 = vrot.slane %v3771, %v3778
      %v3781 = vunpack.c.l.s4 1966171168
      %v3782 = vunpack.c.0.s8 %v3781
      %v3783 = vlaneseq
      %v3784 = vshrl.u32 %v3783, 7
      %v3785 = vsub.s32 %v3782, %v3784
      %v3786 = vrot.slane %v3772, %v3785
      %v3787 = vcombine.low %v3779, %v3786
      %s3789 = scalar_lea.vmem [#allocation2], 194
      %3790 = vst [vmem:[%s3789] ss:$8 sm:$0xf] %v3787
      %3791 = vst [vmem:[%s3789] ss:$8 sm:$0xf0] %v3787
      %v3792 = vld [vmem:[%s1] sm:$0x3f]
      %v3793 = vld [vmem:[#allocation2] sm:$0xff]
      %v3794 = vld [vmem:[#allocation2 + $0x8] sm:$0xff]
      %v3795 = vld [vmem:[#allocation2 + $0x10] sm:$0xff]
      %v3796 = vld [vmem:[#allocation2 + $0x18] sm:$0xff]
      %v3797 = vld [vmem:[#allocation2 + $0x20] sm:$0xff]
      %v3798 = vld [vmem:[#allocation2 + $0x28] sm:$0xff]
      %v3799 = vld [vmem:[#allocation2 + $0x30] sm:$0xff]
      %v3800 = vld [vmem:[#allocation2 + $0x38] sm:$0xff]
      %v3801 = vld [vmem:[#allocation2 + $0x40] sm:$0xff]
      %v3802 = vld [vmem:[#allocation2 + $0x48] sm:$0xff]
      %v3803 = vld [vmem:[#allocation2 + $0x50] sm:$0xff]
      %v3804 = vld [vmem:[#allocation2 + $0x58] sm:$0xff]
      %v3805 = vld [vmem:[#allocation2 + $0x60] sm:$0xff]
      %v3806 = vld [vmem:[#allocation2 + $0x68] sm:$0xff]
      %v3807 = vld [vmem:[#allocation2 + $0x70] sm:$0xff]
      %v3808 = vld [vmem:[#allocation2 + $0x78] sm:$0xff]
      %v3809 = vld [vmem:[#allocation2 + $0x80] sm:$0xff]
      %v3810 = vld [vmem:[#allocation2 + $0x88] sm:$0xff]
      %v3811 = vld [vmem:[#allocation2 + $0x90] sm:$0xff]
      %v3812 = vld [vmem:[#allocation2 + $0x98] sm:$0xff]
      %v3813 = vld [vmem:[#allocation2 + $0xa0] sm:$0xff]
      %v3814 = vld [vmem:[#allocation2 + $0xa8] sm:$0xff]
      %v3815 = vld [vmem:[#allocation2 + $0xb0] sm:$0xff]
      %v3816 = vld [vmem:[#allocation2 + $0xb8] sm:$0xff]
      %v3817 = vld [vmem:[#allocation2 + $0xc0] sm:$0x7]
      %v3818 = vld [vmem:[#allocation2 + $0xc8] sm:$0x7]
      %v3819 = vld [vmem:[#allocation2 + $0xd0] sm:$0x7]
      %v3820 = vld [vmem:[#allocation2 + $0xd8] sm:$0x7]
      %v3821 = vld [vmem:[#allocation2 + $0xe0] sm:$0x7]
      %v3822 = vld [vmem:[#allocation2 + $0xe8] sm:$0x7]
      %v3823 = vld [vmem:[#allocation2 + $0xf0] sm:$0x7]
      %v3824 = vld [vmem:[#allocation2 + $0xf8] sm:$0x7]
      %v3825 = vld [vmem:[%s2] sm:$0x3f]
      %3827 = vset.pattern.permute.xlu0 0
      %3828 = vperm.xlu0 %3827, %v3825
      %v3829 = vpop.permute.xlu0 %3828
      %vm3831 = vcmask 220160
      %v3833 = vsel %vm3831, %v3792, 0
      %vm3835 = vcmask 1042432
      %v3837 = vsel %vm3835, %v3817, 0
      %v3840 = vsel %vm3835, %v3818, 0
      %v3843 = vsel %vm3835, %v3819, 0
      %v3846 = vsel %vm3835, %v3820, 0
      %v3849 = vsel %vm3835, %v3821, 0
      %v3852 = vsel %vm3835, %v3822, 0
      %v3855 = vsel %vm3835, %v3823, 0
      %v3858 = vsel %vm3835, %v3824, 0
      %3860 = vmatprep.subr.mxu0 %v3794
      %3861 = vmatpush1.msra.mxu0 %v3793
      %3862 = vmatprep.subr.mxu0 %v3802
      %3863 = vmatpush1.msra.mxu0 %v3801
      %3864 = vmatprep.subr.mxu0 %v3810
      %3865 = vmatpush1.msra.mxu0 %v3809
      %3866 = vmatprep.subr.mxu0 %v3840
      %3867 = vmatpush1.msra.mxu0 %v3837
      %3868 = vmatprep.subr.mxu0 0.0
      %3869 = vmatpush1.msra.mxu0 0.0
      %3870 = vmatprep.subr.mxu0 0.0
      %3871 = vmatpush1.msra.mxu0 0.0
      %3872 = vmatprep.subr.mxu0 0.0
      %3873 = vmatpush1.msra.mxu0 0.0
      %3874 = vmatprep.subr.mxu0 0.0
      %3875 = vmatpush1.msra.mxu0 0.0
      %3876 = vmatprep.subr.mxu0 0.0
      %3877 = vmatpush1.msra.mxu0 0.0
      %3878 = vmatprep.subr.mxu0 0.0
      %3879 = vmatpush1.msra.mxu0 0.0
      %3880 = vmatprep.subr.mxu0 0.0
      %3881 = vmatpush1.msra.mxu0 0.0
      %3882 = vmatprep.subr.mxu0 0.0
      %3883 = vmatpush1.msra.mxu0 0.0
      %3884 = vmatprep.subr.mxu0 0.0
      %3885 = vmatpush1.msra.mxu0 0.0
      %3886 = vmatprep.subr.mxu0 0.0
      %3887 = vmatpush1.msra.mxu0 0.0
      %3888 = vmatprep.subr.mxu0 0.0
      %3889 = vmatpush1.msra.mxu0 0.0
      %3890 = vmatprep.subr.mxu0 0.0
      %3891 = vmatpush1.msra.mxu0 0.0
      %3892 = vmatprep.subr.mxu0 0.0
      %3893 = vmatpush1.msra.mxu0 0.0
      %3894 = vmatprep.subr.mxu0 0.0
      %3895 = vmatpush1.msra.mxu0 0.0
      %3896 = vmatprep.subr.mxu0 0.0
      %3897 = vmatpush1.msra.mxu0 0.0
      %3898 = vmatprep.subr.mxu0 0.0
      %3899 = vmatpush1.msra.mxu0 0.0
      %3900 = vmatprep.subr.mxu0 0.0
      %3901 = vmatpush1.msra.mxu0 0.0
      %3902 = vmatprep.subr.mxu0 0.0
      %3903 = vmatpush1.msra.mxu0 0.0
      %3904 = vmatprep.subr.mxu0 0.0
      %3905 = vmatpush1.msra.mxu0 0.0
      %3906 = vmatprep.subr.mxu0 0.0
      %3907 = vmatpush1.msra.mxu0 0.0
      %3908 = vmatprep.subr.mxu0 0.0
      %3909 = vmatpush1.msra.mxu0 0.0
      %3910 = vmatprep.subr.mxu0 0.0
      %3911 = vmatpush1.msra.mxu0 0.0
      %3912 = vmatprep.subr.mxu0 0.0
      %3913 = vmatpush1.msra.mxu0 0.0
      %3914 = vmatprep.subr.mxu0 0.0
      %3915 = vmatpush1.msra.mxu0 0.0
      %3916 = vmatprep.subr.mxu0 0.0
      %3917 = vmatpush1.msra.mxu0 0.0
      %3918 = vmatprep.subr.mxu0 0.0
      %3919 = vmatpush1.msra.mxu0 0.0
      %3920 = vmatprep.subr.mxu0 0.0
      %3921 = vmatpush1.msra.mxu0 0.0
      %3922 = vmatprep.subr.mxu0 0.0
      %3923 = vmatpush1.msra.mxu0 0.0
      %3924 = vmatprep.mubr.f32.mxu0 0.0
      %3925 = vmatmul.mubr.f32.gmra.mrb[0].mxu0 %v3833
      %v3926 = vpop.f32.mrb[0].mxu0
      %v3927 = vadd.f32 %v3829, %v3926
      %v3928 = vpop.f32.mrb[0].mxu0
      %v3929 = vadd.f32 %v3829, %v3928
      %3930 = vdwg.mxu0
      %3931 = vmatprep.subr.mxu0 %v3796
      %3932 = vmatpush1.msra.mxu0 %v3795
      %3933 = vmatprep.subr.mxu0 %v3804
      %3934 = vmatpush1.msra.mxu0 %v3803
      %3935 = vmatprep.subr.mxu0 %v3812
      %3936 = vmatpush1.msra.mxu0 %v3811
      %3937 = vmatprep.subr.mxu0 %v3846
      %3938 = vmatpush1.msra.mxu0 %v3843
      %3939 = vmatprep.subr.mxu0 0.0
      %3940 = vmatpush1.msra.mxu0 0.0
      %3941 = vmatprep.subr.mxu0 0.0
      %3942 = vmatpush1.msra.mxu0 0.0
      %3943 = vmatprep.subr.mxu0 0.0
      %3944 = vmatpush1.msra.mxu0 0.0
      %3945 = vmatprep.subr.mxu0 0.0
      %3946 = vmatpush1.msra.mxu0 0.0
      %3947 = vmatprep.subr.mxu0 0.0
      %3948 = vmatpush1.msra.mxu0 0.0
      %3949 = vmatprep.subr.mxu0 0.0
      %3950 = vmatpush1.msra.mxu0 0.0
      %3951 = vmatprep.subr.mxu0 0.0
      %3952 = vmatpush1.msra.mxu0 0.0
      %3953 = vmatprep.subr.mxu0 0.0
      %3954 = vmatpush1.msra.mxu0 0.0
      %3955 = vmatprep.subr.mxu0 0.0
      %3956 = vmatpush1.msra.mxu0 0.0
      %3957 = vmatprep.subr.mxu0 0.0
      %3958 = vmatpush1.msra.mxu0 0.0
      %3959 = vmatprep.subr.mxu0 0.0
      %3960 = vmatpush1.msra.mxu0 0.0
      %3961 = vmatprep.subr.mxu0 0.0
      %3962 = vmatpush1.msra.mxu0 0.0
      %3963 = vmatprep.subr.mxu0 0.0
      %3964 = vmatpush1.msra.mxu0 0.0
      %3965 = vmatprep.subr.mxu0 0.0
      %3966 = vmatpush1.msra.mxu0 0.0
      %3967 = vmatprep.subr.mxu0 0.0
      %3968 = vmatpush1.msra.mxu0 0.0
      %3969 = vmatprep.subr.mxu0 0.0
      %3970 = vmatpush1.msra.mxu0 0.0
      %3971 = vmatprep.subr.mxu0 0.0
      %3972 = vmatpush1.msra.mxu0 0.0
      %3973 = vmatprep.subr.mxu0 0.0
      %3974 = vmatpush1.msra.mxu0 0.0
      %3975 = vmatprep.subr.mxu0 0.0
      %3976 = vmatpush1.msra.mxu0 0.0
      %3977 = vmatprep.subr.mxu0 0.0
      %3978 = vmatpush1.msra.mxu0 0.0
      %3979 = vmatprep.subr.mxu0 0.0
      %3980 = vmatpush1.msra.mxu0 0.0
      %3981 = vmatprep.subr.mxu0 0.0
      %3982 = vmatpush1.msra.mxu0 0.0
      %3983 = vmatprep.subr.mxu0 0.0
      %3984 = vmatpush1.msra.mxu0 0.0
      %3985 = vmatprep.subr.mxu0 0.0
      %3986 = vmatpush1.msra.mxu0 0.0
      %3987 = vmatprep.subr.mxu0 0.0
      %3988 = vmatpush1.msra.mxu0 0.0
      %3989 = vmatprep.subr.mxu0 0.0
      %3990 = vmatpush1.msra.mxu0 0.0
      %3991 = vmatprep.subr.mxu0 0.0
      %3992 = vmatpush1.msra.mxu0 0.0
      %3993 = vmatprep.subr.mxu0 0.0
      %3994 = vmatpush1.msra.mxu0 0.0
      %3995 = vmatprep.mubr.f32.mxu0 0.0
      %3996 = vmatmul.mubr.f32.gmra.mrb[0].mxu0 %v3833
      %v3997 = vpop.f32.mrb[0].mxu0
      %v3998 = vadd.f32 %v3829, %v3997
      %v3999 = vpop.f32.mrb[0].mxu0
      %v4000 = vadd.f32 %v3829, %v3999
      %4001 = vdwg.mxu0
      %4002 = vmatprep.subr.mxu0 %v3798
      %4003 = vmatpush1.msra.mxu0 %v3797
      %4004 = vmatprep.subr.mxu0 %v3806
      %4005 = vmatpush1.msra.mxu0 %v3805
      %4006 = vmatprep.subr.mxu0 %v3814
      %4007 = vmatpush1.msra.mxu0 %v3813
      %4008 = vmatprep.subr.mxu0 %v3852
      %4009 = vmatpush1.msra.mxu0 %v3849
      %4010 = vmatprep.subr.mxu0 0.0
      %4011 = vmatpush1.msra.mxu0 0.0
      %4012 = vmatprep.subr.mxu0 0.0
      %4013 = vmatpush1.msra.mxu0 0.0
      %4014 = vmatprep.subr.mxu0 0.0
      %4015 = vmatpush1.msra.mxu0 0.0
      %4016 = vmatprep.subr.mxu0 0.0
      %4017 = vmatpush1.msra.mxu0 0.0
      %4018 = vmatprep.subr.mxu0 0.0
      %4019 = vmatpush1.msra.mxu0 0.0
      %4020 = vmatprep.subr.mxu0 0.0
      %4021 = vmatpush1.msra.mxu0 0.0
      %4022 = vmatprep.subr.mxu0 0.0
      %4023 = vmatpush1.msra.mxu0 0.0
      %4024 = vmatprep.subr.mxu0 0.0
      %4025 = vmatpush1.msra.mxu0 0.0
      %4026 = vmatprep.subr.mxu0 0.0
      %4027 = vmatpush1.msra.mxu0 0.0
      %4028 = vmatprep.subr.mxu0 0.0
      %4029 = vmatpush1.msra.mxu0 0.0
      %4030 = vmatprep.subr.mxu0 0.0
      %4031 = vmatpush1.msra.mxu0 0.0
      %4032 = vmatprep.subr.mxu0 0.0
      %4033 = vmatpush1.msra.mxu0 0.0
      %4034 = vmatprep.subr.mxu0 0.0
      %4035 = vmatpush1.msra.mxu0 0.0
      %4036 = vmatprep.subr.mxu0 0.0
      %4037 = vmatpush1.msra.mxu0 0.0
      %4038 = vmatprep.subr.mxu0 0.0
      %4039 = vmatpush1.msra.mxu0 0.0
      %4040 = vmatprep.subr.mxu0 0.0
      %4041 = vmatpush1.msra.mxu0 0.0
      %4042 = vmatprep.subr.mxu0 0.0
      %4043 = vmatpush1.msra.mxu0 0.0
      %4044 = vmatprep.subr.mxu0 0.0
      %4045 = vmatpush1.msra.mxu0 0.0
      %4046 = vmatprep.subr.mxu0 0.0
      %4047 = vmatpush1.msra.mxu0 0.0
      %4048 = vmatprep.subr.mxu0 0.0
      %4049 = vmatpush1.msra.mxu0 0.0
      %4050 = vmatprep.subr.mxu0 0.0
      %4051 = vmatpush1.msra.mxu0 0.0
      %4052 = vmatprep.subr.mxu0 0.0
      %4053 = vmatpush1.msra.mxu0 0.0
      %4054 = vmatprep.subr.mxu0 0.0
      %4055 = vmatpush1.msra.mxu0 0.0
      %4056 = vmatprep.subr.mxu0 0.0
      %4057 = vmatpush1.msra.mxu0 0.0
      %4058 = vmatprep.subr.mxu0 0.0
      %4059 = vmatpush1.msra.mxu0 0.0
      %4060 = vmatprep.subr.mxu0 0.0
      %4061 = vmatpush1.msra.mxu0 0.0
      %4062 = vmatprep.subr.mxu0 0.0
      %4063 = vmatpush1.msra.mxu0 0.0
      %4064 = vmatprep.subr.mxu0 0.0
      %4065 = vmatpush1.msra.mxu0 0.0
      %4066 = vmatprep.mubr.f32.mxu0 0.0
      %4067 = vmatmul.mubr.f32.gmra.mrb[0].mxu0 %v3833
      %v4068 = vpop.f32.mrb[0].mxu0
      %v4069 = vadd.f32 %v3829, %v4068
      %v4070 = vpop.f32.mrb[0].mxu0
      %v4071 = vadd.f32 %v3829, %v4070
      %4072 = vdwg.mxu0
      %4073 = vmatprep.subr.mxu0 %v3800
      %4074 = vmatpush1.msra.mxu0 %v3799
      %4075 = vmatprep.subr.mxu0 %v3808
      %4076 = vmatpush1.msra.mxu0 %v3807
      %4077 = vmatprep.subr.mxu0 %v3816
      %4078 = vmatpush1.msra.mxu0 %v3815
      %4079 = vmatprep.subr.mxu0 %v3858
      %4080 = vmatpush1.msra.mxu0 %v3855
      %4081 = vmatprep.subr.mxu0 0.0
      %4082 = vmatpush1.msra.mxu0 0.0
      %4083 = vmatprep.subr.mxu0 0.0
      %4084 = vmatpush1.msra.mxu0 0.0
      %4085 = vmatprep.subr.mxu0 0.0
      %4086 = vmatpush1.msra.mxu0 0.0
      %4087 = vmatprep.subr.mxu0 0.0
      %4088 = vmatpush1.msra.mxu0 0.0
      %4089 = vmatprep.subr.mxu0 0.0
      %4090 = vmatpush1.msra.mxu0 0.0
      %4091 = vmatprep.subr.mxu0 0.0
      %4092 = vmatpush1.msra.mxu0 0.0
      %4093 = vmatprep.subr.mxu0 0.0
      %4094 = vmatpush1.msra.mxu0 0.0
      %4095 = vmatprep.subr.mxu0 0.0
      %4096 = vmatpush1.msra.mxu0 0.0
      %4097 = vmatprep.subr.mxu0 0.0
      %4098 = vmatpush1.msra.mxu0 0.0
      %4099 = vmatprep.subr.mxu0 0.0
      %4100 = vmatpush1.msra.mxu0 0.0
      %4101 = vmatprep.subr.mxu0 0.0
      %4102 = vmatpush1.msra.mxu0 0.0
      %4103 = vmatprep.subr.mxu0 0.0
      %4104 = vmatpush1.msra.mxu0 0.0
      %4105 = vmatprep.subr.mxu0 0.0
      %4106 = vmatpush1.msra.mxu0 0.0
      %4107 = vmatprep.subr.mxu0 0.0
      %4108 = vmatpush1.msra.mxu0 0.0
      %4109 = vmatprep.subr.mxu0 0.0
      %4110 = vmatpush1.msra.mxu0 0.0
      %4111 = vmatprep.subr.mxu0 0.0
      %4112 = vmatpush1.msra.mxu0 0.0
      %4113 = vmatprep.subr.mxu0 0.0
      %4114 = vmatpush1.msra.mxu0 0.0
      %4115 = vmatprep.subr.mxu0 0.0
      %4116 = vmatpush1.msra.mxu0 0.0
      %4117 = vmatprep.subr.mxu0 0.0
      %4118 = vmatpush1.msra.mxu0 0.0
      %4119 = vmatprep.subr.mxu0 0.0
      %4120 = vmatpush1.msra.mxu0 0.0
      %4121 = vmatprep.subr.mxu0 0.0
      %4122 = vmatpush1.msra.mxu0 0.0
      %4123 = vmatprep.subr.mxu0 0.0
      %4124 = vmatpush1.msra.mxu0 0.0
      %4125 = vmatprep.subr.mxu0 0.0
      %4126 = vmatpush1.msra.mxu0 0.0
      %4127 = vmatprep.subr.mxu0 0.0
      %4128 = vmatpush1.msra.mxu0 0.0
      %4129 = vmatprep.subr.mxu0 0.0
      %4130 = vmatpush1.msra.mxu0 0.0
      %4131 = vmatprep.subr.mxu0 0.0
      %4132 = vmatpush1.msra.mxu0 0.0
      %4133 = vmatprep.subr.mxu0 0.0
      %4134 = vmatpush1.msra.mxu0 0.0
      %4135 = vmatprep.subr.mxu0 0.0
      %4136 = vmatpush1.msra.mxu0 0.0
      %4137 = vmatprep.mubr.f32.mxu0 0.0
      %4138 = vmatmul.mubr.f32.gmra.mrb[0].mxu0 %v3833
      %v4139 = vpop.f32.mrb[0].mxu0
      %v4140 = vadd.f32 %v3829, %v4139
      %v4141 = vpop.f32.mrb[0].mxu0
      %v4142 = vadd.f32 %v3829, %v4141
      %4143 = vdwg.mxu0
      %v4144 = vsub.f32 %v3927, %v4069
      %v4145 = vsub.f32 %v3929, %v4071
      %v4146 = vsub.f32 %v3998, %v4140
      %v4147 = vsub.f32 %v4000, %v4142
      %v4148 = vsub.f32 %v4069, %v3927
      %v4149 = vsub.f32 %v4071, %v3929
      %v4150 = vsub.f32 %v4140, %v3998
      %v4151 = vsub.f32 %v4142, %v4000
      %v4152 = vmul.f32 %v4144, %v4144
      %v4153 = vmul.f32 %v4145, %v4145
      %v4154 = vmul.f32 %v4146, %v4146
      %v4155 = vmul.f32 %v4147, %v4147
      %v4156 = vmul.f32 %v4148, %v4148
      %v4157 = vmul.f32 %v4149, %v4149
      %v4158 = vmul.f32 %v4150, %v4150
      %v4159 = vmul.f32 %v4151, %v4151
      %vm4160 = vcmask 1045504
      %v4161 = vsel %vm4160, %v4152, 0.0
      %v4162 = vsel %vm4160, %v4153, 0.0
      %v4163 = vadd.f32 %v4161, %v4162
      %v4164 = vsel %vm4160, %v4154, 0.0
      %v4165 = vadd.f32 %v4163, %v4164
      %v4166 = vsel %vm4160, %v4155, 0.0
      %v4167 = vadd.f32 %v4165, %v4166
      %v4168 = vsel %vm4160, %v4156, 0.0
      %v4169 = vadd.f32 %v4167, %v4168
      %v4170 = vsel %vm4160, %v4157, 0.0
      %v4171 = vadd.f32 %v4169, %v4170
      %v4172 = vsel %vm4160, %v4158, 0.0
      %v4173 = vadd.f32 %v4171, %v4172
      %v4174 = vsel %vm4160, %v4159, 0.0
      %v4175 = vadd.f32 %v4173, %v4174
      %4176 = vadd.xlane.f32.xlu0 %v4175
      %v4177 = vpop.xlane.xlu0 %4176
      %v4178 = vrot.slane %v4177, 4
      %v4179 = vadd.f32 %v4177, %v4178
      %v4180 = vrot.slane %v4179, 2
      %v4181 = vadd.f32 %v4179, %v4180
      %v4182 = vrot.slane %v4181, 1
      %v4183 = vadd.f32 %v4181, %v4182
      %s4184 = vtos %v4183
      %v4185 = vstv %s4184
      %v4186 = vand.u32 2147483647, %v4144
      %v4187 = vand.u32 2147483647, %v4145
      %v4188 = vand.u32 2147483647, %v4146
      %v4189 = vand.u32 2147483647, %v4147
      %v4190 = vand.u32 2147483647, %v4148
      %v4191 = vand.u32 2147483647, %v4149
      %v4192 = vand.u32 2147483647, %v4150
      %v4193 = vand.u32 2147483647, %v4151
      %v4194 = vsel %vm4160, %v4186, 0.0
      %v4195 = vsel %vm4160, %v4187, 0.0
      %v4196 = vadd.f32 %v4194, %v4195
      %v4197 = vsel %vm4160, %v4188, 0.0
      %v4198 = vadd.f32 %v4196, %v4197
      %v4199 = vsel %vm4160, %v4189, 0.0
      %v4200 = vadd.f32 %v4198, %v4199
      %v4201 = vsel %vm4160, %v4190, 0.0
      %v4202 = vadd.f32 %v4200, %v4201
      %v4203 = vsel %vm4160, %v4191, 0.0
      %v4204 = vadd.f32 %v4202, %v4203
      %v4205 = vsel %vm4160, %v4192, 0.0
      %v4206 = vadd.f32 %v4204, %v4205
      %v4207 = vsel %vm4160, %v4193, 0.0
      %v4208 = vadd.f32 %v4206, %v4207
      %4209 = vadd.xlane.f32.xlu0 %v4208
      %v4210 = vpop.xlane.xlu0 %4209
      %v4211 = vrot.slane %v4210, 4
      %v4212 = vadd.f32 %v4210, %v4211
      %v4213 = vrot.slane %v4212, 2
      %v4214 = vadd.f32 %v4212, %v4213
      %v4215 = vrot.slane %v4214, 1
      %v4216 = vadd.f32 %v4214, %v4215
      %s4217 = vtos %v4216
      %v4218 = vstv %s4217
      %v4219 = vmul.f32 %v4218, 0.1
      %v4220 = vadd.f32 %v4185, %v4219
      %v4221 = vmul.f32 %v4220, 8.138021e-05
      %v4222 = vadd.f32 %v4221, 0.0
      %v4223 = vmax.f32 %v3927, 0.0
      %v4224 = vmax.f32 %v3929, 0.0
      %v4225 = vmax.f32 %v3998, 0.0
      %v4226 = vmax.f32 %v4000, 0.0
      %v4227 = vmax.f32 %v4069, 0.0
      %v4228 = vmax.f32 %v4071, 0.0
      %v4229 = vmax.f32 %v4140, 0.0
      %v4230 = vmax.f32 %v4142, 0.0
      %v4231 = vsub.f32 %v4223, %v4227
      %v4232 = vsub.f32 %v4224, %v4228
      %v4233 = vsub.f32 %v4225, %v4229
      %v4234 = vsub.f32 %v4226, %v4230
      %v4235 = vsub.f32 %v4227, %v4223
      %v4236 = vsub.f32 %v4228, %v4224
      %v4237 = vsub.f32 %v4229, %v4225
      %v4238 = vsub.f32 %v4230, %v4226
      %v4239 = vmul.f32 %v4231, %v4231
      %v4240 = vmul.f32 %v4232, %v4232
      %v4241 = vmul.f32 %v4233, %v4233
      %v4242 = vmul.f32 %v4234, %v4234
      %v4243 = vmul.f32 %v4235, %v4235
      %v4244 = vmul.f32 %v4236, %v4236
      %v4245 = vmul.f32 %v4237, %v4237
      %v4246 = vmul.f32 %v4238, %v4238
      %v4247 = vsel %vm4160, %v4239, 0.0
      %v4248 = vsel %vm4160, %v4240, 0.0
      %v4249 = vadd.f32 %v4247, %v4248
      %v4250 = vsel %vm4160, %v4241, 0.0
      %v4251 = vadd.f32 %v4249, %v4250
      %v4252 = vsel %vm4160, %v4242, 0.0
      %v4253 = vadd.f32 %v4251, %v4252
      %v4254 = vsel %vm4160, %v4243, 0.0
      %v4255 = vadd.f32 %v4253, %v4254
      %v4256 = vsel %vm4160, %v4244, 0.0
      %v4257 = vadd.f32 %v4255, %v4256
      %v4258 = vsel %vm4160, %v4245, 0.0
      %v4259 = vadd.f32 %v4257, %v4258
      %v4260 = vsel %vm4160, %v4246, 0.0
      %v4261 = vadd.f32 %v4259, %v4260
      %4262 = vadd.xlane.f32.xlu0 %v4261
      %v4263 = vpop.xlane.xlu0 %4262
      %v4264 = vrot.slane %v4263, 4
      %v4265 = vadd.f32 %v4263, %v4264
      %v4266 = vrot.slane %v4265, 2
      %v4267 = vadd.f32 %v4265, %v4266
      %v4268 = vrot.slane %v4267, 1
      %v4269 = vadd.f32 %v4267, %v4268
      %s4270 = vtos %v4269
      %v4271 = vstv %s4270
      %v4272 = vand.u32 2147483647, %v4231
      %v4273 = vand.u32 2147483647, %v4232
      %v4274 = vand.u32 2147483647, %v4233
      %v4275 = vand.u32 2147483647, %v4234
      %v4276 = vand.u32 2147483647, %v4235
      %v4277 = vand.u32 2147483647, %v4236
      %v4278 = vand.u32 2147483647, %v4237
      %v4279 = vand.u32 2147483647, %v4238
      %v4280 = vsel %vm4160, %v4272, 0.0
      %v4281 = vsel %vm4160, %v4273, 0.0
      %v4282 = vadd.f32 %v4280, %v4281
      %v4283 = vsel %vm4160, %v4274, 0.0
      %v4284 = vadd.f32 %v4282, %v4283
      %v4285 = vsel %vm4160, %v4275, 0.0
      %v4286 = vadd.f32 %v4284, %v4285
      %v4287 = vsel %vm4160, %v4276, 0.0
      %v4288 = vadd.f32 %v4286, %v4287
      %v4289 = vsel %vm4160, %v4277, 0.0
      %v4290 = vadd.f32 %v4288, %v4289
      %v4291 = vsel %vm4160, %v4278, 0.0
      %v4292 = vadd.f32 %v4290, %v4291
      %v4293 = vsel %vm4160, %v4279, 0.0
      %v4294 = vadd.f32 %v4292, %v4293
      %4295 = vadd.xlane.f32.xlu0 %v4294
      %v4296 = vpop.xlane.xlu0 %4295
      %v4297 = vrot.slane %v4296, 4
      %v4298 = vadd.f32 %v4296, %v4297
      %v4299 = vrot.slane %v4298, 2
      %v4300 = vadd.f32 %v4298, %v4299
      %v4301 = vrot.slane %v4300, 1
      %v4302 = vadd.f32 %v4300, %v4301
      %s4303 = vtos %v4302
      %v4304 = vstv %s4303
      %v4305 = vmul.f32 %v4304, 0.1
      %v4306 = vadd.f32 %v4271, %v4305
      %v4307 = vmul.f32 %v4306, 8.138021e-05
      %v4308 = vadd.f32 %v4222, %v4307
      %4309 = vrot.lane.b32.xlu0 %v4223, 127
      %v4310 = vpop.permute.xlu0 %4309
      %4311 = vrot.lane.b32.xlu0 %v4224, 127
      %v4312 = vpop.permute.xlu0 %4311
      %4313 = vrot.lane.b32.xlu0 %v4225, 127
      %v4314 = vpop.permute.xlu0 %4313
      %4315 = vrot.lane.b32.xlu0 %v4226, 127
      %v4316 = vpop.permute.xlu0 %4315
      %4317 = vrot.lane.b32.xlu0 %v4227, 127
      %v4318 = vpop.permute.xlu0 %4317
      %4319 = vrot.lane.b32.xlu0 %v4228, 127
      %v4320 = vpop.permute.xlu0 %4319
      %4321 = vrot.lane.b32.xlu0 %v4229, 127
      %v4322 = vpop.permute.xlu0 %4321
      %4323 = vrot.lane.b32.xlu0 %v4230, 127
      %v4324 = vpop.permute.xlu0 %4323
      %v4325 = vsel %vm2226, %v4322, %v4324
      %v4326 = vsel %vm2226, %v4320, %v4322
      %v4327 = vsel %vm2226, %v4318, %v4320
      %v4328 = vsel %vm2226, %v4316, %v4318
      %v4329 = vsel %vm2226, %v4314, %v4316
      %v4330 = vsel %vm2226, %v4312, %v4314
      %v4331 = vsel %vm2226, %v4310, %v4312
      %v4332 = vsel %vm2226, %v4324, %v4310
      %v4333 = vmax.f32 %v4223, %v4331
      %v4334 = vmax.f32 %v4224, %v4330
      %v4335 = vmax.f32 %v4225, %v4329
      %v4336 = vmax.f32 %v4226, %v4328
      %v4337 = vmax.f32 %v4227, %v4327
      %v4338 = vmax.f32 %v4228, %v4326
      %v4339 = vmax.f32 %v4229, %v4325
      %v4340 = vmax.f32 %v4230, %v4332
      %4341 = vrot.lane.b32.xlu0 %v4333, 120
      %v4342 = vpop.permute.xlu0 %4341
      %4343 = vrot.lane.b32.xlu0 %v4334, 120
      %v4344 = vpop.permute.xlu0 %4343
      %4345 = vrot.lane.b32.xlu0 %v4335, 120
      %v4346 = vpop.permute.xlu0 %4345
      %4347 = vrot.lane.b32.xlu0 %v4336, 120
      %v4348 = vpop.permute.xlu0 %4347
      %4349 = vrot.lane.b32.xlu0 %v4337, 120
      %v4350 = vpop.permute.xlu0 %4349
      %4351 = vrot.lane.b32.xlu0 %v4338, 120
      %v4352 = vpop.permute.xlu0 %4351
      %4353 = vrot.lane.b32.xlu0 %v4339, 120
      %v4354 = vpop.permute.xlu0 %4353
      %4355 = vrot.lane.b32.xlu0 %v4340, 120
      %v4356 = vpop.permute.xlu0 %4355
      %v4357 = vsel %vm2504, %v4354, %v4356
      %v4358 = vsel %vm2504, %v4352, %v4354
      %v4359 = vsel %vm2504, %v4350, %v4352
      %v4360 = vsel %vm2504, %v4348, %v4350
      %v4361 = vsel %vm2504, %v4346, %v4348
      %v4362 = vsel %vm2504, %v4344, %v4346
      %v4363 = vsel %vm2504, %v4342, %v4344
      %v4364 = vsel %vm2504, %v4356, %v4342
      %v4365 = vmax.f32 %v4333, %v4363
      %v4366 = vmax.f32 %v4334, %v4362
      %v4367 = vmax.f32 %v4335, %v4361
      %v4368 = vmax.f32 %v4336, %v4360
      %v4369 = vmax.f32 %v4337, %v4359
      %v4370 = vmax.f32 %v4338, %v4358
      %v4371 = vmax.f32 %v4339, %v4357
      %v4372 = vmax.f32 %v4340, %v4364
      %4373 = vrot.lane.b32.xlu0 %v4365, 64
      %v4374 = vpop.permute.xlu0 %4373
      %4375 = vrot.lane.b32.xlu0 %v4366, 64
      %v4376 = vpop.permute.xlu0 %4375
      %4377 = vrot.lane.b32.xlu0 %v4367, 64
      %v4378 = vpop.permute.xlu0 %4377
      %4379 = vrot.lane.b32.xlu0 %v4368, 64
      %v4380 = vpop.permute.xlu0 %4379
      %4381 = vrot.lane.b32.xlu0 %v4369, 64
      %v4382 = vpop.permute.xlu0 %4381
      %4383 = vrot.lane.b32.xlu0 %v4370, 64
      %v4384 = vpop.permute.xlu0 %4383
      %4385 = vrot.lane.b32.xlu0 %v4371, 64
      %v4386 = vpop.permute.xlu0 %4385
      %4387 = vrot.lane.b32.xlu0 %v4372, 64
      %v4388 = vpop.permute.xlu0 %4387
      %v4389 = vsel %vm967, %v4386, %v4388
      %v4390 = vsel %vm967, %v4384, %v4386
      %v4391 = vsel %vm967, %v4382, %v4384
      %v4392 = vsel %vm967, %v4380, %v4382
      %v4393 = vsel %vm967, %v4378, %v4380
      %v4394 = vsel %vm967, %v4376, %v4378
      %v4395 = vsel %vm967, %v4374, %v4376
      %v4396 = vsel %vm967, %v4388, %v4374
      %v4397 = vmax.f32 %v4365, %v4395
      %v4398 = vmax.f32 %v4366, %v4394
      %v4399 = vmax.f32 %v4367, %v4393
      %v4400 = vmax.f32 %v4368, %v4392
      %v4401 = vmax.f32 %v4369, %v4391
      %v4402 = vmax.f32 %v4370, %v4390
      %v4403 = vmax.f32 %v4371, %v4389
      %v4404 = vmax.f32 %v4372, %v4396
      %v4405 = vld [vmem:[%s4] sm:$0xff]
      %v4406 = vld [vmem:[%s4 + $0x8] sm:$0xff]
      %v4407 = vld [vmem:[%s4 + $0x10] sm:$0xff]
      %v4408 = vld [vmem:[%s4 + $0x18] sm:$0xff]
      %v4409 = vld [vmem:[%s4 + $0x20] sm:$0xff]
      %v4410 = vld [vmem:[%s4 + $0x28] sm:$0xff]
      %v4411 = vld [vmem:[%s4 + $0x30] sm:$0xff]
      %v4412 = vld [vmem:[%s4 + $0x38] sm:$0xff]
      %v4413 = vld [vmem:[%s4 + $0x40] sm:$0xff]
      %v4414 = vld [vmem:[%s4 + $0x48] sm:$0xff]
      %v4415 = vld [vmem:[%s4 + $0x50] sm:$0xff]
      %v4416 = vld [vmem:[%s4 + $0x58] sm:$0xff]
      %v4417 = vld [vmem:[%s4 + $0x60] sm:$0xff]
      %v4418 = vld [vmem:[%s4 + $0x68] sm:$0xff]
      %v4419 = vld [vmem:[%s4 + $0x70] sm:$0xff]
      %v4420 = vld [vmem:[%s4 + $0x78] sm:$0xff]
      %v4421 = vld [vmem:[%s4 + $0x80] sm:$0xff]
      %v4422 = vld [vmem:[%s4 + $0x88] sm:$0xff]
      %v4423 = vld [vmem:[%s4 + $0x90] sm:$0xff]
      %v4424 = vld [vmem:[%s4 + $0x98] sm:$0xff]
      %v4425 = vld [vmem:[%s4 + $0xa0] sm:$0xff]
      %v4426 = vld [vmem:[%s4 + $0xa8] sm:$0xff]
      %v4427 = vld [vmem:[%s4 + $0xb0] sm:$0xff]
      %v4428 = vld [vmem:[%s4 + $0xb8] sm:$0xff]
      %v4429 = vld [vmem:[%s4 + $0xc0] sm:$0xff]
      %v4430 = vld [vmem:[%s4 + $0xc8] sm:$0xff]
      %v4431 = vld [vmem:[%s4 + $0xd0] sm:$0xff]
      %v4432 = vld [vmem:[%s4 + $0xd8] sm:$0xff]
      %v4433 = vld [vmem:[%s4 + $0xe0] sm:$0xff]
      %v4434 = vld [vmem:[%s4 + $0xe8] sm:$0xff]
      %v4435 = vld [vmem:[%s4 + $0xf0] sm:$0xff]
      %v4436 = vld [vmem:[%s4 + $0xf8] sm:$0xff]
      %v4437 = vld [vmem:[%s4 + $0x100] sm:$0xff]
      %v4438 = vld [vmem:[%s4 + $0x108] sm:$0xff]
      %v4439 = vld [vmem:[%s4 + $0x110] sm:$0xff]
      %v4440 = vld [vmem:[%s4 + $0x118] sm:$0xff]
      %v4441 = vld [vmem:[%s4 + $0x120] sm:$0xff]
      %v4442 = vld [vmem:[%s4 + $0x128] sm:$0xff]
      %v4443 = vld [vmem:[%s4 + $0x130] sm:$0xff]
      %v4444 = vld [vmem:[%s4 + $0x138] sm:$0xff]
      %v4445 = vld [vmem:[%s4 + $0x140] sm:$0xff]
      %v4446 = vld [vmem:[%s4 + $0x148] sm:$0xff]
      %v4447 = vld [vmem:[%s4 + $0x150] sm:$0xff]
      %v4448 = vld [vmem:[%s4 + $0x158] sm:$0xff]
      %v4449 = vld [vmem:[%s4 + $0x160] sm:$0xff]
      %v4450 = vld [vmem:[%s4 + $0x168] sm:$0xff]
      %v4451 = vld [vmem:[%s4 + $0x170] sm:$0xff]
      %v4452 = vld [vmem:[%s4 + $0x178] sm:$0xff]
      %v4453 = vld [vmem:[%s4 + $0x180] sm:$0xff]
      %v4454 = vld [vmem:[%s4 + $0x188] sm:$0xff]
      %v4455 = vld [vmem:[%s4 + $0x190] sm:$0xff]
      %v4456 = vld [vmem:[%s4 + $0x198] sm:$0xff]
      %v4457 = vld [vmem:[%s4 + $0x1a0] sm:$0xff]
      %v4458 = vld [vmem:[%s4 + $0x1a8] sm:$0xff]
      %v4459 = vld [vmem:[%s4 + $0x1b0] sm:$0xff]
      %v4460 = vld [vmem:[%s4 + $0x1b8] sm:$0xff]
      %v4461 = vld [vmem:[%s4 + $0x1c0] sm:$0xff]
      %v4462 = vld [vmem:[%s4 + $0x1c8] sm:$0xff]
      %v4463 = vld [vmem:[%s4 + $0x1d0] sm:$0xff]
      %v4464 = vld [vmem:[%s4 + $0x1d8] sm:$0xff]
      %v4465 = vld [vmem:[%s4 + $0x1e0] sm:$0xff]
      %v4466 = vld [vmem:[%s4 + $0x1e8] sm:$0xff]
      %v4467 = vld [vmem:[%s4 + $0x1f0] sm:$0xff]
      %v4468 = vld [vmem:[%s4 + $0x1f8] sm:$0xff]
      %v4469 = vld [vmem:[%s4 + $0x200] sm:$0xff]
      %v4470 = vld [vmem:[%s4 + $0x208] sm:$0xff]
      %v4471 = vld [vmem:[%s4 + $0x210] sm:$0xff]
      %v4472 = vld [vmem:[%s4 + $0x218] sm:$0xff]
      %v4473 = vld [vmem:[%s4 + $0x220] sm:$0xff]
      %v4474 = vld [vmem:[%s4 + $0x228] sm:$0xff]
      %v4475 = vld [vmem:[%s4 + $0x230] sm:$0xff]
      %v4476 = vld [vmem:[%s4 + $0x238] sm:$0xff]
      %v4477 = vld [vmem:[%s4 + $0x240] sm:$0xff]
      %v4478 = vld [vmem:[%s4 + $0x248] sm:$0xff]
      %v4479 = vld [vmem:[%s4 + $0x250] sm:$0xff]
      %v4480 = vld [vmem:[%s4 + $0x258] sm:$0xff]
      %v4481 = vld [vmem:[%s4 + $0x260] sm:$0xff]
      %v4482 = vld [vmem:[%s4 + $0x268] sm:$0xff]
      %v4483 = vld [vmem:[%s4 + $0x270] sm:$0xff]
      %v4484 = vld [vmem:[%s4 + $0x278] sm:$0xff]
      %v4485 = vld [vmem:[%s4 + $0x280] sm:$0xff]
      %v4486 = vld [vmem:[%s4 + $0x288] sm:$0xff]
      %v4487 = vld [vmem:[%s4 + $0x290] sm:$0xff]
      %v4488 = vld [vmem:[%s4 + $0x298] sm:$0xff]
      %v4489 = vld [vmem:[%s4 + $0x2a0] sm:$0xff]
      %v4490 = vld [vmem:[%s4 + $0x2a8] sm:$0xff]
      %v4491 = vld [vmem:[%s4 + $0x2b0] sm:$0xff]
      %v4492 = vld [vmem:[%s4 + $0x2b8] sm:$0xff]
      %v4493 = vld [vmem:[%s4 + $0x2c0] sm:$0xff]
      %v4494 = vld [vmem:[%s4 + $0x2c8] sm:$0xff]
      %v4495 = vld [vmem:[%s4 + $0x2d0] sm:$0xff]
      %v4496 = vld [vmem:[%s4 + $0x2d8] sm:$0xff]
      %v4497 = vld [vmem:[%s4 + $0x2e0] sm:$0xff]
      %v4498 = vld [vmem:[%s4 + $0x2e8] sm:$0xff]
      %v4499 = vld [vmem:[%s4 + $0x2f0] sm:$0xff]
      %v4500 = vld [vmem:[%s4 + $0x2f8] sm:$0xff]
      %v4501 = vld [vmem:[%s4 + $0x300] sm:$0xff]
      %v4502 = vld [vmem:[%s4 + $0x308] sm:$0xff]
      %v4503 = vld [vmem:[%s4 + $0x310] sm:$0xff]
      %v4504 = vld [vmem:[%s4 + $0x318] sm:$0xff]
      %v4505 = vld [vmem:[%s4 + $0x320] sm:$0xff]
      %v4506 = vld [vmem:[%s4 + $0x328] sm:$0xff]
      %v4507 = vld [vmem:[%s4 + $0x330] sm:$0xff]
      %v4508 = vld [vmem:[%s4 + $0x338] sm:$0xff]
      %v4509 = vld [vmem:[%s4 + $0x340] sm:$0xff]
      %v4510 = vld [vmem:[%s4 + $0x348] sm:$0xff]
      %v4511 = vld [vmem:[%s4 + $0x350] sm:$0xff]
      %v4512 = vld [vmem:[%s4 + $0x358] sm:$0xff]
      %v4513 = vld [vmem:[%s4 + $0x360] sm:$0xff]
      %v4514 = vld [vmem:[%s4 + $0x368] sm:$0xff]
      %v4515 = vld [vmem:[%s4 + $0x370] sm:$0xff]
      %v4516 = vld [vmem:[%s4 + $0x378] sm:$0xff]
      %v4517 = vld [vmem:[%s4 + $0x380] sm:$0xff]
      %v4518 = vld [vmem:[%s4 + $0x388] sm:$0xff]
      %v4519 = vld [vmem:[%s4 + $0x390] sm:$0xff]
      %v4520 = vld [vmem:[%s4 + $0x398] sm:$0xff]
      %v4521 = vld [vmem:[%s4 + $0x3a0] sm:$0xff]
      %v4522 = vld [vmem:[%s4 + $0x3a8] sm:$0xff]
      %v4523 = vld [vmem:[%s4 + $0x3b0] sm:$0xff]
      %v4524 = vld [vmem:[%s4 + $0x3b8] sm:$0xff]
      %v4525 = vld [vmem:[%s4 + $0x3c0] sm:$0xff]
      %v4526 = vld [vmem:[%s4 + $0x3c8] sm:$0xff]
      %v4527 = vld [vmem:[%s4 + $0x3d0] sm:$0xff]
      %v4528 = vld [vmem:[%s4 + $0x3d8] sm:$0xff]
      %v4529 = vld [vmem:[%s4 + $0x3e0] sm:$0xff]
      %v4530 = vld [vmem:[%s4 + $0x3e8] sm:$0xff]
      %v4531 = vld [vmem:[%s4 + $0x3f0] sm:$0xff]
      %v4532 = vld [vmem:[%s4 + $0x3f8] sm:$0xff]
      %4533 = vmatprep.subr.mxu0 0.0
      %4534 = vmatpush1.msra.mxu0 %v4405
      %4535 = vmatprep.subr.mxu0 0.0
      %4536 = vmatpush1.msra.mxu0 %v4406
      %4537 = vmatprep.subr.mxu0 0.0
      %4538 = vmatpush1.msra.mxu0 %v4407
      %4539 = vmatprep.subr.mxu0 0.0
      %4540 = vmatpush1.msra.mxu0 %v4408
      %4541 = vmatprep.subr.mxu0 0.0
      %4542 = vmatpush1.msra.mxu0 %v4409
      %4543 = vmatprep.subr.mxu0 0.0
      %4544 = vmatpush1.msra.mxu0 %v4410
      %4545 = vmatprep.subr.mxu0 0.0
      %4546 = vmatpush1.msra.mxu0 %v4411
      %4547 = vmatprep.subr.mxu0 0.0
      %4548 = vmatpush1.msra.mxu0 %v4412
      %4549 = vmatprep.subr.mxu0 0.0
      %4550 = vmatpush1.msra.mxu0 %v4413
      %4551 = vmatprep.subr.mxu0 0.0
      %4552 = vmatpush1.msra.mxu0 %v4414
      %4553 = vmatprep.subr.mxu0 0.0
      %4554 = vmatpush1.msra.mxu0 %v4415
      %4555 = vmatprep.subr.mxu0 0.0
      %4556 = vmatpush1.msra.mxu0 %v4416
      %4557 = vmatprep.subr.mxu0 0.0
      %4558 = vmatpush1.msra.mxu0 %v4417
      %4559 = vmatprep.subr.mxu0 0.0
      %4560 = vmatpush1.msra.mxu0 %v4418
      %4561 = vmatprep.subr.mxu0 0.0
      %4562 = vmatpush1.msra.mxu0 %v4419
      %4563 = vmatprep.subr.mxu0 0.0
      %4564 = vmatpush1.msra.mxu0 %v4420
      %4565 = vmatprep.subr.mxu0 0.0
      %4566 = vmatpush1.msra.mxu0 %v4421
      %4567 = vmatprep.subr.mxu0 0.0
      %4568 = vmatpush1.msra.mxu0 %v4422
      %4569 = vmatprep.subr.mxu0 0.0
      %4570 = vmatpush1.msra.mxu0 %v4423
      %4571 = vmatprep.subr.mxu0 0.0
      %4572 = vmatpush1.msra.mxu0 %v4424
      %4573 = vmatprep.subr.mxu0 0.0
      %4574 = vmatpush1.msra.mxu0 %v4425
      %4575 = vmatprep.subr.mxu0 0.0
      %4576 = vmatpush1.msra.mxu0 %v4426
      %4577 = vmatprep.subr.mxu0 0.0
      %4578 = vmatpush1.msra.mxu0 %v4427
      %4579 = vmatprep.subr.mxu0 0.0
      %4580 = vmatpush1.msra.mxu0 %v4428
      %4581 = vmatprep.subr.mxu0 0.0
      %4582 = vmatpush1.msra.mxu0 %v4429
      %4583 = vmatprep.subr.mxu0 0.0
      %4584 = vmatpush1.msra.mxu0 %v4430
      %4585 = vmatprep.subr.mxu0 0.0
      %4586 = vmatpush1.msra.mxu0 %v4431
      %4587 = vmatprep.subr.mxu0 0.0
      %4588 = vmatpush1.msra.mxu0 %v4432
      %4589 = vmatprep.subr.mxu0 0.0
      %4590 = vmatpush1.msra.mxu0 %v4433
      %4591 = vmatprep.subr.mxu0 0.0
      %4592 = vmatpush1.msra.mxu0 %v4434
      %4593 = vmatprep.subr.mxu0 0.0
      %4594 = vmatpush1.msra.mxu0 %v4435
      %4595 = vmatprep.subr.mxu0 0.0
      %4596 = vmatpush1.msra.mxu0 %v4436
      %4597 = vmatprep.mubr.f32.mxu0 %v4398
      %4598 = vmatmul.mubr.f32.gmra.mrb[0].mxu0 %v4397
      %v4599 = vpop.f32.mrb[0].mxu0
      %v4600 = vadd.f32 0.0, %v4599
      %v4601 = vpop.f32.mrb[0].mxu0
      %4602 = vdwg.mxu0
      %4603 = vmatprep.subr.mxu0 0.0
      %4604 = vmatpush1.msra.mxu0 %v4437
      %4605 = vmatprep.subr.mxu0 0.0
      %4606 = vmatpush1.msra.mxu0 %v4438
      %4607 = vmatprep.subr.mxu0 0.0
      %4608 = vmatpush1.msra.mxu0 %v4439
      %4609 = vmatprep.subr.mxu0 0.0
      %4610 = vmatpush1.msra.mxu0 %v4440
      %4611 = vmatprep.subr.mxu0 0.0
      %4612 = vmatpush1.msra.mxu0 %v4441
      %4613 = vmatprep.subr.mxu0 0.0
      %4614 = vmatpush1.msra.mxu0 %v4442
      %4615 = vmatprep.subr.mxu0 0.0
      %4616 = vmatpush1.msra.mxu0 %v4443
      %4617 = vmatprep.subr.mxu0 0.0
      %4618 = vmatpush1.msra.mxu0 %v4444
      %4619 = vmatprep.subr.mxu0 0.0
      %4620 = vmatpush1.msra.mxu0 %v4445
      %4621 = vmatprep.subr.mxu0 0.0
      %4622 = vmatpush1.msra.mxu0 %v4446
      %4623 = vmatprep.subr.mxu0 0.0
      %4624 = vmatpush1.msra.mxu0 %v4447
      %4625 = vmatprep.subr.mxu0 0.0
      %4626 = vmatpush1.msra.mxu0 %v4448
      %4627 = vmatprep.subr.mxu0 0.0
      %4628 = vmatpush1.msra.mxu0 %v4449
      %4629 = vmatprep.subr.mxu0 0.0
      %4630 = vmatpush1.msra.mxu0 %v4450
      %4631 = vmatprep.subr.mxu0 0.0
      %4632 = vmatpush1.msra.mxu0 %v4451
      %4633 = vmatprep.subr.mxu0 0.0
      %4634 = vmatpush1.msra.mxu0 %v4452
      %4635 = vmatprep.subr.mxu0 0.0
      %4636 = vmatpush1.msra.mxu0 %v4453
      %4637 = vmatprep.subr.mxu0 0.0
      %4638 = vmatpush1.msra.mxu0 %v4454
      %4639 = vmatprep.subr.mxu0 0.0
      %4640 = vmatpush1.msra.mxu0 %v4455
      %4641 = vmatprep.subr.mxu0 0.0
      %4642 = vmatpush1.msra.mxu0 %v4456
      %4643 = vmatprep.subr.mxu0 0.0
      %4644 = vmatpush1.msra.mxu0 %v4457
      %4645 = vmatprep.subr.mxu0 0.0
      %4646 = vmatpush1.msra.mxu0 %v4458
      %4647 = vmatprep.subr.mxu0 0.0
      %4648 = vmatpush1.msra.mxu0 %v4459
      %4649 = vmatprep.subr.mxu0 0.0
      %4650 = vmatpush1.msra.mxu0 %v4460
      %4651 = vmatprep.subr.mxu0 0.0
      %4652 = vmatpush1.msra.mxu0 %v4461
      %4653 = vmatprep.subr.mxu0 0.0
      %4654 = vmatpush1.msra.mxu0 %v4462
      %4655 = vmatprep.subr.mxu0 0.0
      %4656 = vmatpush1.msra.mxu0 %v4463
      %4657 = vmatprep.subr.mxu0 0.0
      %4658 = vmatpush1.msra.mxu0 %v4464
      %4659 = vmatprep.subr.mxu0 0.0
      %4660 = vmatpush1.msra.mxu0 %v4465
      %4661 = vmatprep.subr.mxu0 0.0
      %4662 = vmatpush1.msra.mxu0 %v4466
      %4663 = vmatprep.subr.mxu0 0.0
      %4664 = vmatpush1.msra.mxu0 %v4467
      %4665 = vmatprep.subr.mxu0 0.0
      %4666 = vmatpush1.msra.mxu0 %v4468
      %4667 = vmatprep.mubr.f32.mxu0 %v4400
      %4668 = vmatmul.mubr.f32.gmra.mrb[0].mxu0 %v4399
      %v4669 = vpop.f32.mrb[0].mxu0
      %v4670 = vadd.f32 %v4600, %v4669
      %v4671 = vpop.f32.mrb[0].mxu0
      %4672 = vdwg.mxu0
      %4673 = vmatprep.subr.mxu0 0.0
      %4674 = vmatpush1.msra.mxu0 %v4469
      %4675 = vmatprep.subr.mxu0 0.0
      %4676 = vmatpush1.msra.mxu0 %v4470
      %4677 = vmatprep.subr.mxu0 0.0
      %4678 = vmatpush1.msra.mxu0 %v4471
      %4679 = vmatprep.subr.mxu0 0.0
      %4680 = vmatpush1.msra.mxu0 %v4472
      %4681 = vmatprep.subr.mxu0 0.0
      %4682 = vmatpush1.msra.mxu0 %v4473
      %4683 = vmatprep.subr.mxu0 0.0
      %4684 = vmatpush1.msra.mxu0 %v4474
      %4685 = vmatprep.subr.mxu0 0.0
      %4686 = vmatpush1.msra.mxu0 %v4475
      %4687 = vmatprep.subr.mxu0 0.0
      %4688 = vmatpush1.msra.mxu0 %v4476
      %4689 = vmatprep.subr.mxu0 0.0
      %4690 = vmatpush1.msra.mxu0 %v4477
      %4691 = vmatprep.subr.mxu0 0.0
      %4692 = vmatpush1.msra.mxu0 %v4478
      %4693 = vmatprep.subr.mxu0 0.0
      %4694 = vmatpush1.msra.mxu0 %v4479
      %4695 = vmatprep.subr.mxu0 0.0
      %4696 = vmatpush1.msra.mxu0 %v4480
      %4697 = vmatprep.subr.mxu0 0.0
      %4698 = vmatpush1.msra.mxu0 %v4481
      %4699 = vmatprep.subr.mxu0 0.0
      %4700 = vmatpush1.msra.mxu0 %v4482
      %4701 = vmatprep.subr.mxu0 0.0
      %4702 = vmatpush1.msra.mxu0 %v4483
      %4703 = vmatprep.subr.mxu0 0.0
      %4704 = vmatpush1.msra.mxu0 %v4484
      %4705 = vmatprep.subr.mxu0 0.0
      %4706 = vmatpush1.msra.mxu0 %v4485
      %4707 = vmatprep.subr.mxu0 0.0
      %4708 = vmatpush1.msra.mxu0 %v4486
      %4709 = vmatprep.subr.mxu0 0.0
      %4710 = vmatpush1.msra.mxu0 %v4487
      %4711 = vmatprep.subr.mxu0 0.0
      %4712 = vmatpush1.msra.mxu0 %v4488
      %4713 = vmatprep.subr.mxu0 0.0
      %4714 = vmatpush1.msra.mxu0 %v4489
      %4715 = vmatprep.subr.mxu0 0.0
      %4716 = vmatpush1.msra.mxu0 %v4490
      %4717 = vmatprep.subr.mxu0 0.0
      %4718 = vmatpush1.msra.mxu0 %v4491
      %4719 = vmatprep.subr.mxu0 0.0
      %4720 = vmatpush1.msra.mxu0 %v4492
      %4721 = vmatprep.subr.mxu0 0.0
      %4722 = vmatpush1.msra.mxu0 %v4493
      %4723 = vmatprep.subr.mxu0 0.0
      %4724 = vmatpush1.msra.mxu0 %v4494
      %4725 = vmatprep.subr.mxu0 0.0
      %4726 = vmatpush1.msra.mxu0 %v4495
      %4727 = vmatprep.subr.mxu0 0.0
      %4728 = vmatpush1.msra.mxu0 %v4496
      %4729 = vmatprep.subr.mxu0 0.0
      %4730 = vmatpush1.msra.mxu0 %v4497
      %4731 = vmatprep.subr.mxu0 0.0
      %4732 = vmatpush1.msra.mxu0 %v4498
      %4733 = vmatprep.subr.mxu0 0.0
      %4734 = vmatpush1.msra.mxu0 %v4499
      %4735 = vmatprep.subr.mxu0 0.0
      %4736 = vmatpush1.msra.mxu0 %v4500
      %4737 = vmatprep.mubr.f32.mxu0 %v4402
      %4738 = vmatmul.mubr.f32.gmra.mrb[0].mxu0 %v4401
      %v4739 = vpop.f32.mrb[0].mxu0
      %v4740 = vadd.f32 %v4670, %v4739
      %v4741 = vpop.f32.mrb[0].mxu0
      %4742 = vdwg.mxu0
      %4743 = vmatprep.subr.mxu0 0.0
      %4744 = vmatpush1.msra.mxu0 %v4501
      %4745 = vmatprep.subr.mxu0 0.0
      %4746 = vmatpush1.msra.mxu0 %v4502
      %4747 = vmatprep.subr.mxu0 0.0
      %4748 = vmatpush1.msra.mxu0 %v4503
      %4749 = vmatprep.subr.mxu0 0.0
      %4750 = vmatpush1.msra.mxu0 %v4504
      %4751 = vmatprep.subr.mxu0 0.0
      %4752 = vmatpush1.msra.mxu0 %v4505
      %4753 = vmatprep.subr.mxu0 0.0
      %4754 = vmatpush1.msra.mxu0 %v4506
      %4755 = vmatprep.subr.mxu0 0.0
      %4756 = vmatpush1.msra.mxu0 %v4507
      %4757 = vmatprep.subr.mxu0 0.0
      %4758 = vmatpush1.msra.mxu0 %v4508
      %4759 = vmatprep.subr.mxu0 0.0
      %4760 = vmatpush1.msra.mxu0 %v4509
      %4761 = vmatprep.subr.mxu0 0.0
      %4762 = vmatpush1.msra.mxu0 %v4510
      %4763 = vmatprep.subr.mxu0 0.0
      %4764 = vmatpush1.msra.mxu0 %v4511
      %4765 = vmatprep.subr.mxu0 0.0
      %4766 = vmatpush1.msra.mxu0 %v4512
      %4767 = vmatprep.subr.mxu0 0.0
      %4768 = vmatpush1.msra.mxu0 %v4513
      %4769 = vmatprep.subr.mxu0 0.0
      %4770 = vmatpush1.msra.mxu0 %v4514
      %4771 = vmatprep.subr.mxu0 0.0
      %4772 = vmatpush1.msra.mxu0 %v4515
      %4773 = vmatprep.subr.mxu0 0.0
      %4774 = vmatpush1.msra.mxu0 %v4516
      %4775 = vmatprep.subr.mxu0 0.0
      %4776 = vmatpush1.msra.mxu0 %v4517
      %4777 = vmatprep.subr.mxu0 0.0
      %4778 = vmatpush1.msra.mxu0 %v4518
      %4779 = vmatprep.subr.mxu0 0.0
      %4780 = vmatpush1.msra.mxu0 %v4519
      %4781 = vmatprep.subr.mxu0 0.0
      %4782 = vmatpush1.msra.mxu0 %v4520
      %4783 = vmatprep.subr.mxu0 0.0
      %4784 = vmatpush1.msra.mxu0 %v4521
      %4785 = vmatprep.subr.mxu0 0.0
      %4786 = vmatpush1.msra.mxu0 %v4522
      %4787 = vmatprep.subr.mxu0 0.0
      %4788 = vmatpush1.msra.mxu0 %v4523
      %4789 = vmatprep.subr.mxu0 0.0
      %4790 = vmatpush1.msra.mxu0 %v4524
      %4791 = vmatprep.subr.mxu0 0.0
      %4792 = vmatpush1.msra.mxu0 %v4525
      %4793 = vmatprep.subr.mxu0 0.0
      %4794 = vmatpush1.msra.mxu0 %v4526
      %4795 = vmatprep.subr.mxu0 0.0
      %4796 = vmatpush1.msra.mxu0 %v4527
      %4797 = vmatprep.subr.mxu0 0.0
      %4798 = vmatpush1.msra.mxu0 %v4528
      %4799 = vmatprep.subr.mxu0 0.0
      %4800 = vmatpush1.msra.mxu0 %v4529
      %4801 = vmatprep.subr.mxu0 0.0
      %4802 = vmatpush1.msra.mxu0 %v4530
      %4803 = vmatprep.subr.mxu0 0.0
      %4804 = vmatpush1.msra.mxu0 %v4531
      %4805 = vmatprep.subr.mxu0 0.0
      %4806 = vmatpush1.msra.mxu0 %v4532
      %4807 = vmatprep.mubr.f32.mxu0 %v4404
      %4808 = vmatmul.mubr.f32.gmra.mrb[0].mxu0 %v4403
      %v4809 = vpop.f32.mrb[0].mxu0
      %v4810 = vadd.f32 %v4740, %v4809
      %v4811 = vpop.f32.mrb[0].mxu0
      %4812 = vdwg.mxu0
      %4813 = vrot.lane.b32.xlu0 %v4810, 64
      %v4814 = vpop.permute.xlu0 %4813
      %v4815 = vsub.f32 %v4810, %v4814
      %v4816 = vmul.f32 %v4815, %v4815
      %v4817 = vsel %vm4160, %v4816, 0.0
      %4818 = vadd.xlane.f32.xlu0 %v4817
      %v4819 = vpop.xlane.xlu0 %4818
      %v4820 = vrot.slane %v4819, 4
      %v4821 = vadd.f32 %v4819, %v4820
      %v4822 = vrot.slane %v4821, 2
      %v4823 = vadd.f32 %v4821, %v4822
      %v4824 = vrot.slane %v4823, 1
      %v4825 = vadd.f32 %v4823, %v4824
      %s4826 = vtos %v4825
      %v4827 = vstv %s4826
      %v4828 = vand.u32 2147483647, %v4815
      %v4829 = vsel %vm4160, %v4828, 0.0
      %4830 = vadd.xlane.f32.xlu0 %v4829
      %v4831 = vpop.xlane.xlu0 %4830
      %v4832 = vrot.slane %v4831, 4
      %v4833 = vadd.f32 %v4831, %v4832
      %v4834 = vrot.slane %v4833, 2
      %v4835 = vadd.f32 %v4833, %v4834
      %v4836 = vrot.slane %v4835, 1
      %v4837 = vadd.f32 %v4835, %v4836
      %s4838 = vtos %v4837
      %v4839 = vstv %s4838
      %v4840 = vmul.f32 %v4839, 0.1
      %v4841 = vadd.f32 %v4827, %v4840
      %v4842 = vmul.f32 %v4841, 0.0006510417
      %v4843 = vadd.f32 %v4308, %v4842
      %4844 = vrot.lane.b32.xlu0 %v4810, 21
      %v4845 = vpop.permute.xlu0 %4844
      %v4846 = vld [vmem:[%s7] sm:$0x1]
      %v4847 = vlaneseq
      %v4848 = vshrl.u32 %v4847, 7
      %v4849 = vsub.s32 0, %v4848
      %v4850 = vrot.slane %v4846, %v4849
      %v4851 = vmul.f32 %v4845, %v4850
      %4852 = vst [vmem:[#allocation3] sm:$0x3f] %v4851
      %4853 = vrot.lane.b32.xlu0 %v4810, 20
      %v4854 = vpop.permute.xlu0 %4853
      %v4855 = vld [vmem:[%s7 + $0x1] sm:$0x1]
      %v4856 = vlaneseq
      %v4857 = vshrl.u32 %v4856, 7
      %v4858 = vsub.s32 0, %v4857
      %v4859 = vrot.slane %v4855, %v4858
      %v4860 = vmul.f32 %v4854, %v4859
      %4861 = vst [vmem:[#allocation3 + $0x6] sm:$0x3f] %v4860
      %4862 = vrot.lane.b32.xlu0 %v4810, 19
      %v4863 = vpop.permute.xlu0 %4862
      %v4864 = vld [vmem:[%s7 + $0x2] sm:$0x1]
      %v4865 = vlaneseq
      %v4866 = vshrl.u32 %v4865, 7
      %v4867 = vsub.s32 0, %v4866
      %v4868 = vrot.slane %v4864, %v4867
      %v4869 = vmul.f32 %v4863, %v4868
      %4870 = vst [vmem:[#allocation3 + $0xc] sm:$0x3f] %v4869
      %4871 = vrot.lane.b32.xlu0 %v4810, 17
      %v4872 = vpop.permute.xlu0 %4871
      %v4873 = vld [vmem:[%s7 + $0x3] sm:$0x1]
      %v4874 = vlaneseq
      %v4875 = vshrl.u32 %v4874, 7
      %v4876 = vsub.s32 0, %v4875
      %v4877 = vrot.slane %v4873, %v4876
      %v4878 = vmul.f32 %v4872, %v4877
      %4879 = vst [vmem:[#allocation3 + $0x12] sm:$0x3f] %v4878
      %4880 = vrot.lane.b32.xlu0 %v4810, 16
      %v4881 = vpop.permute.xlu0 %4880
      %v4882 = vld [vmem:[%s7 + $0x4] sm:$0x1]
      %v4883 = vlaneseq
      %v4884 = vshrl.u32 %v4883, 7
      %v4885 = vsub.s32 0, %v4884
      %v4886 = vrot.slane %v4882, %v4885
      %v4887 = vmul.f32 %v4881, %v4886
      %4888 = vst [vmem:[#allocation3 + $0x18] sm:$0x3f] %v4887
      %4889 = vrot.lane.b32.xlu0 %v4810, 15
      %v4890 = vpop.permute.xlu0 %4889
      %v4891 = vld [vmem:[%s7 + $0x5] sm:$0x1]
      %v4892 = vlaneseq
      %v4893 = vshrl.u32 %v4892, 7
      %v4894 = vsub.s32 0, %v4893
      %v4895 = vrot.slane %v4891, %v4894
      %v4896 = vmul.f32 %v4890, %v4895
      %4897 = vst [vmem:[#allocation3 + $0x1e] sm:$0x3f] %v4896
      %4898 = vrot.lane.b32.xlu0 %v4810, 13
      %v4899 = vpop.permute.xlu0 %4898
      %v4900 = vld [vmem:[%s7 + $0x6] sm:$0x1]
      %v4901 = vlaneseq
      %v4902 = vshrl.u32 %v4901, 7
      %v4903 = vsub.s32 0, %v4902
      %v4904 = vrot.slane %v4900, %v4903
      %v4905 = vmul.f32 %v4899, %v4904
      %4906 = vst [vmem:[#allocation3 + $0x24] sm:$0x3f] %v4905
      %4907 = vrot.lane.b32.xlu0 %v4810, 12
      %v4908 = vpop.permute.xlu0 %4907
      %v4909 = vld [vmem:[%s7 + $0x7] sm:$0x1]
      %v4910 = vlaneseq
      %v4911 = vshrl.u32 %v4910, 7
      %v4912 = vsub.s32 0, %v4911
      %v4913 = vrot.slane %v4909, %v4912
      %v4914 = vmul.f32 %v4908, %v4913
      %4915 = vst [vmem:[#allocation3 + $0x2a] sm:$0x3f] %v4914
      %4916 = vrot.lane.b32.xlu0 %v4810, 11
      %v4917 = vpop.permute.xlu0 %4916
      %v4918 = vld [vmem:[%s7 + $0x8] sm:$0x1]
      %v4919 = vlaneseq
      %v4920 = vshrl.u32 %v4919, 7
      %v4921 = vsub.s32 0, %v4920
      %v4922 = vrot.slane %v4918, %v4921
      %v4923 = vmul.f32 %v4917, %v4922
      %4924 = vst [vmem:[#allocation3 + $0x30] sm:$0x3f] %v4923
      %4925 = vrot.lane.b32.xlu0 %v4810, 5
      %v4926 = vpop.permute.xlu0 %4925
      %v4927 = vld [vmem:[%s7 + $0x9] sm:$0x1]
      %v4928 = vlaneseq
      %v4929 = vshrl.u32 %v4928, 7
      %v4930 = vsub.s32 0, %v4929
      %v4931 = vrot.slane %v4927, %v4930
      %v4932 = vmul.f32 %v4926, %v4931
      %4933 = vst [vmem:[#allocation3 + $0x36] sm:$0x3f] %v4932
      %4934 = vrot.lane.b32.xlu0 %v4810, 4
      %v4935 = vpop.permute.xlu0 %4934
      %v4936 = vld [vmem:[%s7 + $0xa] sm:$0x1]
      %v4937 = vlaneseq
      %v4938 = vshrl.u32 %v4937, 7
      %v4939 = vsub.s32 0, %v4938
      %v4940 = vrot.slane %v4936, %v4939
      %v4941 = vmul.f32 %v4935, %v4940
      %4942 = vst [vmem:[#allocation3 + $0x3c] sm:$0x3f] %v4941
      %4943 = vrot.lane.b32.xlu0 %v4810, 3
      %v4944 = vpop.permute.xlu0 %4943
      %v4945 = vld [vmem:[%s7 + $0xb] sm:$0x1]
      %v4946 = vlaneseq
      %v4947 = vshrl.u32 %v4946, 7
      %v4948 = vsub.s32 0, %v4947
      %v4949 = vrot.slane %v4945, %v4948
      %v4950 = vmul.f32 %v4944, %v4949
      %4951 = vst [vmem:[#allocation3 + $0x42] sm:$0x3f] %v4950
      %4952 = vrot.lane.b32.xlu0 %v4810, 1
      %v4953 = vpop.permute.xlu0 %4952
      %v4954 = vld [vmem:[%s7 + $0xc] sm:$0x1]
      %v4955 = vlaneseq
      %v4956 = vshrl.u32 %v4955, 7
      %v4957 = vsub.s32 0, %v4956
      %v4958 = vrot.slane %v4954, %v4957
      %v4959 = vmul.f32 %v4953, %v4958
      %4960 = vst [vmem:[#allocation3 + $0x48] sm:$0x3f] %v4959
      %v4961 = vld [vmem:[%s7 + $0xd] sm:$0x1]
      %v4962 = vlaneseq
      %v4963 = vshrl.u32 %v4962, 7
      %v4964 = vsub.s32 0, %v4963
      %v4965 = vrot.slane %v4961, %v4964
      %v4966 = vmul.f32 %v4810, %v4965
      %4967 = vst [vmem:[#allocation3 + $0x4e] sm:$0x3f] %v4966
      %4968 = vrot.lane.b32.xlu0 %v4810, 127
      %v4969 = vpop.permute.xlu0 %4968
      %v4970 = vld [vmem:[%s7 + $0xe] sm:$0x1]
      %v4971 = vlaneseq
      %v4972 = vshrl.u32 %v4971, 7
      %v4973 = vsub.s32 0, %v4972
      %v4974 = vrot.slane %v4970, %v4973
      %v4975 = vmul.f32 %v4969, %v4974
      %4976 = vst [vmem:[#allocation3 + $0x54] sm:$0x3f] %v4975
      %4977 = vrot.lane.b32.xlu0 %v4810, 125
      %v4978 = vpop.permute.xlu0 %4977
      %v4979 = vld [vmem:[%s7 + $0xf] sm:$0x1]
      %v4980 = vlaneseq
      %v4981 = vshrl.u32 %v4980, 7
      %v4982 = vsub.s32 0, %v4981
      %v4983 = vrot.slane %v4979, %v4982
      %v4984 = vmul.f32 %v4978, %v4983
      %4985 = vst [vmem:[#allocation3 + $0x5a] sm:$0x3f] %v4984
      %4986 = vrot.lane.b32.xlu0 %v4810, 124
      %v4987 = vpop.permute.xlu0 %4986
      %v4988 = vld [vmem:[%s7 + $0x10] sm:$0x1]
      %v4989 = vlaneseq
      %v4990 = vshrl.u32 %v4989, 7
      %v4991 = vsub.s32 0, %v4990
      %v4992 = vrot.slane %v4988, %v4991
      %v4993 = vmul.f32 %v4987, %v4992
      %4994 = vst [vmem:[#allocation3 + $0x60] sm:$0x3f] %v4993
      %4995 = vrot.lane.b32.xlu0 %v4810, 123
      %v4996 = vpop.permute.xlu0 %4995
      %v4997 = vld [vmem:[%s7 + $0x11] sm:$0x1]
      %v4998 = vlaneseq
      %v4999 = vshrl.u32 %v4998, 7
      %v5000 = vsub.s32 0, %v4999
      %v5001 = vrot.slane %v4997, %v5000
      %v5002 = vmul.f32 %v4996, %v5001
      %5003 = vst [vmem:[#allocation3 + $0x66] sm:$0x3f] %v5002
      %5004 = vrot.lane.b32.xlu0 %v4810, 117
      %v5005 = vpop.permute.xlu0 %5004
      %v5006 = vld [vmem:[%s7 + $0x12] sm:$0x1]
      %v5007 = vlaneseq
      %v5008 = vshrl.u32 %v5007, 7
      %v5009 = vsub.s32 0, %v5008
      %v5010 = vrot.slane %v5006, %v5009
      %v5011 = vmul.f32 %v5005, %v5010
      %5012 = vst [vmem:[#allocation3 + $0x6c] sm:$0x3f] %v5011
      %5013 = vrot.lane.b32.xlu0 %v4810, 116
      %v5014 = vpop.permute.xlu0 %5013
      %v5015 = vld [vmem:[%s7 + $0x13] sm:$0x1]
      %v5016 = vlaneseq
      %v5017 = vshrl.u32 %v5016, 7
      %v5018 = vsub.s32 0, %v5017
      %v5019 = vrot.slane %v5015, %v5018
      %v5020 = vmul.f32 %v5014, %v5019
      %5021 = vst [vmem:[#allocation3 + $0x72] sm:$0x3f] %v5020
      %5022 = vrot.lane.b32.xlu0 %v4810, 115
      %v5023 = vpop.permute.xlu0 %5022
      %v5024 = vld [vmem:[%s7 + $0x14] sm:$0x1]
      %v5025 = vlaneseq
      %v5026 = vshrl.u32 %v5025, 7
      %v5027 = vsub.s32 0, %v5026
      %v5028 = vrot.slane %v5024, %v5027
      %v5029 = vmul.f32 %v5023, %v5028
      %5030 = vst [vmem:[#allocation3 + $0x78] sm:$0x3f] %v5029
      %5031 = vrot.lane.b32.xlu0 %v4810, 113
      %v5032 = vpop.permute.xlu0 %5031
      %v5033 = vld [vmem:[%s7 + $0x15] sm:$0x1]
      %v5034 = vlaneseq
      %v5035 = vshrl.u32 %v5034, 7
      %v5036 = vsub.s32 0, %v5035
      %v5037 = vrot.slane %v5033, %v5036
      %v5038 = vmul.f32 %v5032, %v5037
      %5039 = vst [vmem:[#allocation3 + $0x7e] sm:$0x3f] %v5038
      %5040 = vrot.lane.b32.xlu0 %v4810, 112
      %v5041 = vpop.permute.xlu0 %5040
      %v5042 = vld [vmem:[%s7 + $0x16] sm:$0x1]
      %v5043 = vlaneseq
      %v5044 = vshrl.u32 %v5043, 7
      %v5045 = vsub.s32 0, %v5044
      %v5046 = vrot.slane %v5042, %v5045
      %v5047 = vmul.f32 %v5041, %v5046
      %5048 = vst [vmem:[#allocation3 + $0x84] sm:$0x3f] %v5047
      %5049 = vrot.lane.b32.xlu0 %v4810, 111
      %v5050 = vpop.permute.xlu0 %5049
      %v5051 = vld [vmem:[%s7 + $0x17] sm:$0x1]
      %v5052 = vlaneseq
      %v5053 = vshrl.u32 %v5052, 7
      %v5054 = vsub.s32 0, %v5053
      %v5055 = vrot.slane %v5051, %v5054
      %v5056 = vmul.f32 %v5050, %v5055
      %5057 = vst [vmem:[#allocation3 + $0x8a] sm:$0x3f] %v5056
      %5058 = vrot.lane.b32.xlu0 %v4810, 109
      %v5059 = vpop.permute.xlu0 %5058
      %v5060 = vld [vmem:[%s7 + $0x18] sm:$0x1]
      %v5061 = vlaneseq
      %v5062 = vshrl.u32 %v5061, 7
      %v5063 = vsub.s32 0, %v5062
      %v5064 = vrot.slane %v5060, %v5063
      %v5065 = vmul.f32 %v5059, %v5064
      %5066 = vst [vmem:[#allocation3 + $0x90] sm:$0x3f] %v5065
      %5067 = vrot.lane.b32.xlu0 %v4810, 108
      %v5068 = vpop.permute.xlu0 %5067
      %v5069 = vld [vmem:[%s7 + $0x19] sm:$0x1]
      %v5070 = vlaneseq
      %v5071 = vshrl.u32 %v5070, 7
      %v5072 = vsub.s32 0, %v5071
      %v5073 = vrot.slane %v5069, %v5072
      %v5074 = vmul.f32 %v5068, %v5073
      %5075 = vst [vmem:[#allocation3 + $0x96] sm:$0x3f] %v5074
      %5076 = vrot.lane.b32.xlu0 %v4810, 107
      %v5077 = vpop.permute.xlu0 %5076
      %v5078 = vld [vmem:[%s7 + $0x1a] sm:$0x1]
      %v5079 = vlaneseq
      %v5080 = vshrl.u32 %v5079, 7
      %v5081 = vsub.s32 0, %v5080
      %v5082 = vrot.slane %v5078, %v5081
      %v5083 = vmul.f32 %v5077, %v5082
      %5084 = vst [vmem:[#allocation3 + $0x9c] sm:$0x3f] %v5083
      %v5085 = vld [vmem:[%s5] sm:$0xff]
      %v5086 = vld [vmem:[%s5 + $0x8] sm:$0xff]
      %v5087 = vld [vmem:[%s5 + $0x10] sm:$0xff]
      %v5088 = vld [vmem:[%s5 + $0x18] sm:$0xff]
      %v5089 = vld [vmem:[#allocation3] sm:$0xff]
      %v5090 = vld [vmem:[#allocation3 + $0x8] sm:$0xff]
      %v5091 = vld [vmem:[#allocation3 + $0x10] sm:$0xff]
      %v5092 = vld [vmem:[#allocation3 + $0x18] sm:$0xff]
      %v5093 = vld [vmem:[#allocation3 + $0x20] sm:$0xff]
      %v5094 = vld [vmem:[#allocation3 + $0x28] sm:$0xff]
      %v5095 = vld [vmem:[#allocation3 + $0x30] sm:$0xff]
      %v5096 = vld [vmem:[#allocation3 + $0x38] sm:$0xff]
      %v5097 = vld [vmem:[#allocation3 + $0x40] sm:$0xff]
      %v5098 = vld [vmem:[#allocation3 + $0x48] sm:$0xff]
      %v5099 = vld [vmem:[#allocation3 + $0x50] sm:$0xff]
      %v5100 = vld [vmem:[#allocation3 + $0x58] sm:$0xff]
      %v5101 = vld [vmem:[#allocation3 + $0x60] sm:$0xff]
      %v5102 = vld [vmem:[#allocation3 + $0x68] sm:$0xff]
      %v5103 = vld [vmem:[#allocation3 + $0x70] sm:$0xff]
      %v5104 = vld [vmem:[#allocation3 + $0x78] sm:$0xff]
      %v5105 = vld [vmem:[#allocation3 + $0x80] sm:$0xff]
      %v5106 = vld [vmem:[#allocation3 + $0x88] sm:$0xff]
      %v5107 = vld [vmem:[#allocation3 + $0x90] sm:$0xff]
      %v5108 = vld [vmem:[#allocation3 + $0x98] sm:$0xff]
      %v5109 = vld [vmem:[#allocation3 + $0xa0] sm:$0x3]
      %v5110 = vld [vmem:[%s6] sm:$0xff]
      %v5111 = vld [vmem:[%s6 + $0x8] sm:$0xff]
      %5113 = vset.pattern.permute.xlu0 0
      %5114 = vperm.xlu0 %5113, %v5110
      %v5115 = vpop.permute.xlu0 %5114
      %5118 = vset.pattern.permute.xlu0 0
      %5119 = vperm.xlu0 %5118, %v5111
      %v5120 = vpop.permute.xlu0 %5119
      %vm5122 = vcmask 277504
      %v5124 = vsel %vm5122, %v5086, 0
      %v5127 = vsel %vm5122, %v5088, 0
      %vm5129 = vcmask 1041408
      %v5131 = vsel %vm5129, %v5109, 0
      %5133 = vmatprep.subr.mxu0 0.0
      %5134 = vmatpush1.msra.mxu0 %v5089
      %5135 = vmatprep.subr.mxu0 0.0
      %5136 = vmatpush1.msra.mxu0 %v5090
      %5137 = vmatprep.subr.mxu0 0.0
      %5138 = vmatpush1.msra.mxu0 %v5091
      %5139 = vmatprep.subr.mxu0 0.0
      %5140 = vmatpush1.msra.mxu0 %v5092
      %5141 = vmatprep.subr.mxu0 0.0
      %5142 = vmatpush1.msra.mxu0 %v5093
      %5143 = vmatprep.subr.mxu0 0.0
      %5144 = vmatpush1.msra.mxu0 %v5094
      %5145 = vmatprep.subr.mxu0 0.0
      %5146 = vmatpush1.msra.mxu0 %v5095
      %5147 = vmatprep.subr.mxu0 0.0
      %5148 = vmatpush1.msra.mxu0 %v5096
      %5149 = vmatprep.subr.mxu0 0.0
      %5150 = vmatpush1.msra.mxu0 %v5097
      %5151 = vmatprep.subr.mxu0 0.0
      %5152 = vmatpush1.msra.mxu0 %v5098
      %5153 = vmatprep.subr.mxu0 0.0
      %5154 = vmatpush1.msra.mxu0 %v5099
      %5155 = vmatprep.subr.mxu0 0.0
      %5156 = vmatpush1.msra.mxu0 %v5100
      %5157 = vmatprep.subr.mxu0 0.0
      %5158 = vmatpush1.msra.mxu0 %v5101
      %5159 = vmatprep.subr.mxu0 0.0
      %5160 = vmatpush1.msra.mxu0 %v5102
      %5161 = vmatprep.subr.mxu0 0.0
      %5162 = vmatpush1.msra.mxu0 %v5103
      %5163 = vmatprep.subr.mxu0 0.0
      %5164 = vmatpush1.msra.mxu0 %v5104
      %5165 = vmatprep.subr.mxu0 0.0
      %5166 = vmatpush1.msra.mxu0 %v5105
      %5167 = vmatprep.subr.mxu0 0.0
      %5168 = vmatpush1.msra.mxu0 %v5106
      %5169 = vmatprep.subr.mxu0 0.0
      %5170 = vmatpush1.msra.mxu0 %v5107
      %5171 = vmatprep.subr.mxu0 0.0
      %5172 = vmatpush1.msra.mxu0 %v5108
      %5173 = vmatprep.subr.mxu0 0.0
      %5174 = vmatpush1.msra.mxu0 %v5131
      %5175 = vmatprep.subr.mxu0 0.0
      %5176 = vmatpush1.msra.mxu0 0.0
      %5177 = vmatprep.subr.mxu0 0.0
      %5178 = vmatpush1.msra.mxu0 0.0
      %5179 = vmatprep.subr.mxu0 0.0
      %5180 = vmatpush1.msra.mxu0 0.0
      %5181 = vmatprep.subr.mxu0 0.0
      %5182 = vmatpush1.msra.mxu0 0.0
      %5183 = vmatprep.subr.mxu0 0.0
      %5184 = vmatpush1.msra.mxu0 0.0
      %5185 = vmatprep.subr.mxu0 0.0
      %5186 = vmatpush1.msra.mxu0 0.0
      %5187 = vmatprep.subr.mxu0 0.0
      %5188 = vmatpush1.msra.mxu0 0.0
      %5189 = vmatprep.subr.mxu0 0.0
      %5190 = vmatpush1.msra.mxu0 0.0
      %5191 = vmatprep.subr.mxu0 0.0
      %5192 = vmatpush1.msra.mxu0 0.0
      %5193 = vmatprep.subr.mxu0 0.0
      %5194 = vmatpush1.msra.mxu0 0.0
      %5195 = vmatprep.subr.mxu0 0.0
      %5196 = vmatpush1.msra.mxu0 0.0
      %5197 = vmatprep.mubr.f32.mxu0 %v5124
      %5198 = vmatmul.mubr.f32.gmra.mrb[0].mxu0 %v5085
      %v5199 = vpop.f32.mrb[0].mxu0
      %v5200 = vadd.f32 %v5115, %v5199
      %v5201 = vpop.f32.mrb[0].mxu0
      %5202 = vmatprep.mubr.f32.mxu0 %v5127
      %5203 = vmatmul.mubr.f32.gmra.mrb[0].mxu0 %v5087
      %v5204 = vpop.f32.mrb[0].mxu0
      %v5205 = vadd.f32 %v5120, %v5204
      %v5206 = vpop.f32.mrb[0].mxu0
      %5207 = vdwg.mxu0
      %5208 = vrot.lane.b32.xlu0 %v5200, 64
      %v5209 = vpop.permute.xlu0 %5208
      %5210 = vrot.lane.b32.xlu0 %v5205, 64
      %v5211 = vpop.permute.xlu0 %5210
      %v5212 = vsub.f32 %v5200, %v5209
      %v5213 = vsub.f32 %v5205, %v5211
      %v5214 = vmul.f32 %v5212, %v5212
      %v5215 = vmul.f32 %v5213, %v5213
      %v5216 = vadd.f32 %v5214, %v5215
      %5217 = vadd.xlane.f32.xlu0 %v5216
      %v5218 = vpop.xlane.xlu0 %5217
      %v5219 = vrot.slane %v5218, 4
      %v5220 = vadd.f32 %v5218, %v5219
      %v5221 = vrot.slane %v5220, 2
      %v5222 = vadd.f32 %v5220, %v5221
      %v5223 = vrot.slane %v5222, 1
      %v5224 = vadd.f32 %v5222, %v5223
      %s5225 = vtos %v5224
      %v5226 = vstv %s5225
      %v5227 = vand.u32 2147483647, %v5212
      %v5228 = vand.u32 2147483647, %v5213
      %v5229 = vadd.f32 %v5227, %v5228
      %5230 = vadd.xlane.f32.xlu0 %v5229
      %v5231 = vpop.xlane.xlu0 %5230
      %v5232 = vrot.slane %v5231, 4
      %v5233 = vadd.f32 %v5231, %v5232
      %v5234 = vrot.slane %v5233, 2
      %v5235 = vadd.f32 %v5233, %v5234
      %v5236 = vrot.slane %v5235, 1
      %v5237 = vadd.f32 %v5235, %v5236
      %s5238 = vtos %v5237
      %v5239 = vstv %s5238
      %v5240 = vmul.f32 %v5239, 0.1
      %v5241 = vadd.f32 %v5226, %v5240
      %v5242 = vmul.f32 %v5241, 0.00024414063
      %v5243 = vadd.f32 %v4843, %v5242
      %v5244 = vmax.f32 %v5200, 0.0
      %v5245 = vmax.f32 %v5205, 0.0
      %5246 = vrot.lane.b32.xlu0 %v5244, 64
      %v5247 = vpop.permute.xlu0 %5246
      %5248 = vrot.lane.b32.xlu0 %v5245, 64
      %v5249 = vpop.permute.xlu0 %5248
      %v5250 = vsub.f32 %v5244, %v5247
      %v5251 = vsub.f32 %v5245, %v5249
      %v5252 = vmul.f32 %v5250, %v5250
      %v5253 = vmul.f32 %v5251, %v5251
      %v5254 = vadd.f32 %v5252, %v5253
      %5255 = vadd.xlane.f32.xlu0 %v5254
      %v5256 = vpop.xlane.xlu0 %5255
      %v5257 = vrot.slane %v5256, 4
      %v5258 = vadd.f32 %v5256, %v5257
      %v5259 = vrot.slane %v5258, 2
      %v5260 = vadd.f32 %v5258, %v5259
      %v5261 = vrot.slane %v5260, 1
      %v5262 = vadd.f32 %v5260, %v5261
      %s5263 = vtos %v5262
      %v5264 = vstv %s5263
      %v5265 = vand.u32 2147483647, %v5250
      %v5266 = vand.u32 2147483647, %v5251
      %v5267 = vadd.f32 %v5265, %v5266
      %5268 = vadd.xlane.f32.xlu0 %v5267
      %v5269 = vpop.xlane.xlu0 %5268
      %v5270 = vrot.slane %v5269, 4
      %v5271 = vadd.f32 %v5269, %v5270
      %v5272 = vrot.slane %v5271, 2
      %v5273 = vadd.f32 %v5271, %v5272
      %v5274 = vrot.slane %v5273, 1
      %v5275 = vadd.f32 %v5273, %v5274
      %s5276 = vtos %v5275
      %v5277 = vstv %s5276
      %v5278 = vmul.f32 %v5277, 0.1
      %v5279 = vadd.f32 %v5264, %v5278
      %v5280 = vmul.f32 %v5279, 0.00024414063
      %v5281 = vadd.f32 %v5243, %v5280
      %5282 = vrot.lane.b32.xlu0 %v5244, 127
      %v5283 = vpop.permute.xlu0 %5282
      %5284 = vrot.lane.b32.xlu0 %v5245, 127
      %v5285 = vpop.permute.xlu0 %5284
      %v5286 = vmax.f32 %v5244, %v5283
      %v5287 = vmax.f32 %v5245, %v5285
      %5288 = vrot.lane.b32.xlu0 %v5286, 124
      %v5289 = vpop.permute.xlu0 %5288
      %5290 = vrot.lane.b32.xlu0 %v5287, 124
      %v5291 = vpop.permute.xlu0 %5290
      %v5292 = vmax.f32 %v5286, %v5289
      %v5293 = vmax.f32 %v5287, %v5291
      %5294 = vrot.lane.b32.xlu0 %v5292, 112
      %v5295 = vpop.permute.xlu0 %5294
      %5296 = vrot.lane.b32.xlu0 %v5293, 112
      %v5297 = vpop.permute.xlu0 %5296
      %v5298 = vmax.f32 %v5292, %v5295
      %v5299 = vmax.f32 %v5293, %v5297
      %v5300 = vld [vmem:[%s8] sm:$0xff]
      %v5301 = vld [vmem:[%s8 + $0x8] sm:$0xff]
      %v5302 = vld [vmem:[%s8 + $0x10] sm:$0xff]
      %v5303 = vld [vmem:[%s8 + $0x18] sm:$0xff]
      %v5304 = vld [vmem:[%s8 + $0x20] sm:$0xff]
      %v5305 = vld [vmem:[%s8 + $0x28] sm:$0xff]
      %v5306 = vld [vmem:[%s8 + $0x30] sm:$0xff]
      %v5307 = vld [vmem:[%s8 + $0x38] sm:$0xff]
      %v5308 = vld [vmem:[%s8 + $0x40] sm:$0xff]
      %v5309 = vld [vmem:[%s8 + $0x48] sm:$0xff]
      %v5310 = vld [vmem:[%s8 + $0x50] sm:$0xff]
      %v5311 = vld [vmem:[%s8 + $0x58] sm:$0xff]
      %v5312 = vld [vmem:[%s8 + $0x60] sm:$0xff]
      %v5313 = vld [vmem:[%s8 + $0x68] sm:$0xff]
      %v5314 = vld [vmem:[%s8 + $0x70] sm:$0xff]
      %v5315 = vld [vmem:[%s8 + $0x78] sm:$0xff]
      %5316 = vmatprep.subr.mxu0 0.0
      %5317 = vmatpush1.msra.mxu0 %v5300
      %5318 = vmatprep.subr.mxu0 0.0
      %5319 = vmatpush1.msra.mxu0 %v5301
      %5320 = vmatprep.subr.mxu0 0.0
      %5321 = vmatpush1.msra.mxu0 %v5302
      %5322 = vmatprep.subr.mxu0 0.0
      %5323 = vmatpush1.msra.mxu0 %v5303
      %5324 = vmatprep.subr.mxu0 0.0
      %5325 = vmatpush1.msra.mxu0 %v5304
      %5326 = vmatprep.subr.mxu0 0.0
      %5327 = vmatpush1.msra.mxu0 %v5305
      %5328 = vmatprep.subr.mxu0 0.0
      %5329 = vmatpush1.msra.mxu0 %v5306
      %5330 = vmatprep.subr.mxu0 0.0
      %5331 = vmatpush1.msra.mxu0 %v5307
      %5332 = vmatprep.subr.mxu0 0.0
      %5333 = vmatpush1.msra.mxu0 %v5308
      %5334 = vmatprep.subr.mxu0 0.0
      %5335 = vmatpush1.msra.mxu0 %v5309
      %5336 = vmatprep.subr.mxu0 0.0
      %5337 = vmatpush1.msra.mxu0 %v5310
      %5338 = vmatprep.subr.mxu0 0.0
      %5339 = vmatpush1.msra.mxu0 %v5311
      %5340 = vmatprep.subr.mxu0 0.0
      %5341 = vmatpush1.msra.mxu0 %v5312
      %5342 = vmatprep.subr.mxu0 0.0
      %5343 = vmatpush1.msra.mxu0 %v5313
      %5344 = vmatprep.subr.mxu0 0.0
      %5345 = vmatpush1.msra.mxu0 %v5314
      %5346 = vmatprep.subr.mxu0 0.0
      %5347 = vmatpush1.msra.mxu0 %v5315
      %5348 = vmatprep.subr.mxu0 0.0
      %5349 = vmatpush1.msra.mxu0 0.0
      %5350 = vmatprep.subr.mxu0 0.0
      %5351 = vmatpush1.msra.mxu0 0.0
      %5352 = vmatprep.subr.mxu0 0.0
      %5353 = vmatpush1.msra.mxu0 0.0
      %5354 = vmatprep.subr.mxu0 0.0
      %5355 = vmatpush1.msra.mxu0 0.0
      %5356 = vmatprep.subr.mxu0 0.0
      %5357 = vmatpush1.msra.mxu0 0.0
      %5358 = vmatprep.subr.mxu0 0.0
      %5359 = vmatpush1.msra.mxu0 0.0
      %5360 = vmatprep.subr.mxu0 0.0
      %5361 = vmatpush1.msra.mxu0 0.0
      %5362 = vmatprep.subr.mxu0 0.0
      %5363 = vmatpush1.msra.mxu0 0.0
      %5364 = vmatprep.subr.mxu0 0.0
      %5365 = vmatpush1.msra.mxu0 0.0
      %5366 = vmatprep.subr.mxu0 0.0
      %5367 = vmatpush1.msra.mxu0 0.0
      %5368 = vmatprep.subr.mxu0 0.0
      %5369 = vmatpush1.msra.mxu0 0.0
      %5370 = vmatprep.subr.mxu0 0.0
      %5371 = vmatpush1.msra.mxu0 0.0
      %5372 = vmatprep.subr.mxu0 0.0
      %5373 = vmatpush1.msra.mxu0 0.0
      %5374 = vmatprep.subr.mxu0 0.0
      %5375 = vmatpush1.msra.mxu0 0.0
      %5376 = vmatprep.subr.mxu0 0.0
      %5377 = vmatpush1.msra.mxu0 0.0
      %5378 = vmatprep.subr.mxu0 0.0
      %5379 = vmatpush1.msra.mxu0 0.0
      %5380 = vmatprep.mubr.f32.mxu0 0.0
      %5381 = vmatmul.mubr.f32.gmra.mrb[0].mxu0 %v5298
      %v5382 = vpop.f32.mrb[0].mxu0
      %v5383 = vadd.f32 0.0, %v5382
      %v5384 = vpop.f32.mrb[0].mxu0
      %5385 = vmatprep.mubr.f32.mxu0 0.0
      %5386 = vmatmul.mubr.f32.gmra.mrb[0].mxu0 %v5299
      %v5387 = vpop.f32.mrb[0].mxu0
      %v5388 = vadd.f32 0.0, %v5387
      %v5389 = vpop.f32.mrb[0].mxu0
      %5390 = vdwg.mxu0
      %v5391 = vld [vmem:[%s9] sm:$0xff]
      %v5392 = vld [vmem:[%s9 + $0x8] sm:$0xff]
      %vm5393 = vcmask 130048
      %v5395 = vsel %vm5393, %v5383, 0
      %v5398 = vsel %vm5393, %v5388, 0
      %5400 = vmatprep.subr.mxu0 0.0
      %5401 = vmatpush1.msra.mxu0 %v5391
      %5402 = vmatprep.subr.mxu0 0.0
      %5403 = vmatpush1.msra.mxu0 %v5392
      %5404 = vmatprep.subr.mxu0 0.0
      %5405 = vmatpush1.msra.mxu0 0.0
      %5406 = vmatprep.subr.mxu0 0.0
      %5407 = vmatpush1.msra.mxu0 0.0
      %5408 = vmatprep.subr.mxu0 0.0
      %5409 = vmatpush1.msra.mxu0 0.0
      %5410 = vmatprep.subr.mxu0 0.0
      %5411 = vmatpush1.msra.mxu0 0.0
      %5412 = vmatprep.subr.mxu0 0.0
      %5413 = vmatpush1.msra.mxu0 0.0
      %5414 = vmatprep.subr.mxu0 0.0
      %5415 = vmatpush1.msra.mxu0 0.0
      %5416 = vmatprep.subr.mxu0 0.0
      %5417 = vmatpush1.msra.mxu0 0.0
      %5418 = vmatprep.subr.mxu0 0.0
      %5419 = vmatpush1.msra.mxu0 0.0
      %5420 = vmatprep.subr.mxu0 0.0
      %5421 = vmatpush1.msra.mxu0 0.0
      %5422 = vmatprep.subr.mxu0 0.0
      %5423 = vmatpush1.msra.mxu0 0.0
      %5424 = vmatprep.subr.mxu0 0.0
      %5425 = vmatpush1.msra.mxu0 0.0
      %5426 = vmatprep.subr.mxu0 0.0
      %5427 = vmatpush1.msra.mxu0 0.0
      %5428 = vmatprep.subr.mxu0 0.0
      %5429 = vmatpush1.msra.mxu0 0.0
      %5430 = vmatprep.subr.mxu0 0.0
      %5431 = vmatpush1.msra.mxu0 0.0
      %5432 = vmatprep.subr.mxu0 0.0
      %5433 = vmatpush1.msra.mxu0 0.0
      %5434 = vmatprep.subr.mxu0 0.0
      %5435 = vmatpush1.msra.mxu0 0.0
      %5436 = vmatprep.subr.mxu0 0.0
      %5437 = vmatpush1.msra.mxu0 0.0
      %5438 = vmatprep.subr.mxu0 0.0
      %5439 = vmatpush1.msra.mxu0 0.0
      %5440 = vmatprep.subr.mxu0 0.0
      %5441 = vmatpush1.msra.mxu0 0.0
      %5442 = vmatprep.subr.mxu0 0.0
      %5443 = vmatpush1.msra.mxu0 0.0
      %5444 = vmatprep.subr.mxu0 0.0
      %5445 = vmatpush1.msra.mxu0 0.0
      %5446 = vmatprep.subr.mxu0 0.0
      %5447 = vmatpush1.msra.mxu0 0.0
      %5448 = vmatprep.subr.mxu0 0.0
      %5449 = vmatpush1.msra.mxu0 0.0
      %5450 = vmatprep.subr.mxu0 0.0
      %5451 = vmatpush1.msra.mxu0 0.0
      %5452 = vmatprep.subr.mxu0 0.0
      %5453 = vmatpush1.msra.mxu0 0.0
      %5454 = vmatprep.subr.mxu0 0.0
      %5455 = vmatpush1.msra.mxu0 0.0
      %5456 = vmatprep.subr.mxu0 0.0
      %5457 = vmatpush1.msra.mxu0 0.0
      %5458 = vmatprep.subr.mxu0 0.0
      %5459 = vmatpush1.msra.mxu0 0.0
      %5460 = vmatprep.subr.mxu0 0.0
      %5461 = vmatpush1.msra.mxu0 0.0
      %5462 = vmatprep.subr.mxu0 0.0
      %5463 = vmatpush1.msra.mxu0 0.0
      %5464 = vmatprep.mubr.f32.mxu0 0.0
      %5465 = vmatmul.mubr.f32.gmra.mrb[0].mxu0 %v5395
      %v5466 = vpop.f32.mrb[0].mxu0
      %v5467 = vadd.f32 0.0, %v5466
      %v5468 = vpop.f32.mrb[0].mxu0
      %5469 = vmatprep.mubr.f32.mxu0 0.0
      %5470 = vmatmul.mubr.f32.gmra.mrb[0].mxu0 %v5398
      %v5471 = vpop.f32.mrb[0].mxu0
      %v5472 = vadd.f32 0.0, %v5471
      %v5473 = vpop.f32.mrb[0].mxu0
      %5474 = vdwg.mxu0
      %v5475 = vmul.f32 %v5467, %v5467
      %v5476 = vmul.f32 %v5472, %v5472
      %vm5477 = vcmask 64512
      %v5478 = vsel %vm5477, %v5475, 0.0
      %v5479 = vsel %vm5477, %v5476, 0.0
      %v5480 = vadd.f32 %v5478, %v5479
      %5481 = vadd.xlane.f32.xlu0 %v5480
      %v5482 = vpop.xlane.xlu0 %5481
      %v5483 = vrot.slane %v5482, 4
      %v5484 = vadd.f32 %v5482, %v5483
      %v5485 = vrot.slane %v5484, 2
      %v5486 = vadd.f32 %v5484, %v5485
      %v5487 = vrot.slane %v5486, 1
      %v5488 = vadd.f32 %v5486, %v5487
      %s5489 = vtos %v5488
      %v5490 = vstv %s5489
      %v5491 = vand.u32 2147483647, %v5467
      %v5492 = vand.u32 2147483647, %v5472
      %v5493 = vsel %vm5477, %v5491, 0.0
      %v5494 = vsel %vm5477, %v5492, 0.0
      %v5495 = vadd.f32 %v5493, %v5494
      %5496 = vadd.xlane.f32.xlu0 %v5495
      %v5497 = vpop.xlane.xlu0 %5496
      %v5498 = vrot.slane %v5497, 4
      %v5499 = vadd.f32 %v5497, %v5498
      %v5500 = vrot.slane %v5499, 2
      %v5501 = vadd.f32 %v5499, %v5500
      %v5502 = vrot.slane %v5501, 1
      %v5503 = vadd.f32 %v5501, %v5502
      %s5504 = vtos %v5503
      %v5505 = vstv %s5504
      %v5506 = vmul.f32 %v5505, 0.1
      %v5507 = vadd.f32 %v5490, %v5506
      %v5508 = vmul.f32 %v5507, 0.00390625
      %v5509 = vadd.f32 %v5281, %v5508
      %5510 = vst [vmem:[%s352] sm:$0x1] %v5509
      %p5511 = scmp.lt.s32.totalorder %s21, 1
      %s5512 = scalar_select %p5511, %s21, 1
      %s5513 = scalar_lea.vmem %s10, %s5512
      // Predicated region
      $region61: #{perceptual_loss.1} parent=59 // pred_check
        %p5514 = pneg %p254
      $region62: #{perceptual_loss.1} parent=59 // pred_check_branch
        %5516 = sbr.rel (%p5514) target = $region64
      $region63: #{perceptual_loss.1} parent=59 // pred_region
        _
      $region64: #{perceptual_loss.1} parent=59 // pred_fallthru
        _
    $region60: #{perceptual_loss.1} parent=5 // pred_fallthru
      _
    %p5517 = scmp.le.s32.totalorder 2, %s16
    // Predicated region
    $region65: #{perceptual_loss.1} parent=5 // pred_check
      %p5518 = pneg %p5517
    $region66: #{perceptual_loss.1} parent=5 // pred_check_branch
      %5520 = sbr.rel (%p5518) target = $region68
    $region67: #{perceptual_loss.1} parent=5 // pred_region
      %s5521 = ssub.s32 %s16, 2
      // Predicated region
      $region69: #{perceptual_loss.1} parent=67 // pred_check
        %p5522 = pneg %p260
      $region70: #{perceptual_loss.1} parent=67 // pred_check_branch
        %5524 = sbr.rel (%p5522) target = $region72
      $region71: #{perceptual_loss.1} parent=67 // pred_region
        %p5525 = scmp.lt.s32.totalorder %s22, 1
        %s5526 = scalar_select %p5525, %s22, 1
        %s5527 = scalar_lea.vmem %s10, %s5526
      $region72: #{perceptual_loss.1} parent=67 // pred_fallthru
        _
    $region68: #{perceptual_loss.1} parent=5 // pred_fallthru
      _
  $region6: #{perceptual_loss.1} parent=0 // loop_footer
    %s20 = sadd.s32 1, %s16
  $region7: #{perceptual_loss.1} parent=0 // loop_footer_branch
    %15 = sbr.rel target = $region3
  $region8: #{perceptual_loss.1} parent=0 // loop_exit
    _

</llo_original>
